<compile_context>
chip_gen: v7x
topology: tpu7x:2x2x1
jax: 0.10.0
libtpu: 0.0.40
codegen_flags: <defaults>
</compile_context>

<pallas_src>
import functools
import math

import jax
import jax.numpy as jnp
from jax.experimental import pallas as pl
from jax.experimental.pallas import tpu as pltpu


# ----------------------------- helpers (traced inside the kernel) -----------------------------

def _layernorm(v, g, b, eps=1e-5):
    mu = jnp.mean(v, axis=-1, keepdims=True)
    var = jnp.mean((v - mu) ** 2, axis=-1, keepdims=True)
    return (v - mu) * jax.lax.rsqrt(var + eps) * g + b


# ----------------------------- fused Pallas kernel (one sequence per grid step) ---------------

def fused_transformer_kernel(
        x_ref, peg_w_ref, peg_b_ref,
        ln1_g_ref, ln1_b_ref, wfused_ref, bfused_ref, wo_ref, bo_ref,
        ln2_g_ref, ln2_b_ref, ff1_w_ref, ff1_b_ref, ff2_w_ref, ff2_b_ref,
        whead_ref, bhead_ref,
        out_ref,
        *, depth, seqlen, width, heads, slopes):
    L, D, H = seqlen, width, heads
    dk = D // H

    x = x_ref[...]                                   # (L, D) — one sequence
    peg_w, peg_b = peg_w_ref[...], peg_b_ref[...]    # (7, D), (1, D)
    ln1_g, ln1_b = ln1_g_ref[...], ln1_b_ref[...]
    wfused, bfused = wfused_ref[...], bfused_ref[...]        # (D, 4D), (1, 4D)
    wo, bo = wo_ref[...], bo_ref[...]                        # (D, D),  (1, D)
    ln2_g, ln2_b = ln2_g_ref[...], ln2_b_ref[...]
    ff1_w, ff1_b = ff1_w_ref[...], ff1_b_ref[...]            # (D, 8D), (1, 8D)
    ff2_w, ff2_b = ff2_w_ref[...], ff2_b_ref[...]            # (4D, D), (1, D)
    whead, bhead = whead_ref[...], bhead_ref[...]            # (D, 128), (1, 128)

    # ---- PEG: x + depthwise_conv1d(k=7, zero-pad=3) + bias.  Zero-pad once, then 7
    #      static sublane-shifted slices (tap offset t-3); direction-unambiguous.
    zpad = jnp.zeros((3, D), x.dtype)
    xp = jnp.concatenate([zpad, x, zpad], axis=0)            # (L + 6, D)
    conv = xp[0:L, :] * peg_w[0:1, :]
    for t in range(1, 7):                                    # static taps
        conv = conv + xp[t:t + L, :] * peg_w[t:t + 1, :]
    x = x + conv + peg_b

    # ---- ALiBi bias built in-kernel (no O(L^2) HBM input); slopes are compile-time floats.
    ri = jax.lax.broadcasted_iota(jnp.int32, (L, L), 0)
    rj = jax.lax.broadcasted_iota(jnp.int32, (L, L), 1)
    rel = jnp.minimum(jnp.abs(rj - ri), 40).astype(jnp.float32)     # (L, L)
    posbias = jnp.stack([rel * (-s) for s in slopes], axis=0)       # (H, L, L)

    # ---- `depth` weight-shared SeqEncoderLayers (pre-LN gated attention + SwiGLU FF).
    def layer_body(_, x):
        xn = _layernorm(x, ln1_g, ln1_b)
        # one lane-dense fused matmul: columns = [gate | Q*scale | K*scale | V]
        proj = jnp.dot(xn, wfused, preferred_element_type=jnp.float32) + bfused   # (L, 4D)
        g = jax.nn.sigmoid(proj[:, :D])

        # per-head (H, L, dk) views via cheap lane slices + leading-dim stack
        qh = jnp.stack([proj[:, D + h * dk: D + (h + 1) * dk] for h in range(H)], axis=0)
        kh = jnp.stack([proj[:, 2 * D + h * dk: 2 * D + (h + 1) * dk] for h in range(H)], axis=0)
        vh = jnp.stack([proj[:, 3 * D + h * dk: 3 * D + (h + 1) * dk] for h in range(H)], axis=0)

        s = jnp.einsum('hik,hjk->hij', qh, kh, preferred_element_type=jnp.float32) + posbias
        s = s - jnp.max(s, axis=-1, keepdims=True)
        p = jnp.exp(s)
        p = p / jnp.sum(p, axis=-1, keepdims=True)            # exact softmax (parity)
        oh = jnp.einsum('hij,hjk->hik', p, vh, preferred_element_type=jnp.float32)  # (H, L, dk)

        # concat(heads) @ Wo: head reduction happens inside the MXU accumulator
        o = jnp.concatenate([oh[h] for h in range(H)], axis=1)                       # (L, D)
        attn = jnp.dot(o, wo, preferred_element_type=jnp.float32) + bo
        x = x + g * attn                                      # residual (Dropout -> identity)

        # SwiGLU feed-forward (128-lane aligned slices of the (L, 8D) hidden)
        xn2 = _layernorm(x, ln2_g, ln2_b)
        h1 = jnp.dot(xn2, ff1_w, preferred_element_type=jnp.float32) + ff1_b
        a, gates = h1[:, :4 * D], h1[:, 4 * D:]
        ff = a * (gates * jax.nn.sigmoid(gates))
        return x + jnp.dot(ff, ff2_w, preferred_element_type=jnp.float32) + ff2_b

    x = jax.lax.fori_loop(0, depth, layer_body, x, unroll=True)

    # ---- merged output heads: one lane-dense matmul + one (L, 128) store.
    out_ref[...] = jnp.dot(x, whead, preferred_element_type=jnp.float32) + bhead


# ----------------------------- wrapper / model glue -----------------------------

def _alibi_slopes(heads):
    def p2(n):
        start = 2 ** (-2 ** -(math.log2(n) - 3))
        return [start * start ** i for i in range(n)]
    if math.log2(heads).is_integer():
        return p2(heads)
    c = 2 ** math.floor(math.log2(heads))
    return p2(c) + p2(2 * c)[0::2][:heads - c]


def transformer_net(tokens, params, *, depth, heads):
    B, L = tokens.shape
    embed = params["embed"]
    D = embed.shape[1]
    H = heads
    dk = D // H
    scale = float(dk) ** -0.25
    lw = params["layer"]

    # embedding lookup stays as host-side glue (tiny gather)
    x = jnp.take(embed, tokens.reshape(-1).astype(jnp.int32), axis=0)       # (B*L, D)

    # fused [gate | Q*scale | K*scale | V] projection weight (scale folded in, free)
    wfused = jnp.concatenate(
        [lw["gate_w"], lw["wq"] * scale, lw["wk"] * scale, lw["wv"]], axis=1)   # (D, 4D)
    bfused = jnp.concatenate(
        [lw["gate_b"], jnp.zeros((1, 3 * D), jnp.float32)], axis=1)             # (1, 4D)

    # merged, lane-padded output head: cols 0..17 = to_exp, col 18 = to_mut
    whead = (jnp.zeros((D, 128), jnp.float32)
             .at[:, :18].set(params["w_exp"])
             .at[:, 18:19].set(params["w_mut"].T))
    bhead = (jnp.zeros((1, 128), jnp.float32)
             .at[:, :18].set(params["b_exp"])
             .at[:, 18:19].set(params["b_mut"]))

    slopes = tuple(float(s) for s in _alibi_slopes(H))

    weight_inputs = (params["peg_w"], params["peg_b"],
                     lw["ln1_g"], lw["ln1_b"], wfused, bfused, lw["wo"], lw["bo"],
                     lw["ln2_g"], lw["ln2_b"], lw["ff1_w"], lw["ff1_b"],
                     lw["ff2_w"], lw["ff2_b"], whead, bhead)

    def const_spec(a):  # full-array block, constant index map -> DMA'd once, stays resident
        return pl.BlockSpec(a.shape, lambda b: (0,) * a.ndim)

    head_out = pl.pallas_call(
        functools.partial(fused_transformer_kernel, depth=depth,
                          seqlen=L, width=D, heads=H, slopes=slopes),
        out_shape=jax.ShapeDtypeStruct((B * L, 128), jnp.float32),
        grid=(B,),
        in_specs=[pl.BlockSpec((L, D), lambda b: (b, 0))]
                 + [const_spec(w) for w in weight_inputs],
        out_specs=pl.BlockSpec((L, 128), lambda b: (b, 0)),
        compiler_params=pltpu.CompilerParams(dimension_semantics=("parallel",)),
    )(x, *weight_inputs)

    head = head_out.reshape(B, L, 128)
    exp_out = jnp.mean(head[:, :, :18], axis=1)     # mean commutes with the linear exp head
    mut_out = head[:, :, 18]                        # (B, L)
    return exp_out, mut_out


# ----------------------------- main -----------------------------

if __name__ == "__main__":
    width, depth, heads = 32, 2, 4
    B, L = 2, 16
    D = width
    s = 0.05
    ks = jax.random.split(jax.random.PRNGKey(0), 17)

    params = {
        "embed": jax.random.normal(ks[0], (6, D), jnp.float32) * s,
        "peg_w": jax.random.normal(ks[1], (7, D), jnp.float32) * s,   # depthwise taps (k=7)
        "peg_b": jax.random.normal(ks[2], (1, D), jnp.float32) * s,
        "layer": {
            "ln1_g": jnp.ones((1, D), jnp.float32),
            "ln1_b": jnp.zeros((1, D), jnp.float32),
            "gate_w": jax.random.normal(ks[3], (D, D), jnp.float32) * s,
            "gate_b": jnp.ones((1, D), jnp.float32),
            "wq": jax.random.normal(ks[4], (D, D), jnp.float32) * s,
            "wk": jax.random.normal(ks[5], (D, D), jnp.float32) * s,
            "wv": jax.random.normal(ks[6], (D, D), jnp.float32) * s,
            "wo": jax.random.normal(ks[7], (D, D), jnp.float32) * s,
            "bo": jax.random.normal(ks[8], (1, D), jnp.float32) * s,
            "ln2_g": jnp.ones((1, D), jnp.float32),
            "ln2_b": jnp.zeros((1, D), jnp.float32),
            "ff1_w": jax.random.normal(ks[9], (D, 8 * D), jnp.float32) * s,
            "ff1_b": jax.random.normal(ks[10], (1, 8 * D), jnp.float32) * s,
            "ff2_w": jax.random.normal(ks[11], (4 * D, D), jnp.float32) * s,
            "ff2_b": jax.random.normal(ks[12], (1, D), jnp.float32) * s,
        },
        "w_exp": jax.random.normal(ks[13], (D, 18), jnp.float32) * s,
        "b_exp": jax.random.normal(ks[14], (1, 18), jnp.float32) * s,
        "w_mut": jax.random.normal(ks[15], (1, D), jnp.float32) * s,
        "b_mut": jnp.zeros((1, 1), jnp.float32),
    }

    tokens = jax.random.randint(ks[16], (B, L), 0, 6)

    fwd = jax.jit(functools.partial(transformer_net, depth=depth, heads=heads))
    exp_out, mut_out = fwd(tokens, params)
    jax.block_until_ready((exp_out, mut_out))

    assert exp_out.shape == (B, 18) and mut_out.shape == (B, L)
    assert bool(jnp.all(jnp.isfinite(exp_out))) and bool(jnp.all(jnp.isfinite(mut_out)))
    print("KERNEL_OK")
</pallas_src>

<mosaic_0001>
module attributes {stable_mosaic.version = 11 : i64} {
  func.func @fused_transformer_kernel(%arg0: i32, %arg1: memref<16x32xf32, #tpu.memory_space<vmem>>, %arg2: memref<7x32xf32, #tpu.memory_space<vmem>>, %arg3: memref<1x32xf32, #tpu.memory_space<vmem>>, %arg4: memref<1x32xf32, #tpu.memory_space<vmem>>, %arg5: memref<1x32xf32, #tpu.memory_space<vmem>>, %arg6: memref<32x128xf32, #tpu.memory_space<vmem>>, %arg7: memref<1x128xf32, #tpu.memory_space<vmem>>, %arg8: memref<32x32xf32, #tpu.memory_space<vmem>>, %arg9: memref<1x32xf32, #tpu.memory_space<vmem>>, %arg10: memref<1x32xf32, #tpu.memory_space<vmem>>, %arg11: memref<1x32xf32, #tpu.memory_space<vmem>>, %arg12: memref<32x256xf32, #tpu.memory_space<vmem>>, %arg13: memref<1x256xf32, #tpu.memory_space<vmem>>, %arg14: memref<128x32xf32, #tpu.memory_space<vmem>>, %arg15: memref<1x32xf32, #tpu.memory_space<vmem>>, %arg16: memref<32x128xf32, #tpu.memory_space<vmem>>, %arg17: memref<1x128xf32, #tpu.memory_space<vmem>>, %arg18: memref<16x128xf32, #tpu.memory_space<vmem>>) attributes {dimension_semantics = [#tpu.dimension_semantics<parallel>], iteration_bounds = array<i64: 2>, scalar_prefetch = 0 : i64, scratch_operands = 0 : i64, tpu.core_type = #tpu.core_type<tc>, window_params = [{transform_indices = @transform_0, window_bounds = array<i64: 16, 32>}, {pipeline_mode = #tpu.pipeline_mode<synchronous>, transform_indices = @transform_1, window_bounds = array<i64: 7, 32>}, {pipeline_mode = #tpu.pipeline_mode<synchronous>, transform_indices = @transform_2, window_bounds = array<i64: 1, 32>}, {pipeline_mode = #tpu.pipeline_mode<synchronous>, transform_indices = @transform_3, window_bounds = array<i64: 1, 32>}, {pipeline_mode = #tpu.pipeline_mode<synchronous>, transform_indices = @transform_4, window_bounds = array<i64: 1, 32>}, {pipeline_mode = #tpu.pipeline_mode<synchronous>, transform_indices = @transform_5, window_bounds = array<i64: 32, 128>}, {pipeline_mode = #tpu.pipeline_mode<synchronous>, transform_indices = @transform_6, window_bounds = array<i64: 1, 128>}, {pipeline_mode = #tpu.pipeline_mode<synchronous>, transform_indices = @transform_7, window_bounds = array<i64: 32, 32>}, {pipeline_mode = #tpu.pipeline_mode<synchronous>, transform_indices = @transform_8, window_bounds = array<i64: 1, 32>}, {pipeline_mode = #tpu.pipeline_mode<synchronous>, transform_indices = @transform_9, window_bounds = array<i64: 1, 32>}, {pipeline_mode = #tpu.pipeline_mode<synchronous>, transform_indices = @transform_10, window_bounds = array<i64: 1, 32>}, {pipeline_mode = #tpu.pipeline_mode<synchronous>, transform_indices = @transform_11, window_bounds = array<i64: 32, 256>}, {pipeline_mode = #tpu.pipeline_mode<synchronous>, transform_indices = @transform_12, window_bounds = array<i64: 1, 256>}, {pipeline_mode = #tpu.pipeline_mode<synchronous>, transform_indices = @transform_13, window_bounds = array<i64: 128, 32>}, {pipeline_mode = #tpu.pipeline_mode<synchronous>, transform_indices = @transform_14, window_bounds = array<i64: 1, 32>}, {pipeline_mode = #tpu.pipeline_mode<synchronous>, transform_indices = @transform_15, window_bounds = array<i64: 32, 128>}, {pipeline_mode = #tpu.pipeline_mode<synchronous>, transform_indices = @transform_16, window_bounds = array<i64: 1, 128>}, {transform_indices = @transform_17, window_bounds = array<i64: 16, 128>}]} {
    %c0 = arith.constant 0 : index
    %c0_0 = arith.constant 0 : index
    %0 = vector.load %arg1[%c0, %c0_0] : memref<16x32xf32, #tpu.memory_space<vmem>>, vector<16x32xf32>
    %c0_1 = arith.constant 0 : index
    %c0_2 = arith.constant 0 : index
    %1 = vector.load %arg2[%c0_1, %c0_2] : memref<7x32xf32, #tpu.memory_space<vmem>>, vector<7x32xf32>
    %c0_3 = arith.constant 0 : index
    %c0_4 = arith.constant 0 : index
    %2 = vector.load %arg3[%c0_3, %c0_4] : memref<1x32xf32, #tpu.memory_space<vmem>>, vector<1x32xf32>
    %c0_5 = arith.constant 0 : index
    %c0_6 = arith.constant 0 : index
    %3 = vector.load %arg4[%c0_5, %c0_6] : memref<1x32xf32, #tpu.memory_space<vmem>>, vector<1x32xf32>
    %c0_7 = arith.constant 0 : index
    %c0_8 = arith.constant 0 : index
    %4 = vector.load %arg5[%c0_7, %c0_8] : memref<1x32xf32, #tpu.memory_space<vmem>>, vector<1x32xf32>
    %c0_9 = arith.constant 0 : index
    %c0_10 = arith.constant 0 : index
    %5 = vector.load %arg6[%c0_9, %c0_10] : memref<32x128xf32, #tpu.memory_space<vmem>>, vector<32x128xf32>
    %c0_11 = arith.constant 0 : index
    %c0_12 = arith.constant 0 : index
    %6 = vector.load %arg7[%c0_11, %c0_12] : memref<1x128xf32, #tpu.memory_space<vmem>>, vector<1x128xf32>
    %c0_13 = arith.constant 0 : index
    %c0_14 = arith.constant 0 : index
    %7 = vector.load %arg8[%c0_13, %c0_14] : memref<32x32xf32, #tpu.memory_space<vmem>>, vector<32x32xf32>
    %c0_15 = arith.constant 0 : index
    %c0_16 = arith.constant 0 : index
    %8 = vector.load %arg9[%c0_15, %c0_16] : memref<1x32xf32, #tpu.memory_space<vmem>>, vector<1x32xf32>
    %c0_17 = arith.constant 0 : index
    %c0_18 = arith.constant 0 : index
    %9 = vector.load %arg10[%c0_17, %c0_18] : memref<1x32xf32, #tpu.memory_space<vmem>>, vector<1x32xf32>
    %c0_19 = arith.constant 0 : index
    %c0_20 = arith.constant 0 : index
    %10 = vector.load %arg11[%c0_19, %c0_20] : memref<1x32xf32, #tpu.memory_space<vmem>>, vector<1x32xf32>
    %c0_21 = arith.constant 0 : index
    %c0_22 = arith.constant 0 : index
    %11 = vector.load %arg12[%c0_21, %c0_22] : memref<32x256xf32, #tpu.memory_space<vmem>>, vector<32x256xf32>
    %c0_23 = arith.constant 0 : index
    %c0_24 = arith.constant 0 : index
    %12 = vector.load %arg13[%c0_23, %c0_24] : memref<1x256xf32, #tpu.memory_space<vmem>>, vector<1x256xf32>
    %c0_25 = arith.constant 0 : index
    %c0_26 = arith.constant 0 : index
    %13 = vector.load %arg14[%c0_25, %c0_26] : memref<128x32xf32, #tpu.memory_space<vmem>>, vector<128x32xf32>
    %c0_27 = arith.constant 0 : index
    %c0_28 = arith.constant 0 : index
    %14 = vector.load %arg15[%c0_27, %c0_28] : memref<1x32xf32, #tpu.memory_space<vmem>>, vector<1x32xf32>
    %c0_29 = arith.constant 0 : index
    %c0_30 = arith.constant 0 : index
    %15 = vector.load %arg16[%c0_29, %c0_30] : memref<32x128xf32, #tpu.memory_space<vmem>>, vector<32x128xf32>
    %c0_31 = arith.constant 0 : index
    %c0_32 = arith.constant 0 : index
    %16 = vector.load %arg17[%c0_31, %c0_32] : memref<1x128xf32, #tpu.memory_space<vmem>>, vector<1x128xf32>
    %cst = arith.constant 0.000000e+00 : f32
    %17 = vector.broadcast %cst : f32 to vector<3x32xf32>
    %18 = tpu.concatenate %17, %0, %17 in 0 : vector<3x32xf32>, vector<16x32xf32>, vector<3x32xf32> -> vector<22x32xf32>
    %19 = vector.extract_strided_slice %18 {offsets = [0, 0], sizes = [16, 32], strides = [1, 1]} : vector<22x32xf32> to vector<16x32xf32>
    %20 = vector.extract_strided_slice %1 {offsets = [0, 0], sizes = [1, 32], strides = [1, 1]} : vector<7x32xf32> to vector<1x32xf32>
    %21 = vector.broadcast %20 : vector<1x32xf32> to vector<16x32xf32>
    %22 = arith.mulf %19, %21 : vector<16x32xf32>
    %23 = vector.extract_strided_slice %18 {offsets = [1, 0], sizes = [16, 32], strides = [1, 1]} : vector<22x32xf32> to vector<16x32xf32>
    %24 = vector.extract_strided_slice %1 {offsets = [1, 0], sizes = [1, 32], strides = [1, 1]} : vector<7x32xf32> to vector<1x32xf32>
    %25 = vector.broadcast %24 : vector<1x32xf32> to vector<16x32xf32>
    %26 = arith.mulf %23, %25 : vector<16x32xf32>
    %27 = arith.addf %22, %26 : vector<16x32xf32>
    %28 = vector.extract_strided_slice %18 {offsets = [2, 0], sizes = [16, 32], strides = [1, 1]} : vector<22x32xf32> to vector<16x32xf32>
    %29 = vector.extract_strided_slice %1 {offsets = [2, 0], sizes = [1, 32], strides = [1, 1]} : vector<7x32xf32> to vector<1x32xf32>
    %30 = vector.broadcast %29 : vector<1x32xf32> to vector<16x32xf32>
    %31 = arith.mulf %28, %30 : vector<16x32xf32>
    %32 = arith.addf %27, %31 : vector<16x32xf32>
    %33 = vector.extract_strided_slice %18 {offsets = [3, 0], sizes = [16, 32], strides = [1, 1]} : vector<22x32xf32> to vector<16x32xf32>
    %34 = vector.extract_strided_slice %1 {offsets = [3, 0], sizes = [1, 32], strides = [1, 1]} : vector<7x32xf32> to vector<1x32xf32>
    %35 = vector.broadcast %34 : vector<1x32xf32> to vector<16x32xf32>
    %36 = arith.mulf %33, %35 : vector<16x32xf32>
    %37 = arith.addf %32, %36 : vector<16x32xf32>
    %38 = vector.extract_strided_slice %18 {offsets = [4, 0], sizes = [16, 32], strides = [1, 1]} : vector<22x32xf32> to vector<16x32xf32>
    %39 = vector.extract_strided_slice %1 {offsets = [4, 0], sizes = [1, 32], strides = [1, 1]} : vector<7x32xf32> to vector<1x32xf32>
    %40 = vector.broadcast %39 : vector<1x32xf32> to vector<16x32xf32>
    %41 = arith.mulf %38, %40 : vector<16x32xf32>
    %42 = arith.addf %37, %41 : vector<16x32xf32>
    %43 = vector.extract_strided_slice %18 {offsets = [5, 0], sizes = [16, 32], strides = [1, 1]} : vector<22x32xf32> to vector<16x32xf32>
    %44 = vector.extract_strided_slice %1 {offsets = [5, 0], sizes = [1, 32], strides = [1, 1]} : vector<7x32xf32> to vector<1x32xf32>
    %45 = vector.broadcast %44 : vector<1x32xf32> to vector<16x32xf32>
    %46 = arith.mulf %43, %45 : vector<16x32xf32>
    %47 = arith.addf %42, %46 : vector<16x32xf32>
    %48 = vector.extract_strided_slice %18 {offsets = [6, 0], sizes = [16, 32], strides = [1, 1]} : vector<22x32xf32> to vector<16x32xf32>
    %49 = vector.extract_strided_slice %1 {offsets = [6, 0], sizes = [1, 32], strides = [1, 1]} : vector<7x32xf32> to vector<1x32xf32>
    %50 = vector.broadcast %49 : vector<1x32xf32> to vector<16x32xf32>
    %51 = arith.mulf %48, %50 : vector<16x32xf32>
    %52 = arith.addf %47, %51 : vector<16x32xf32>
    %53 = arith.addf %0, %52 : vector<16x32xf32>
    %54 = vector.broadcast %2 : vector<1x32xf32> to vector<16x32xf32>
    %55 = arith.addf %53, %54 : vector<16x32xf32>
    %56 = tpu.iota {dimensions = array<i32: 0>} : vector<16x16xi32>
    %57 = tpu.iota {dimensions = array<i32: 1>} : vector<16x16xi32>
    %58 = arith.subi %57, %56 : vector<16x16xi32>
    %59 = math.absi %58 : vector<16x16xi32>
    %c40_i32 = arith.constant 40 : i32
    %60 = vector.broadcast %c40_i32 : i32 to vector<16x16xi32>
    %61 = arith.minsi %59, %60 : vector<16x16xi32>
    %62 = arith.sitofp %61 : vector<16x16xi32> to vector<16x16xf32>
    %cst_33 = arith.constant -2.500000e-01 : f32
    %63 = vector.broadcast %cst_33 : f32 to vector<16x16xf32>
    %64 = arith.mulf %62, %63 : vector<16x16xf32>
    %cst_34 = arith.constant -6.250000e-02 : f32
    %65 = vector.broadcast %cst_34 : f32 to vector<16x16xf32>
    %66 = arith.mulf %62, %65 : vector<16x16xf32>
    %cst_35 = arith.constant -1.562500e-02 : f32
    %67 = vector.broadcast %cst_35 : f32 to vector<16x16xf32>
    %68 = arith.mulf %62, %67 : vector<16x16xf32>
    %cst_36 = arith.constant -3.906250e-03 : f32
    %69 = vector.broadcast %cst_36 : f32 to vector<16x16xf32>
    %70 = arith.mulf %62, %69 : vector<16x16xf32>
    %71 = vector.shape_cast %64 : vector<16x16xf32> to vector<1x16x16xf32>
    %72 = vector.shape_cast %66 : vector<16x16xf32> to vector<1x16x16xf32>
    %73 = vector.shape_cast %68 : vector<16x16xf32> to vector<1x16x16xf32>
    %74 = vector.shape_cast %70 : vector<16x16xf32> to vector<1x16x16xf32>
    %75 = tpu.concatenate %71, %72, %73, %74 in 0 : vector<1x16x16xf32>, vector<1x16x16xf32>, vector<1x16x16xf32>, vector<1x16x16xf32> -> vector<4x16x16xf32>
    %c0_i32 = arith.constant 0 : i32
    %cst_37 = arith.constant dense<0.000000e+00> : vector<16xf32>
    %76 = vector.multi_reduction <add>, %55, %cst_37 [1] : vector<16x32xf32> to vector<16xf32>
    %77 = vector.shape_cast %76 : vector<16xf32> to vector<16x1xf32>
    %cst_38 = arith.constant 3.200000e+01 : f32
    %78 = vector.broadcast %cst_38 : f32 to vector<16x1xf32>
    %79 = arith.divf %77, %78 : vector<16x1xf32>
    %80 = vector.broadcast %79 : vector<16x1xf32> to vector<16x32xf32>
    %81 = arith.subf %55, %80 : vector<16x32xf32>
    %82 = arith.mulf %81, %81 : vector<16x32xf32>
    %cst_39 = arith.constant dense<0.000000e+00> : vector<16xf32>
    %83 = vector.multi_reduction <add>, %82, %cst_39 [1] : vector<16x32xf32> to vector<16xf32>
    %84 = vector.shape_cast %83 : vector<16xf32> to vector<16x1xf32>
    %cst_40 = arith.constant 3.200000e+01 : f32
    %85 = vector.broadcast %cst_40 : f32 to vector<16x1xf32>
    %86 = arith.divf %84, %85 : vector<16x1xf32>
    %87 = vector.broadcast %79 : vector<16x1xf32> to vector<16x32xf32>
    %88 = arith.subf %55, %87 : vector<16x32xf32>
    %cst_41 = arith.constant 9.99999974E-6 : f32
    %89 = vector.broadcast %cst_41 : f32 to vector<16x1xf32>
    %90 = arith.addf %86, %89 : vector<16x1xf32>
    %91 = math.rsqrt %90 : vector<16x1xf32>
    %92 = vector.broadcast %91 : vector<16x1xf32> to vector<16x32xf32>
    %93 = arith.mulf %88, %92 : vector<16x32xf32>
    %94 = vector.broadcast %3 : vector<1x32xf32> to vector<16x32xf32>
    %95 = arith.mulf %93, %94 : vector<16x32xf32>
    %96 = vector.broadcast %4 : vector<1x32xf32> to vector<16x32xf32>
    %97 = arith.addf %95, %96 : vector<16x32xf32>
    %cst_42 = arith.constant dense<0.000000e+00> : vector<16x128xf32>
    %98 = tpu.matmul %97, %5, %cst_42 {dimension_numbers = #tpu.dot_dimension_numbers<[1], [0], [0], [1], [0, 0, 1, 1], [], []>} : vector<16x32xf32>, vector<32x128xf32>, vector<16x128xf32> -> vector<16x128xf32>
    %99 = vector.broadcast %6 : vector<1x128xf32> to vector<16x128xf32>
    %100 = arith.addf %98, %99 : vector<16x128xf32>
    %101 = vector.extract_strided_slice %100 {offsets = [0, 0], sizes = [16, 32], strides = [1, 1]} : vector<16x128xf32> to vector<16x32xf32>
    %102 = arith.negf %101 : vector<16x32xf32>
    %103 = math.exp %102 : vector<16x32xf32>
    %cst_43 = arith.constant 1.000000e+00 : f32
    %104 = vector.broadcast %cst_43 : f32 to vector<16x32xf32>
    %105 = arith.addf %104, %103 : vector<16x32xf32>
    %106 = arith.divf %104, %105 : vector<16x32xf32>
    %107 = vector.extract_strided_slice %100 {offsets = [0, 32], sizes = [16, 8], strides = [1, 1]} : vector<16x128xf32> to vector<16x8xf32>
    %108 = vector.extract_strided_slice %100 {offsets = [0, 40], sizes = [16, 8], strides = [1, 1]} : vector<16x128xf32> to vector<16x8xf32>
    %109 = vector.extract_strided_slice %100 {offsets = [0, 48], sizes = [16, 8], strides = [1, 1]} : vector<16x128xf32> to vector<16x8xf32>
    %110 = vector.extract_strided_slice %100 {offsets = [0, 56], sizes = [16, 8], strides = [1, 1]} : vector<16x128xf32> to vector<16x8xf32>
    %111 = vector.shape_cast %107 : vector<16x8xf32> to vector<1x16x8xf32>
    %112 = vector.shape_cast %108 : vector<16x8xf32> to vector<1x16x8xf32>
    %113 = vector.shape_cast %109 : vector<16x8xf32> to vector<1x16x8xf32>
    %114 = vector.shape_cast %110 : vector<16x8xf32> to vector<1x16x8xf32>
    %115 = tpu.concatenate %111, %112, %113, %114 in 0 : vector<1x16x8xf32>, vector<1x16x8xf32>, vector<1x16x8xf32>, vector<1x16x8xf32> -> vector<4x16x8xf32>
    %116 = vector.extract_strided_slice %100 {offsets = [0, 64], sizes = [16, 8], strides = [1, 1]} : vector<16x128xf32> to vector<16x8xf32>
    %117 = vector.extract_strided_slice %100 {offsets = [0, 72], sizes = [16, 8], strides = [1, 1]} : vector<16x128xf32> to vector<16x8xf32>
    %118 = vector.extract_strided_slice %100 {offsets = [0, 80], sizes = [16, 8], strides = [1, 1]} : vector<16x128xf32> to vector<16x8xf32>
    %119 = vector.extract_strided_slice %100 {offsets = [0, 88], sizes = [16, 8], strides = [1, 1]} : vector<16x128xf32> to vector<16x8xf32>
    %120 = vector.shape_cast %116 : vector<16x8xf32> to vector<1x16x8xf32>
    %121 = vector.shape_cast %117 : vector<16x8xf32> to vector<1x16x8xf32>
    %122 = vector.shape_cast %118 : vector<16x8xf32> to vector<1x16x8xf32>
    %123 = vector.shape_cast %119 : vector<16x8xf32> to vector<1x16x8xf32>
    %124 = tpu.concatenate %120, %121, %122, %123 in 0 : vector<1x16x8xf32>, vector<1x16x8xf32>, vector<1x16x8xf32>, vector<1x16x8xf32> -> vector<4x16x8xf32>
    %125 = vector.extract_strided_slice %100 {offsets = [0, 96], sizes = [16, 8], strides = [1, 1]} : vector<16x128xf32> to vector<16x8xf32>
    %126 = vector.extract_strided_slice %100 {offsets = [0, 104], sizes = [16, 8], strides = [1, 1]} : vector<16x128xf32> to vector<16x8xf32>
    %127 = vector.extract_strided_slice %100 {offsets = [0, 112], sizes = [16, 8], strides = [1, 1]} : vector<16x128xf32> to vector<16x8xf32>
    %128 = vector.extract_strided_slice %100 {offsets = [0, 120], sizes = [16, 8], strides = [1, 1]} : vector<16x128xf32> to vector<16x8xf32>
    %129 = vector.shape_cast %125 : vector<16x8xf32> to vector<1x16x8xf32>
    %130 = vector.shape_cast %126 : vector<16x8xf32> to vector<1x16x8xf32>
    %131 = vector.shape_cast %127 : vector<16x8xf32> to vector<1x16x8xf32>
    %132 = vector.shape_cast %128 : vector<16x8xf32> to vector<1x16x8xf32>
    %133 = tpu.concatenate %129, %130, %131, %132 in 0 : vector<1x16x8xf32>, vector<1x16x8xf32>, vector<1x16x8xf32>, vector<1x16x8xf32> -> vector<4x16x8xf32>
    "tpu.trace_start"() <{level = 10 : i32, message = "hik,hjk->hij"}> : () -> ()
    %cst_44 = arith.constant dense<0.000000e+00> : vector<4x16x16xf32>
    %134 = tpu.matmul %115, %124, %cst_44 {dimension_numbers = #tpu.dot_dimension_numbers<[2], [2], [1], [1], [0, 0, 0, 1, 1, 1], [0], [0]>} : vector<4x16x8xf32>, vector<4x16x8xf32>, vector<4x16x16xf32> -> vector<4x16x16xf32>
    "tpu.trace_stop"() : () -> ()
    %135 = arith.addf %134, %75 : vector<4x16x16xf32>
    %cst_45 = arith.constant dense<0xFF800000> : vector<4x16xf32>
    %136 = vector.multi_reduction <maximumf>, %135, %cst_45 [2] : vector<4x16x16xf32> to vector<4x16xf32>
    %137 = vector.shape_cast %136 : vector<4x16xf32> to vector<4x16x1xf32>
    %138 = vector.broadcast %137 : vector<4x16x1xf32> to vector<4x16x16xf32>
    %139 = arith.subf %135, %138 : vector<4x16x16xf32>
    %140 = math.exp %139 : vector<4x16x16xf32>
    %cst_46 = arith.constant dense<0.000000e+00> : vector<4x16xf32>
    %141 = vector.multi_reduction <add>, %140, %cst_46 [2] : vector<4x16x16xf32> to vector<4x16xf32>
    %142 = vector.shape_cast %141 : vector<4x16xf32> to vector<4x16x1xf32>
    %143 = vector.broadcast %142 : vector<4x16x1xf32> to vector<4x16x16xf32>
    %144 = arith.divf %140, %143 : vector<4x16x16xf32>
    "tpu.trace_start"() <{level = 10 : i32, message = "hij,hjk->hik"}> : () -> ()
    %cst_47 = arith.constant dense<0.000000e+00> : vector<4x16x8xf32>
    %145 = tpu.matmul %144, %133, %cst_47 {dimension_numbers = #tpu.dot_dimension_numbers<[2], [1], [1], [2], [0, 0, 0, 1, 1, 2], [0], [0]>} : vector<4x16x16xf32>, vector<4x16x8xf32>, vector<4x16x8xf32> -> vector<4x16x8xf32>
    "tpu.trace_stop"() : () -> ()
    %146 = vector.extract_strided_slice %145 {offsets = [0, 0, 0], sizes = [1, 16, 8], strides = [1, 1, 1]} : vector<4x16x8xf32> to vector<1x16x8xf32>
    %147 = vector.shape_cast %146 : vector<1x16x8xf32> to vector<16x8xf32>
    %148 = vector.extract_strided_slice %145 {offsets = [1, 0, 0], sizes = [1, 16, 8], strides = [1, 1, 1]} : vector<4x16x8xf32> to vector<1x16x8xf32>
    %149 = vector.shape_cast %148 : vector<1x16x8xf32> to vector<16x8xf32>
    %150 = vector.extract_strided_slice %145 {offsets = [2, 0, 0], sizes = [1, 16, 8], strides = [1, 1, 1]} : vector<4x16x8xf32> to vector<1x16x8xf32>
    %151 = vector.shape_cast %150 : vector<1x16x8xf32> to vector<16x8xf32>
    %152 = vector.extract_strided_slice %145 {offsets = [3, 0, 0], sizes = [1, 16, 8], strides = [1, 1, 1]} : vector<4x16x8xf32> to vector<1x16x8xf32>
    %153 = vector.shape_cast %152 : vector<1x16x8xf32> to vector<16x8xf32>
    %154 = tpu.concatenate %147, %149, %151, %153 in 1 : vector<16x8xf32>, vector<16x8xf32>, vector<16x8xf32>, vector<16x8xf32> -> vector<16x32xf32>
    %cst_48 = arith.constant dense<0.000000e+00> : vector<16x32xf32>
    %155 = tpu.matmul %154, %7, %cst_48 {dimension_numbers = #tpu.dot_dimension_numbers<[1], [0], [0], [1], [0, 0, 1, 1], [], []>} : vector<16x32xf32>, vector<32x32xf32>, vector<16x32xf32> -> vector<16x32xf32>
    %156 = vector.broadcast %8 : vector<1x32xf32> to vector<16x32xf32>
    %157 = arith.addf %155, %156 : vector<16x32xf32>
    %158 = arith.mulf %106, %157 : vector<16x32xf32>
    %159 = arith.addf %55, %158 : vector<16x32xf32>
    %cst_49 = arith.constant dense<0.000000e+00> : vector<16xf32>
    %160 = vector.multi_reduction <add>, %159, %cst_49 [1] : vector<16x32xf32> to vector<16xf32>
    %161 = vector.shape_cast %160 : vector<16xf32> to vector<16x1xf32>
    %cst_50 = arith.constant 3.200000e+01 : f32
    %162 = vector.broadcast %cst_50 : f32 to vector<16x1xf32>
    %163 = arith.divf %161, %162 : vector<16x1xf32>
    %164 = vector.broadcast %163 : vector<16x1xf32> to vector<16x32xf32>
    %165 = arith.subf %159, %164 : vector<16x32xf32>
    %166 = arith.mulf %165, %165 : vector<16x32xf32>
    %cst_51 = arith.constant dense<0.000000e+00> : vector<16xf32>
    %167 = vector.multi_reduction <add>, %166, %cst_51 [1] : vector<16x32xf32> to vector<16xf32>
    %168 = vector.shape_cast %167 : vector<16xf32> to vector<16x1xf32>
    %cst_52 = arith.constant 3.200000e+01 : f32
    %169 = vector.broadcast %cst_52 : f32 to vector<16x1xf32>
    %170 = arith.divf %168, %169 : vector<16x1xf32>
    %171 = vector.broadcast %163 : vector<16x1xf32> to vector<16x32xf32>
    %172 = arith.subf %159, %171 : vector<16x32xf32>
    %cst_53 = arith.constant 9.99999974E-6 : f32
    %173 = vector.broadcast %cst_53 : f32 to vector<16x1xf32>
    %174 = arith.addf %170, %173 : vector<16x1xf32>
    %175 = math.rsqrt %174 : vector<16x1xf32>
    %176 = vector.broadcast %175 : vector<16x1xf32> to vector<16x32xf32>
    %177 = arith.mulf %172, %176 : vector<16x32xf32>
    %178 = vector.broadcast %9 : vector<1x32xf32> to vector<16x32xf32>
    %179 = arith.mulf %177, %178 : vector<16x32xf32>
    %180 = vector.broadcast %10 : vector<1x32xf32> to vector<16x32xf32>
    %181 = arith.addf %179, %180 : vector<16x32xf32>
    %cst_54 = arith.constant dense<0.000000e+00> : vector<16x256xf32>
    %182 = tpu.matmul %181, %11, %cst_54 {dimension_numbers = #tpu.dot_dimension_numbers<[1], [0], [0], [1], [0, 0, 1, 1], [], []>} : vector<16x32xf32>, vector<32x256xf32>, vector<16x256xf32> -> vector<16x256xf32>
    %183 = vector.broadcast %12 : vector<1x256xf32> to vector<16x256xf32>
    %184 = arith.addf %182, %183 : vector<16x256xf32>
    %185 = vector.extract_strided_slice %184 {offsets = [0, 0], sizes = [16, 128], strides = [1, 1]} : vector<16x256xf32> to vector<16x128xf32>
    %186 = vector.extract_strided_slice %184 {offsets = [0, 128], sizes = [16, 128], strides = [1, 1]} : vector<16x256xf32> to vector<16x128xf32>
    %187 = arith.negf %186 : vector<16x128xf32>
    %188 = math.exp %187 : vector<16x128xf32>
    %cst_55 = arith.constant 1.000000e+00 : f32
    %189 = vector.broadcast %cst_55 : f32 to vector<16x128xf32>
    %190 = arith.addf %189, %188 : vector<16x128xf32>
    %191 = arith.divf %189, %190 : vector<16x128xf32>
    %192 = arith.mulf %186, %191 : vector<16x128xf32>
    %193 = arith.mulf %185, %192 : vector<16x128xf32>
    %cst_56 = arith.constant dense<0.000000e+00> : vector<16x32xf32>
    %194 = tpu.matmul %193, %13, %cst_56 {dimension_numbers = #tpu.dot_dimension_numbers<[1], [0], [0], [1], [0, 0, 1, 1], [], []>} : vector<16x128xf32>, vector<128x32xf32>, vector<16x32xf32> -> vector<16x32xf32>
    %195 = arith.addf %159, %194 : vector<16x32xf32>
    %196 = vector.broadcast %14 : vector<1x32xf32> to vector<16x32xf32>
    %197 = arith.addf %195, %196 : vector<16x32xf32>
    %c1_i32 = arith.constant 1 : i32
    %cst_57 = arith.constant dense<0.000000e+00> : vector<16xf32>
    %198 = vector.multi_reduction <add>, %197, %cst_57 [1] : vector<16x32xf32> to vector<16xf32>
    %199 = vector.shape_cast %198 : vector<16xf32> to vector<16x1xf32>
    %cst_58 = arith.constant 3.200000e+01 : f32
    %200 = vector.broadcast %cst_58 : f32 to vector<16x1xf32>
    %201 = arith.divf %199, %200 : vector<16x1xf32>
    %202 = vector.broadcast %201 : vector<16x1xf32> to vector<16x32xf32>
    %203 = arith.subf %197, %202 : vector<16x32xf32>
    %204 = arith.mulf %203, %203 : vector<16x32xf32>
    %cst_59 = arith.constant dense<0.000000e+00> : vector<16xf32>
    %205 = vector.multi_reduction <add>, %204, %cst_59 [1] : vector<16x32xf32> to vector<16xf32>
    %206 = vector.shape_cast %205 : vector<16xf32> to vector<16x1xf32>
    %cst_60 = arith.constant 3.200000e+01 : f32
    %207 = vector.broadcast %cst_60 : f32 to vector<16x1xf32>
    %208 = arith.divf %206, %207 : vector<16x1xf32>
    %209 = vector.broadcast %201 : vector<16x1xf32> to vector<16x32xf32>
    %210 = arith.subf %197, %209 : vector<16x32xf32>
    %cst_61 = arith.constant 9.99999974E-6 : f32
    %211 = vector.broadcast %cst_61 : f32 to vector<16x1xf32>
    %212 = arith.addf %208, %211 : vector<16x1xf32>
    %213 = math.rsqrt %212 : vector<16x1xf32>
    %214 = vector.broadcast %213 : vector<16x1xf32> to vector<16x32xf32>
    %215 = arith.mulf %210, %214 : vector<16x32xf32>
    %216 = vector.broadcast %3 : vector<1x32xf32> to vector<16x32xf32>
    %217 = arith.mulf %215, %216 : vector<16x32xf32>
    %218 = vector.broadcast %4 : vector<1x32xf32> to vector<16x32xf32>
    %219 = arith.addf %217, %218 : vector<16x32xf32>
    %cst_62 = arith.constant dense<0.000000e+00> : vector<16x128xf32>
    %220 = tpu.matmul %219, %5, %cst_62 {dimension_numbers = #tpu.dot_dimension_numbers<[1], [0], [0], [1], [0, 0, 1, 1], [], []>} : vector<16x32xf32>, vector<32x128xf32>, vector<16x128xf32> -> vector<16x128xf32>
    %221 = vector.broadcast %6 : vector<1x128xf32> to vector<16x128xf32>
    %222 = arith.addf %220, %221 : vector<16x128xf32>
    %223 = vector.extract_strided_slice %222 {offsets = [0, 0], sizes = [16, 32], strides = [1, 1]} : vector<16x128xf32> to vector<16x32xf32>
    %224 = arith.negf %223 : vector<16x32xf32>
    %225 = math.exp %224 : vector<16x32xf32>
    %cst_63 = arith.constant 1.000000e+00 : f32
    %226 = vector.broadcast %cst_63 : f32 to vector<16x32xf32>
    %227 = arith.addf %226, %225 : vector<16x32xf32>
    %228 = arith.divf %226, %227 : vector<16x32xf32>
    %229 = vector.extract_strided_slice %222 {offsets = [0, 32], sizes = [16, 8], strides = [1, 1]} : vector<16x128xf32> to vector<16x8xf32>
    %230 = vector.extract_strided_slice %222 {offsets = [0, 40], sizes = [16, 8], strides = [1, 1]} : vector<16x128xf32> to vector<16x8xf32>
    %231 = vector.extract_strided_slice %222 {offsets = [0, 48], sizes = [16, 8], strides = [1, 1]} : vector<16x128xf32> to vector<16x8xf32>
    %232 = vector.extract_strided_slice %222 {offsets = [0, 56], sizes = [16, 8], strides = [1, 1]} : vector<16x128xf32> to vector<16x8xf32>
    %233 = vector.shape_cast %229 : vector<16x8xf32> to vector<1x16x8xf32>
    %234 = vector.shape_cast %230 : vector<16x8xf32> to vector<1x16x8xf32>
    %235 = vector.shape_cast %231 : vector<16x8xf32> to vector<1x16x8xf32>
    %236 = vector.shape_cast %232 : vector<16x8xf32> to vector<1x16x8xf32>
    %237 = tpu.concatenate %233, %234, %235, %236 in 0 : vector<1x16x8xf32>, vector<1x16x8xf32>, vector<1x16x8xf32>, vector<1x16x8xf32> -> vector<4x16x8xf32>
    %238 = vector.extract_strided_slice %222 {offsets = [0, 64], sizes = [16, 8], strides = [1, 1]} : vector<16x128xf32> to vector<16x8xf32>
    %239 = vector.extract_strided_slice %222 {offsets = [0, 72], sizes = [16, 8], strides = [1, 1]} : vector<16x128xf32> to vector<16x8xf32>
    %240 = vector.extract_strided_slice %222 {offsets = [0, 80], sizes = [16, 8], strides = [1, 1]} : vector<16x128xf32> to vector<16x8xf32>
    %241 = vector.extract_strided_slice %222 {offsets = [0, 88], sizes = [16, 8], strides = [1, 1]} : vector<16x128xf32> to vector<16x8xf32>
    %242 = vector.shape_cast %238 : vector<16x8xf32> to vector<1x16x8xf32>
    %243 = vector.shape_cast %239 : vector<16x8xf32> to vector<1x16x8xf32>
    %244 = vector.shape_cast %240 : vector<16x8xf32> to vector<1x16x8xf32>
    %245 = vector.shape_cast %241 : vector<16x8xf32> to vector<1x16x8xf32>
    %246 = tpu.concatenate %242, %243, %244, %245 in 0 : vector<1x16x8xf32>, vector<1x16x8xf32>, vector<1x16x8xf32>, vector<1x16x8xf32> -> vector<4x16x8xf32>
    %247 = vector.extract_strided_slice %222 {offsets = [0, 96], sizes = [16, 8], strides = [1, 1]} : vector<16x128xf32> to vector<16x8xf32>
    %248 = vector.extract_strided_slice %222 {offsets = [0, 104], sizes = [16, 8], strides = [1, 1]} : vector<16x128xf32> to vector<16x8xf32>
    %249 = vector.extract_strided_slice %222 {offsets = [0, 112], sizes = [16, 8], strides = [1, 1]} : vector<16x128xf32> to vector<16x8xf32>
    %250 = vector.extract_strided_slice %222 {offsets = [0, 120], sizes = [16, 8], strides = [1, 1]} : vector<16x128xf32> to vector<16x8xf32>
    %251 = vector.shape_cast %247 : vector<16x8xf32> to vector<1x16x8xf32>
    %252 = vector.shape_cast %248 : vector<16x8xf32> to vector<1x16x8xf32>
    %253 = vector.shape_cast %249 : vector<16x8xf32> to vector<1x16x8xf32>
    %254 = vector.shape_cast %250 : vector<16x8xf32> to vector<1x16x8xf32>
    %255 = tpu.concatenate %251, %252, %253, %254 in 0 : vector<1x16x8xf32>, vector<1x16x8xf32>, vector<1x16x8xf32>, vector<1x16x8xf32> -> vector<4x16x8xf32>
    "tpu.trace_start"() <{level = 10 : i32, message = "hik,hjk->hij"}> : () -> ()
    %cst_64 = arith.constant dense<0.000000e+00> : vector<4x16x16xf32>
    %256 = tpu.matmul %237, %246, %cst_64 {dimension_numbers = #tpu.dot_dimension_numbers<[2], [2], [1], [1], [0, 0, 0, 1, 1, 1], [0], [0]>} : vector<4x16x8xf32>, vector<4x16x8xf32>, vector<4x16x16xf32> -> vector<4x16x16xf32>
    "tpu.trace_stop"() : () -> ()
    %257 = arith.addf %256, %75 : vector<4x16x16xf32>
    %cst_65 = arith.constant dense<0xFF800000> : vector<4x16xf32>
    %258 = vector.multi_reduction <maximumf>, %257, %cst_65 [2] : vector<4x16x16xf32> to vector<4x16xf32>
    %259 = vector.shape_cast %258 : vector<4x16xf32> to vector<4x16x1xf32>
    %260 = vector.broadcast %259 : vector<4x16x1xf32> to vector<4x16x16xf32>
    %261 = arith.subf %257, %260 : vector<4x16x16xf32>
    %262 = math.exp %261 : vector<4x16x16xf32>
    %cst_66 = arith.constant dense<0.000000e+00> : vector<4x16xf32>
    %263 = vector.multi_reduction <add>, %262, %cst_66 [2] : vector<4x16x16xf32> to vector<4x16xf32>
    %264 = vector.shape_cast %263 : vector<4x16xf32> to vector<4x16x1xf32>
    %265 = vector.broadcast %264 : vector<4x16x1xf32> to vector<4x16x16xf32>
    %266 = arith.divf %262, %265 : vector<4x16x16xf32>
    "tpu.trace_start"() <{level = 10 : i32, message = "hij,hjk->hik"}> : () -> ()
    %cst_67 = arith.constant dense<0.000000e+00> : vector<4x16x8xf32>
    %267 = tpu.matmul %266, %255, %cst_67 {dimension_numbers = #tpu.dot_dimension_numbers<[2], [1], [1], [2], [0, 0, 0, 1, 1, 2], [0], [0]>} : vector<4x16x16xf32>, vector<4x16x8xf32>, vector<4x16x8xf32> -> vector<4x16x8xf32>
    "tpu.trace_stop"() : () -> ()
    %268 = vector.extract_strided_slice %267 {offsets = [0, 0, 0], sizes = [1, 16, 8], strides = [1, 1, 1]} : vector<4x16x8xf32> to vector<1x16x8xf32>
    %269 = vector.shape_cast %268 : vector<1x16x8xf32> to vector<16x8xf32>
    %270 = vector.extract_strided_slice %267 {offsets = [1, 0, 0], sizes = [1, 16, 8], strides = [1, 1, 1]} : vector<4x16x8xf32> to vector<1x16x8xf32>
    %271 = vector.shape_cast %270 : vector<1x16x8xf32> to vector<16x8xf32>
    %272 = vector.extract_strided_slice %267 {offsets = [2, 0, 0], sizes = [1, 16, 8], strides = [1, 1, 1]} : vector<4x16x8xf32> to vector<1x16x8xf32>
    %273 = vector.shape_cast %272 : vector<1x16x8xf32> to vector<16x8xf32>
    %274 = vector.extract_strided_slice %267 {offsets = [3, 0, 0], sizes = [1, 16, 8], strides = [1, 1, 1]} : vector<4x16x8xf32> to vector<1x16x8xf32>
    %275 = vector.shape_cast %274 : vector<1x16x8xf32> to vector<16x8xf32>
    %276 = tpu.concatenate %269, %271, %273, %275 in 1 : vector<16x8xf32>, vector<16x8xf32>, vector<16x8xf32>, vector<16x8xf32> -> vector<16x32xf32>
    %cst_68 = arith.constant dense<0.000000e+00> : vector<16x32xf32>
    %277 = tpu.matmul %276, %7, %cst_68 {dimension_numbers = #tpu.dot_dimension_numbers<[1], [0], [0], [1], [0, 0, 1, 1], [], []>} : vector<16x32xf32>, vector<32x32xf32>, vector<16x32xf32> -> vector<16x32xf32>
    %278 = vector.broadcast %8 : vector<1x32xf32> to vector<16x32xf32>
    %279 = arith.addf %277, %278 : vector<16x32xf32>
    %280 = arith.mulf %228, %279 : vector<16x32xf32>
    %281 = arith.addf %197, %280 : vector<16x32xf32>
    %cst_69 = arith.constant dense<0.000000e+00> : vector<16xf32>
    %282 = vector.multi_reduction <add>, %281, %cst_69 [1] : vector<16x32xf32> to vector<16xf32>
    %283 = vector.shape_cast %282 : vector<16xf32> to vector<16x1xf32>
    %cst_70 = arith.constant 3.200000e+01 : f32
    %284 = vector.broadcast %cst_70 : f32 to vector<16x1xf32>
    %285 = arith.divf %283, %284 : vector<16x1xf32>
    %286 = vector.broadcast %285 : vector<16x1xf32> to vector<16x32xf32>
    %287 = arith.subf %281, %286 : vector<16x32xf32>
    %288 = arith.mulf %287, %287 : vector<16x32xf32>
    %cst_71 = arith.constant dense<0.000000e+00> : vector<16xf32>
    %289 = vector.multi_reduction <add>, %288, %cst_71 [1] : vector<16x32xf32> to vector<16xf32>
    %290 = vector.shape_cast %289 : vector<16xf32> to vector<16x1xf32>
    %cst_72 = arith.constant 3.200000e+01 : f32
    %291 = vector.broadcast %cst_72 : f32 to vector<16x1xf32>
    %292 = arith.divf %290, %291 : vector<16x1xf32>
    %293 = vector.broadcast %285 : vector<16x1xf32> to vector<16x32xf32>
    %294 = arith.subf %281, %293 : vector<16x32xf32>
    %cst_73 = arith.constant 9.99999974E-6 : f32
    %295 = vector.broadcast %cst_73 : f32 to vector<16x1xf32>
    %296 = arith.addf %292, %295 : vector<16x1xf32>
    %297 = math.rsqrt %296 : vector<16x1xf32>
    %298 = vector.broadcast %297 : vector<16x1xf32> to vector<16x32xf32>
    %299 = arith.mulf %294, %298 : vector<16x32xf32>
    %300 = vector.broadcast %9 : vector<1x32xf32> to vector<16x32xf32>
    %301 = arith.mulf %299, %300 : vector<16x32xf32>
    %302 = vector.broadcast %10 : vector<1x32xf32> to vector<16x32xf32>
    %303 = arith.addf %301, %302 : vector<16x32xf32>
    %cst_74 = arith.constant dense<0.000000e+00> : vector<16x256xf32>
    %304 = tpu.matmul %303, %11, %cst_74 {dimension_numbers = #tpu.dot_dimension_numbers<[1], [0], [0], [1], [0, 0, 1, 1], [], []>} : vector<16x32xf32>, vector<32x256xf32>, vector<16x256xf32> -> vector<16x256xf32>
    %305 = vector.broadcast %12 : vector<1x256xf32> to vector<16x256xf32>
    %306 = arith.addf %304, %305 : vector<16x256xf32>
    %307 = vector.extract_strided_slice %306 {offsets = [0, 0], sizes = [16, 128], strides = [1, 1]} : vector<16x256xf32> to vector<16x128xf32>
    %308 = vector.extract_strided_slice %306 {offsets = [0, 128], sizes = [16, 128], strides = [1, 1]} : vector<16x256xf32> to vector<16x128xf32>
    %309 = arith.negf %308 : vector<16x128xf32>
    %310 = math.exp %309 : vector<16x128xf32>
    %cst_75 = arith.constant 1.000000e+00 : f32
    %311 = vector.broadcast %cst_75 : f32 to vector<16x128xf32>
    %312 = arith.addf %311, %310 : vector<16x128xf32>
    %313 = arith.divf %311, %312 : vector<16x128xf32>
    %314 = arith.mulf %308, %313 : vector<16x128xf32>
    %315 = arith.mulf %307, %314 : vector<16x128xf32>
    %cst_76 = arith.constant dense<0.000000e+00> : vector<16x32xf32>
    %316 = tpu.matmul %315, %13, %cst_76 {dimension_numbers = #tpu.dot_dimension_numbers<[1], [0], [0], [1], [0, 0, 1, 1], [], []>} : vector<16x128xf32>, vector<128x32xf32>, vector<16x32xf32> -> vector<16x32xf32>
    %317 = arith.addf %281, %316 : vector<16x32xf32>
    %318 = vector.broadcast %14 : vector<1x32xf32> to vector<16x32xf32>
    %319 = arith.addf %317, %318 : vector<16x32xf32>
    %cst_77 = arith.constant dense<0.000000e+00> : vector<16x128xf32>
    %320 = tpu.matmul %319, %15, %cst_77 {dimension_numbers = #tpu.dot_dimension_numbers<[1], [0], [0], [1], [0, 0, 1, 1], [], []>} : vector<16x32xf32>, vector<32x128xf32>, vector<16x128xf32> -> vector<16x128xf32>
    %321 = vector.broadcast %16 : vector<1x128xf32> to vector<16x128xf32>
    %322 = arith.addf %320, %321 : vector<16x128xf32>
    %c0_78 = arith.constant 0 : index
    %c0_79 = arith.constant 0 : index
    %323 = vector.load %arg18[%c0_78, %c0_79] : memref<16x128xf32, #tpu.memory_space<vmem>>, vector<16x128xf32>
    tpu.vector_store %arg18[%c0_78, %c0_79], %322 {strides = array<i32>} : memref<16x128xf32, #tpu.memory_space<vmem>>, vector<16x128xf32>,
    return
  }
  func.func @transform_0(%arg0: i32) -> (i32, i32) {
    %c0_i32 = arith.constant 0 : i32
    %c0_i32_0 = arith.constant 0 : i32
    return %arg0, %c0_i32 : i32, i32
  }
  func.func @transform_1(%arg0: i32) -> (i32, i32) {
    %c0_i32 = arith.constant 0 : i32
    %c0_i32_0 = arith.constant 0 : i32
    %c0_i32_1 = arith.constant 0 : i32
    return %c0_i32, %c0_i32_0 : i32, i32
  }
  func.func @transform_2(%arg0: i32) -> (i32, i32) {
    %c0_i32 = arith.constant 0 : i32
    %c0_i32_0 = arith.constant 0 : i32
    %c0_i32_1 = arith.constant 0 : i32
    return %c0_i32, %c0_i32_0 : i32, i32
  }
  func.func @transform_3(%arg0: i32) -> (i32, i32) {
    %c0_i32 = arith.constant 0 : i32
    %c0_i32_0 = arith.constant 0 : i32
    %c0_i32_1 = arith.constant 0 : i32
    return %c0_i32, %c0_i32_0 : i32, i32
  }
  func.func @transform_4(%arg0: i32) -> (i32, i32) {
    %c0_i32 = arith.constant 0 : i32
    %c0_i32_0 = arith.constant 0 : i32
    %c0_i32_1 = arith.constant 0 : i32
    return %c0_i32, %c0_i32_0 : i32, i32
  }
  func.func @transform_5(%arg0: i32) -> (i32, i32) {
    %c0_i32 = arith.constant 0 : i32
    %c0_i32_0 = arith.constant 0 : i32
    %c0_i32_1 = arith.constant 0 : i32
    return %c0_i32, %c0_i32_0 : i32, i32
  }
  func.func @transform_6(%arg0: i32) -> (i32, i32) {
    %c0_i32 = arith.constant 0 : i32
    %c0_i32_0 = arith.constant 0 : i32
    %c0_i32_1 = arith.constant 0 : i32
    return %c0_i32, %c0_i32_0 : i32, i32
  }
  func.func @transform_7(%arg0: i32) -> (i32, i32) {
    %c0_i32 = arith.constant 0 : i32
    %c0_i32_0 = arith.constant 0 : i32
    %c0_i32_1 = arith.constant 0 : i32
    return %c0_i32, %c0_i32_0 : i32, i32
  }
  func.func @transform_8(%arg0: i32) -> (i32, i32) {
    %c0_i32 = arith.constant 0 : i32
    %c0_i32_0 = arith.constant 0 : i32
    %c0_i32_1 = arith.constant 0 : i32
    return %c0_i32, %c0_i32_0 : i32, i32
  }
  func.func @transform_9(%arg0: i32) -> (i32, i32) {
    %c0_i32 = arith.constant 0 : i32
    %c0_i32_0 = arith.constant 0 : i32
    %c0_i32_1 = arith.constant 0 : i32
    return %c0_i32, %c0_i32_0 : i32, i32
  }
  func.func @transform_10(%arg0: i32) -> (i32, i32) {
    %c0_i32 = arith.constant 0 : i32
    %c0_i32_0 = arith.constant 0 : i32
    %c0_i32_1 = arith.constant 0 : i32
    return %c0_i32, %c0_i32_0 : i32, i32
  }
  func.func @transform_11(%arg0: i32) -> (i32, i32) {
    %c0_i32 = arith.constant 0 : i32
    %c0_i32_0 = arith.constant 0 : i32
    %c0_i32_1 = arith.constant 0 : i32
    return %c0_i32, %c0_i32_0 : i32, i32
  }
  func.func @transform_12(%arg0: i32) -> (i32, i32) {
    %c0_i32 = arith.constant 0 : i32
    %c0_i32_0 = arith.constant 0 : i32
    %c0_i32_1 = arith.constant 0 : i32
    return %c0_i32, %c0_i32_0 : i32, i32
  }
  func.func @transform_13(%arg0: i32) -> (i32, i32) {
    %c0_i32 = arith.constant 0 : i32
    %c0_i32_0 = arith.constant 0 : i32
    %c0_i32_1 = arith.constant 0 : i32
    return %c0_i32, %c0_i32_0 : i32, i32
  }
  func.func @transform_14(%arg0: i32) -> (i32, i32) {
    %c0_i32 = arith.constant 0 : i32
    %c0_i32_0 = arith.constant 0 : i32
    %c0_i32_1 = arith.constant 0 : i32
    return %c0_i32, %c0_i32_0 : i32, i32
  }
  func.func @transform_15(%arg0: i32) -> (i32, i32) {
    %c0_i32 = arith.constant 0 : i32
    %c0_i32_0 = arith.constant 0 : i32
    %c0_i32_1 = arith.constant 0 : i32
    return %c0_i32, %c0_i32_0 : i32, i32
  }
  func.func @transform_16(%arg0: i32) -> (i32, i32) {
    %c0_i32 = arith.constant 0 : i32
    %c0_i32_0 = arith.constant 0 : i32
    %c0_i32_1 = arith.constant 0 : i32
    return %c0_i32, %c0_i32_0 : i32, i32
  }
  func.func @transform_17(%arg0: i32) -> (i32, i32) {
    %c0_i32 = arith.constant 0 : i32
    %c0_i32_0 = arith.constant 0 : i32
    return %arg0, %c0_i32 : i32, i32
  }
}

</mosaic_0001>

<llo_original>
// kernel: transformer_net.1
$region0: #{transformer_net.1}
  #allocation0 [shape = 'u32[]', space=smem, size = 0x4, offset = 0x4, fixed_abs, tag = 'smem constant byte address 0x4 - core index']
  #allocation1 [shape = 'u32[144,128]{1,0:T(1,128)}', space=vmem, size = 0x12000, scoped, tag = 'internal scratch']
  %s0 = inlined_call_operand.vmem [shape: f32[32,32], index: 0, kind: input, shape index: {}]
  %s1 = inlined_call_operand.vmem [shape: f32[7,32], index: 1, kind: input, shape index: {}]
  %s2 = inlined_call_operand.vmem [shape: f32[1,32], index: 2, kind: input, shape index: {}]
  %s3 = inlined_call_operand.vmem [shape: f32[1,32], index: 3, kind: input, shape index: {}]
  %s4 = inlined_call_operand.vmem [shape: f32[1,32], index: 4, kind: input, shape index: {}]
  %s5 = inlined_call_operand.vmem [shape: f32[32,128], index: 5, kind: input, shape index: {}]
  %s6 = inlined_call_operand.vmem [shape: f32[1,128], index: 6, kind: input, shape index: {}]
  %s7 = inlined_call_operand.vmem [shape: f32[32,32], index: 7, kind: input, shape index: {}]
  %s8 = inlined_call_operand.vmem [shape: f32[1,32], index: 8, kind: input, shape index: {}]
  %s9 = inlined_call_operand.vmem [shape: f32[1,32], index: 9, kind: input, shape index: {}]
  %s10 = inlined_call_operand.vmem [shape: f32[1,32], index: 10, kind: input, shape index: {}]
  %s11 = inlined_call_operand.vmem [shape: f32[32,256], index: 11, kind: input, shape index: {}]
  %s12 = inlined_call_operand.vmem [shape: f32[1,256], index: 12, kind: input, shape index: {}]
  %s13 = inlined_call_operand.vmem [shape: f32[128,32], index: 13, kind: input, shape index: {}]
  %s14 = inlined_call_operand.vmem [shape: f32[1,32], index: 14, kind: input, shape index: {}]
  %s15 = inlined_call_operand.vmem [shape: f32[32,128], index: 15, kind: input, shape index: {}]
  %s16 = inlined_call_operand.vmem [shape: f32[1,128], index: 16, kind: input, shape index: {}]
  %s17 = inlined_call_operand.vmem [shape: f32[32,128], index: 17, kind: output, shape index: {}]
  %s18 = sld [smem:[#allocation0]]
  $region101: #{transformer_net.1} parent=0
    _
  %s20 = ssub.s32 1, %s18
  %s21 = scalar_select 0, %s20, %s18
  loop: start=0, step=1, limit=4
  $region2: #{transformer_net.1} parent=0 // loop_pre_header
    _
  $region3: #{transformer_net.1} parent=0 // loop_header
    %s23 = sphi 0, %s27
    %p24 = scmp.ge.s32.totalorder %s23, 4
    %s33 = sphi 0, %s35
    %s36 = sphi 0, %s33
    %s37 = sphi 0, %s36
    %s53 = sphi 0, %s37
    %s57 = sphi 0, %s57
    %s59 = sphi 0, %s57
    %s60 = sphi 0, %s59
    %s74 = sphi 0, %s60
    %s78 = sphi 0, %s78
    %s80 = sphi 0, %s78
    %s81 = sphi 0, %s80
    %s95 = sphi 0, %s81
    %s99 = sphi 0, %s99
    %s101 = sphi 0, %s99
    %s102 = sphi 0, %s101
    %s116 = sphi 0, %s102
    %s120 = sphi 0, %s120
    %s122 = sphi 0, %s120
    %s123 = sphi 0, %s122
    %s137 = sphi 0, %s123
    %s141 = sphi 0, %s141
    %s143 = sphi 0, %s141
    %s144 = sphi 0, %s143
    %s158 = sphi 0, %s144
    %s162 = sphi 0, %s162
    %s164 = sphi 0, %s162
    %s165 = sphi 0, %s164
    %s179 = sphi 0, %s165
    %s183 = sphi 0, %s183
    %s185 = sphi 0, %s183
    %s186 = sphi 0, %s185
    %s200 = sphi 0, %s186
    %s204 = sphi 0, %s204
    %s206 = sphi 0, %s204
    %s207 = sphi 0, %s206
    %s221 = sphi 0, %s207
    %s225 = sphi 0, %s225
    %s227 = sphi 0, %s225
    %s228 = sphi 0, %s227
    %s242 = sphi 0, %s228
    %s246 = sphi 0, %s246
    %s248 = sphi 0, %s246
    %s249 = sphi 0, %s248
    %s263 = sphi 0, %s249
    %s267 = sphi 0, %s267
    %s269 = sphi 0, %s267
    %s270 = sphi 0, %s269
    %s284 = sphi 0, %s270
    %s288 = sphi 0, %s288
    %s290 = sphi 0, %s288
    %s291 = sphi 0, %s290
    %s305 = sphi 0, %s291
    %s309 = sphi 0, %s309
    %s311 = sphi 0, %s309
    %s312 = sphi 0, %s311
    %s326 = sphi 0, %s312
    %s330 = sphi 0, %s330
    %s332 = sphi 0, %s330
    %s333 = sphi 0, %s332
    %s347 = sphi 0, %s333
    %s351 = sphi 0, %s351
    %s353 = sphi 0, %s351
    %s354 = sphi 0, %s353
    %s368 = sphi 0, %s354
    %s372 = sphi 0, %s372
    %s374 = sphi 0, %s372
    %s375 = sphi 0, %s374
    %s389 = sphi 0, %s375
    %s395 = sphi 0, %s397
    %s398 = sphi 0, %s395
    %s399 = sphi 0, %s398
    %s415 = sphi 0, %s399
  $region4: #{transformer_net.1} parent=0 // loop_header_branch
    %26 = sbr.rel (%p24) target = $region8
  $region5: #{transformer_net.1} parent=0 // loop_body
    %s28 = ssub.s32 %s23, 1
    %s29 = ssub.s32 %s23, 2
    %s30 = sadd.s32 %s23, 1
    %s31 = ssub.s32 %s23, %s30
    %p32 = scmp.eq.s32.totalorder %s31, 0
    %s34 = sadd.s32 %s33, 1
    %s35 = scalar_select %p32, %s33, %s34
    %p38 = pneg %p32
    %p39 = scmp.eq.s32.totalorder %s23, 1
    %p40 = por %p38, %p39
    %p41 = scmp.ne.s32.totalorder %s33, %s36
    %p42 = scmp.eq.s32.totalorder %s23, 0
    %p43 = por %p41, %p42
    %p44 = scmp.ne.s32.totalorder %s33, %s36
    %p45 = scmp.eq.s32.totalorder %s28, 1
    %p46 = por %p44, %p45
    %p47 = scmp.ne.s32.totalorder %s36, %s37
    %p48 = scmp.eq.s32.totalorder %s28, 0
    %p49 = por %p47, %p48
    %p50 = scmp.ne.s32.totalorder %s36, %s37
    %p51 = scmp.eq.s32.totalorder %s29, 1
    %p52 = por %p50, %p51
    %p54 = scmp.ne.s32.totalorder %s37, %s53
    %p55 = scmp.eq.s32.totalorder %s29, 0
    %p56 = por %p54, %p55
    %s58 = sadd.s32 %s57, 1
    %p61 = scmp.eq.s32.totalorder %s23, 1
    %p62 = scmp.ne.s32.totalorder %s57, %s59
    %p63 = scmp.eq.s32.totalorder %s23, 0
    %p64 = por %p62, %p63
    %p65 = scmp.ne.s32.totalorder %s57, %s59
    %p66 = scmp.eq.s32.totalorder %s28, 1
    %p67 = por %p65, %p66
    %p68 = scmp.ne.s32.totalorder %s59, %s60
    %p69 = scmp.eq.s32.totalorder %s28, 0
    %p70 = por %p68, %p69
    %p71 = scmp.ne.s32.totalorder %s59, %s60
    %p72 = scmp.eq.s32.totalorder %s29, 1
    %p73 = por %p71, %p72
    %p75 = scmp.ne.s32.totalorder %s60, %s74
    %p76 = scmp.eq.s32.totalorder %s29, 0
    %p77 = por %p75, %p76
    %s79 = sadd.s32 %s78, 1
    %p82 = scmp.eq.s32.totalorder %s23, 1
    %p83 = scmp.ne.s32.totalorder %s78, %s80
    %p84 = scmp.eq.s32.totalorder %s23, 0
    %p85 = por %p83, %p84
    %p86 = scmp.ne.s32.totalorder %s78, %s80
    %p87 = scmp.eq.s32.totalorder %s28, 1
    %p88 = por %p86, %p87
    %p89 = scmp.ne.s32.totalorder %s80, %s81
    %p90 = scmp.eq.s32.totalorder %s28, 0
    %p91 = por %p89, %p90
    %p92 = scmp.ne.s32.totalorder %s80, %s81
    %p93 = scmp.eq.s32.totalorder %s29, 1
    %p94 = por %p92, %p93
    %p96 = scmp.ne.s32.totalorder %s81, %s95
    %p97 = scmp.eq.s32.totalorder %s29, 0
    %p98 = por %p96, %p97
    %s100 = sadd.s32 %s99, 1
    %p103 = scmp.eq.s32.totalorder %s23, 1
    %p104 = scmp.ne.s32.totalorder %s99, %s101
    %p105 = scmp.eq.s32.totalorder %s23, 0
    %p106 = por %p104, %p105
    %p107 = scmp.ne.s32.totalorder %s99, %s101
    %p108 = scmp.eq.s32.totalorder %s28, 1
    %p109 = por %p107, %p108
    %p110 = scmp.ne.s32.totalorder %s101, %s102
    %p111 = scmp.eq.s32.totalorder %s28, 0
    %p112 = por %p110, %p111
    %p113 = scmp.ne.s32.totalorder %s101, %s102
    %p114 = scmp.eq.s32.totalorder %s29, 1
    %p115 = por %p113, %p114
    %p117 = scmp.ne.s32.totalorder %s102, %s116
    %p118 = scmp.eq.s32.totalorder %s29, 0
    %p119 = por %p117, %p118
    %s121 = sadd.s32 %s120, 1
    %p124 = scmp.eq.s32.totalorder %s23, 1
    %p125 = scmp.ne.s32.totalorder %s120, %s122
    %p126 = scmp.eq.s32.totalorder %s23, 0
    %p127 = por %p125, %p126
    %p128 = scmp.ne.s32.totalorder %s120, %s122
    %p129 = scmp.eq.s32.totalorder %s28, 1
    %p130 = por %p128, %p129
    %p131 = scmp.ne.s32.totalorder %s122, %s123
    %p132 = scmp.eq.s32.totalorder %s28, 0
    %p133 = por %p131, %p132
    %p134 = scmp.ne.s32.totalorder %s122, %s123
    %p135 = scmp.eq.s32.totalorder %s29, 1
    %p136 = por %p134, %p135
    %p138 = scmp.ne.s32.totalorder %s123, %s137
    %p139 = scmp.eq.s32.totalorder %s29, 0
    %p140 = por %p138, %p139
    %s142 = sadd.s32 %s141, 1
    %p145 = scmp.eq.s32.totalorder %s23, 1
    %p146 = scmp.ne.s32.totalorder %s141, %s143
    %p147 = scmp.eq.s32.totalorder %s23, 0
    %p148 = por %p146, %p147
    %p149 = scmp.ne.s32.totalorder %s141, %s143
    %p150 = scmp.eq.s32.totalorder %s28, 1
    %p151 = por %p149, %p150
    %p152 = scmp.ne.s32.totalorder %s143, %s144
    %p153 = scmp.eq.s32.totalorder %s28, 0
    %p154 = por %p152, %p153
    %p155 = scmp.ne.s32.totalorder %s143, %s144
    %p156 = scmp.eq.s32.totalorder %s29, 1
    %p157 = por %p155, %p156
    %p159 = scmp.ne.s32.totalorder %s144, %s158
    %p160 = scmp.eq.s32.totalorder %s29, 0
    %p161 = por %p159, %p160
    %s163 = sadd.s32 %s162, 1
    %p166 = scmp.eq.s32.totalorder %s23, 1
    %p167 = scmp.ne.s32.totalorder %s162, %s164
    %p168 = scmp.eq.s32.totalorder %s23, 0
    %p169 = por %p167, %p168
    %p170 = scmp.ne.s32.totalorder %s162, %s164
    %p171 = scmp.eq.s32.totalorder %s28, 1
    %p172 = por %p170, %p171
    %p173 = scmp.ne.s32.totalorder %s164, %s165
    %p174 = scmp.eq.s32.totalorder %s28, 0
    %p175 = por %p173, %p174
    %p176 = scmp.ne.s32.totalorder %s164, %s165
    %p177 = scmp.eq.s32.totalorder %s29, 1
    %p178 = por %p176, %p177
    %p180 = scmp.ne.s32.totalorder %s165, %s179
    %p181 = scmp.eq.s32.totalorder %s29, 0
    %p182 = por %p180, %p181
    %s184 = sadd.s32 %s183, 1
    %p187 = scmp.eq.s32.totalorder %s23, 1
    %p188 = scmp.ne.s32.totalorder %s183, %s185
    %p189 = scmp.eq.s32.totalorder %s23, 0
    %p190 = por %p188, %p189
    %p191 = scmp.ne.s32.totalorder %s183, %s185
    %p192 = scmp.eq.s32.totalorder %s28, 1
    %p193 = por %p191, %p192
    %p194 = scmp.ne.s32.totalorder %s185, %s186
    %p195 = scmp.eq.s32.totalorder %s28, 0
    %p196 = por %p194, %p195
    %p197 = scmp.ne.s32.totalorder %s185, %s186
    %p198 = scmp.eq.s32.totalorder %s29, 1
    %p199 = por %p197, %p198
    %p201 = scmp.ne.s32.totalorder %s186, %s200
    %p202 = scmp.eq.s32.totalorder %s29, 0
    %p203 = por %p201, %p202
    %s205 = sadd.s32 %s204, 1
    %p208 = scmp.eq.s32.totalorder %s23, 1
    %p209 = scmp.ne.s32.totalorder %s204, %s206
    %p210 = scmp.eq.s32.totalorder %s23, 0
    %p211 = por %p209, %p210
    %p212 = scmp.ne.s32.totalorder %s204, %s206
    %p213 = scmp.eq.s32.totalorder %s28, 1
    %p214 = por %p212, %p213
    %p215 = scmp.ne.s32.totalorder %s206, %s207
    %p216 = scmp.eq.s32.totalorder %s28, 0
    %p217 = por %p215, %p216
    %p218 = scmp.ne.s32.totalorder %s206, %s207
    %p219 = scmp.eq.s32.totalorder %s29, 1
    %p220 = por %p218, %p219
    %p222 = scmp.ne.s32.totalorder %s207, %s221
    %p223 = scmp.eq.s32.totalorder %s29, 0
    %p224 = por %p222, %p223
    %s226 = sadd.s32 %s225, 1
    %p229 = scmp.eq.s32.totalorder %s23, 1
    %p230 = scmp.ne.s32.totalorder %s225, %s227
    %p231 = scmp.eq.s32.totalorder %s23, 0
    %p232 = por %p230, %p231
    %p233 = scmp.ne.s32.totalorder %s225, %s227
    %p234 = scmp.eq.s32.totalorder %s28, 1
    %p235 = por %p233, %p234
    %p236 = scmp.ne.s32.totalorder %s227, %s228
    %p237 = scmp.eq.s32.totalorder %s28, 0
    %p238 = por %p236, %p237
    %p239 = scmp.ne.s32.totalorder %s227, %s228
    %p240 = scmp.eq.s32.totalorder %s29, 1
    %p241 = por %p239, %p240
    %p243 = scmp.ne.s32.totalorder %s228, %s242
    %p244 = scmp.eq.s32.totalorder %s29, 0
    %p245 = por %p243, %p244
    %s247 = sadd.s32 %s246, 1
    %p250 = scmp.eq.s32.totalorder %s23, 1
    %p251 = scmp.ne.s32.totalorder %s246, %s248
    %p252 = scmp.eq.s32.totalorder %s23, 0
    %p253 = por %p251, %p252
    %p254 = scmp.ne.s32.totalorder %s246, %s248
    %p255 = scmp.eq.s32.totalorder %s28, 1
    %p256 = por %p254, %p255
    %p257 = scmp.ne.s32.totalorder %s248, %s249
    %p258 = scmp.eq.s32.totalorder %s28, 0
    %p259 = por %p257, %p258
    %p260 = scmp.ne.s32.totalorder %s248, %s249
    %p261 = scmp.eq.s32.totalorder %s29, 1
    %p262 = por %p260, %p261
    %p264 = scmp.ne.s32.totalorder %s249, %s263
    %p265 = scmp.eq.s32.totalorder %s29, 0
    %p266 = por %p264, %p265
    %s268 = sadd.s32 %s267, 1
    %p271 = scmp.eq.s32.totalorder %s23, 1
    %p272 = scmp.ne.s32.totalorder %s267, %s269
    %p273 = scmp.eq.s32.totalorder %s23, 0
    %p274 = por %p272, %p273
    %p275 = scmp.ne.s32.totalorder %s267, %s269
    %p276 = scmp.eq.s32.totalorder %s28, 1
    %p277 = por %p275, %p276
    %p278 = scmp.ne.s32.totalorder %s269, %s270
    %p279 = scmp.eq.s32.totalorder %s28, 0
    %p280 = por %p278, %p279
    %p281 = scmp.ne.s32.totalorder %s269, %s270
    %p282 = scmp.eq.s32.totalorder %s29, 1
    %p283 = por %p281, %p282
    %p285 = scmp.ne.s32.totalorder %s270, %s284
    %p286 = scmp.eq.s32.totalorder %s29, 0
    %p287 = por %p285, %p286
    %s289 = sadd.s32 %s288, 1
    %p292 = scmp.eq.s32.totalorder %s23, 1
    %p293 = scmp.ne.s32.totalorder %s288, %s290
    %p294 = scmp.eq.s32.totalorder %s23, 0
    %p295 = por %p293, %p294
    %p296 = scmp.ne.s32.totalorder %s288, %s290
    %p297 = scmp.eq.s32.totalorder %s28, 1
    %p298 = por %p296, %p297
    %p299 = scmp.ne.s32.totalorder %s290, %s291
    %p300 = scmp.eq.s32.totalorder %s28, 0
    %p301 = por %p299, %p300
    %p302 = scmp.ne.s32.totalorder %s290, %s291
    %p303 = scmp.eq.s32.totalorder %s29, 1
    %p304 = por %p302, %p303
    %p306 = scmp.ne.s32.totalorder %s291, %s305
    %p307 = scmp.eq.s32.totalorder %s29, 0
    %p308 = por %p306, %p307
    %s310 = sadd.s32 %s309, 1
    %p313 = scmp.eq.s32.totalorder %s23, 1
    %p314 = scmp.ne.s32.totalorder %s309, %s311
    %p315 = scmp.eq.s32.totalorder %s23, 0
    %p316 = por %p314, %p315
    %p317 = scmp.ne.s32.totalorder %s309, %s311
    %p318 = scmp.eq.s32.totalorder %s28, 1
    %p319 = por %p317, %p318
    %p320 = scmp.ne.s32.totalorder %s311, %s312
    %p321 = scmp.eq.s32.totalorder %s28, 0
    %p322 = por %p320, %p321
    %p323 = scmp.ne.s32.totalorder %s311, %s312
    %p324 = scmp.eq.s32.totalorder %s29, 1
    %p325 = por %p323, %p324
    %p327 = scmp.ne.s32.totalorder %s312, %s326
    %p328 = scmp.eq.s32.totalorder %s29, 0
    %p329 = por %p327, %p328
    %s331 = sadd.s32 %s330, 1
    %p334 = scmp.eq.s32.totalorder %s23, 1
    %p335 = scmp.ne.s32.totalorder %s330, %s332
    %p336 = scmp.eq.s32.totalorder %s23, 0
    %p337 = por %p335, %p336
    %p338 = scmp.ne.s32.totalorder %s330, %s332
    %p339 = scmp.eq.s32.totalorder %s28, 1
    %p340 = por %p338, %p339
    %p341 = scmp.ne.s32.totalorder %s332, %s333
    %p342 = scmp.eq.s32.totalorder %s28, 0
    %p343 = por %p341, %p342
    %p344 = scmp.ne.s32.totalorder %s332, %s333
    %p345 = scmp.eq.s32.totalorder %s29, 1
    %p346 = por %p344, %p345
    %p348 = scmp.ne.s32.totalorder %s333, %s347
    %p349 = scmp.eq.s32.totalorder %s29, 0
    %p350 = por %p348, %p349
    %s352 = sadd.s32 %s351, 1
    %p355 = scmp.eq.s32.totalorder %s23, 1
    %p356 = scmp.ne.s32.totalorder %s351, %s353
    %p357 = scmp.eq.s32.totalorder %s23, 0
    %p358 = por %p356, %p357
    %p359 = scmp.ne.s32.totalorder %s351, %s353
    %p360 = scmp.eq.s32.totalorder %s28, 1
    %p361 = por %p359, %p360
    %p362 = scmp.ne.s32.totalorder %s353, %s354
    %p363 = scmp.eq.s32.totalorder %s28, 0
    %p364 = por %p362, %p363
    %p365 = scmp.ne.s32.totalorder %s353, %s354
    %p366 = scmp.eq.s32.totalorder %s29, 1
    %p367 = por %p365, %p366
    %p369 = scmp.ne.s32.totalorder %s354, %s368
    %p370 = scmp.eq.s32.totalorder %s29, 0
    %p371 = por %p369, %p370
    %s373 = sadd.s32 %s372, 1
    %p376 = scmp.eq.s32.totalorder %s23, 1
    %p377 = scmp.ne.s32.totalorder %s372, %s374
    %p378 = scmp.eq.s32.totalorder %s23, 0
    %p379 = por %p377, %p378
    %p380 = scmp.ne.s32.totalorder %s372, %s374
    %p381 = scmp.eq.s32.totalorder %s28, 1
    %p382 = por %p380, %p381
    %p383 = scmp.ne.s32.totalorder %s374, %s375
    %p384 = scmp.eq.s32.totalorder %s28, 0
    %p385 = por %p383, %p384
    %p386 = scmp.ne.s32.totalorder %s374, %s375
    %p387 = scmp.eq.s32.totalorder %s29, 1
    %p388 = por %p386, %p387
    %p390 = scmp.ne.s32.totalorder %s375, %s389
    %p391 = scmp.eq.s32.totalorder %s29, 0
    %p392 = por %p390, %p391
    %s393 = ssub.s32 %s23, %s30
    %p394 = scmp.eq.s32.totalorder %s393, 0
    %s396 = sadd.s32 %s395, 1
    %s397 = scalar_select %p394, %s395, %s396
    %p400 = pneg %p394
    %p401 = scmp.eq.s32.totalorder %s23, 1
    %p402 = por %p400, %p401
    %p403 = scmp.ne.s32.totalorder %s395, %s398
    %p404 = scmp.eq.s32.totalorder %s23, 0
    %p405 = por %p403, %p404
    %p406 = scmp.ne.s32.totalorder %s395, %s398
    %p407 = scmp.eq.s32.totalorder %s28, 1
    %p408 = por %p406, %p407
    %p409 = scmp.ne.s32.totalorder %s398, %s399
    %p410 = scmp.eq.s32.totalorder %s28, 0
    %p411 = por %p409, %p410
    %p412 = scmp.ne.s32.totalorder %s398, %s399
    %p413 = scmp.eq.s32.totalorder %s29, 1
    %p414 = por %p412, %p413
    %p416 = scmp.ne.s32.totalorder %s399, %s415
    %p417 = scmp.eq.s32.totalorder %s29, 0
    %p418 = por %p416, %p417
    %p419 = scmp.le.s32.totalorder 1, %s23
    %p420 = scmp.lt.s32.totalorder %s23, 3
    %p421 = pnand %p419, %p420
    %p422 = pneg %p421
    // Predicated region
    $region9: #{transformer_net.1} parent=5 // pred_check
      _
    $region10: #{transformer_net.1} parent=5 // pred_check_branch
      %424 = sbr.rel (%p421) target = $region12
    $region11: #{transformer_net.1} parent=5 // pred_region
      %s425 = ssub.s32 %s23, 1
      // Predicated region
      $region13: #{transformer_net.1} parent=11 // pred_check
        %p426 = pneg %p70
      $region14: #{transformer_net.1} parent=11 // pred_check_branch
        %428 = sbr.rel (%p426) target = $region16
      $region15: #{transformer_net.1} parent=11 // pred_region
        _
      $region16: #{transformer_net.1} parent=11 // pred_fallthru
        _
      // Predicated region
      $region17: #{transformer_net.1} parent=11 // pred_check
        %p429 = pneg %p91
      $region18: #{transformer_net.1} parent=11 // pred_check_branch
        %431 = sbr.rel (%p429) target = $region20
      $region19: #{transformer_net.1} parent=11 // pred_region
        _
      $region20: #{transformer_net.1} parent=11 // pred_fallthru
        _
      // Predicated region
      $region21: #{transformer_net.1} parent=11 // pred_check
        %p432 = pneg %p112
      $region22: #{transformer_net.1} parent=11 // pred_check_branch
        %434 = sbr.rel (%p432) target = $region24
      $region23: #{transformer_net.1} parent=11 // pred_region
        _
      $region24: #{transformer_net.1} parent=11 // pred_fallthru
        _
      // Predicated region
      $region25: #{transformer_net.1} parent=11 // pred_check
        %p435 = pneg %p133
      $region26: #{transformer_net.1} parent=11 // pred_check_branch
        %437 = sbr.rel (%p435) target = $region28
      $region27: #{transformer_net.1} parent=11 // pred_region
        _
      $region28: #{transformer_net.1} parent=11 // pred_fallthru
        _
      // Predicated region
      $region29: #{transformer_net.1} parent=11 // pred_check
        %p438 = pneg %p154
      $region30: #{transformer_net.1} parent=11 // pred_check_branch
        %440 = sbr.rel (%p438) target = $region32
      $region31: #{transformer_net.1} parent=11 // pred_region
        _
      $region32: #{transformer_net.1} parent=11 // pred_fallthru
        _
      // Predicated region
      $region33: #{transformer_net.1} parent=11 // pred_check
        %p441 = pneg %p175
      $region34: #{transformer_net.1} parent=11 // pred_check_branch
        %443 = sbr.rel (%p441) target = $region36
      $region35: #{transformer_net.1} parent=11 // pred_region
        _
      $region36: #{transformer_net.1} parent=11 // pred_fallthru
        _
      // Predicated region
      $region37: #{transformer_net.1} parent=11 // pred_check
        %p444 = pneg %p196
      $region38: #{transformer_net.1} parent=11 // pred_check_branch
        %446 = sbr.rel (%p444) target = $region40
      $region39: #{transformer_net.1} parent=11 // pred_region
        _
      $region40: #{transformer_net.1} parent=11 // pred_fallthru
        _
      // Predicated region
      $region41: #{transformer_net.1} parent=11 // pred_check
        %p447 = pneg %p217
      $region42: #{transformer_net.1} parent=11 // pred_check_branch
        %449 = sbr.rel (%p447) target = $region44
      $region43: #{transformer_net.1} parent=11 // pred_region
        _
      $region44: #{transformer_net.1} parent=11 // pred_fallthru
        _
      // Predicated region
      $region45: #{transformer_net.1} parent=11 // pred_check
        %p450 = pneg %p238
      $region46: #{transformer_net.1} parent=11 // pred_check_branch
        %452 = sbr.rel (%p450) target = $region48
      $region47: #{transformer_net.1} parent=11 // pred_region
        _
      $region48: #{transformer_net.1} parent=11 // pred_fallthru
        _
      // Predicated region
      $region49: #{transformer_net.1} parent=11 // pred_check
        %p453 = pneg %p259
      $region50: #{transformer_net.1} parent=11 // pred_check_branch
        %455 = sbr.rel (%p453) target = $region52
      $region51: #{transformer_net.1} parent=11 // pred_region
        _
      $region52: #{transformer_net.1} parent=11 // pred_fallthru
        _
      // Predicated region
      $region53: #{transformer_net.1} parent=11 // pred_check
        %p456 = pneg %p280
      $region54: #{transformer_net.1} parent=11 // pred_check_branch
        %458 = sbr.rel (%p456) target = $region56
      $region55: #{transformer_net.1} parent=11 // pred_region
        _
      $region56: #{transformer_net.1} parent=11 // pred_fallthru
        _
      // Predicated region
      $region57: #{transformer_net.1} parent=11 // pred_check
        %p459 = pneg %p301
      $region58: #{transformer_net.1} parent=11 // pred_check_branch
        %461 = sbr.rel (%p459) target = $region60
      $region59: #{transformer_net.1} parent=11 // pred_region
        _
      $region60: #{transformer_net.1} parent=11 // pred_fallthru
        _
      // Predicated region
      $region61: #{transformer_net.1} parent=11 // pred_check
        %p462 = pneg %p322
      $region62: #{transformer_net.1} parent=11 // pred_check_branch
        %464 = sbr.rel (%p462) target = $region64
      $region63: #{transformer_net.1} parent=11 // pred_region
        _
      $region64: #{transformer_net.1} parent=11 // pred_fallthru
        _
      // Predicated region
      $region65: #{transformer_net.1} parent=11 // pred_check
        %p465 = pneg %p343
      $region66: #{transformer_net.1} parent=11 // pred_check_branch
        %467 = sbr.rel (%p465) target = $region68
      $region67: #{transformer_net.1} parent=11 // pred_region
        _
      $region68: #{transformer_net.1} parent=11 // pred_fallthru
        _
      // Predicated region
      $region69: #{transformer_net.1} parent=11 // pred_check
        %p468 = pneg %p364
      $region70: #{transformer_net.1} parent=11 // pred_check_branch
        %470 = sbr.rel (%p468) target = $region72
      $region71: #{transformer_net.1} parent=11 // pred_region
        _
      $region72: #{transformer_net.1} parent=11 // pred_fallthru
        _
      // Predicated region
      $region73: #{transformer_net.1} parent=11 // pred_check
        %p471 = pneg %p385
      $region74: #{transformer_net.1} parent=11 // pred_check_branch
        %473 = sbr.rel (%p471) target = $region76
      $region75: #{transformer_net.1} parent=11 // pred_region
        _
      $region76: #{transformer_net.1} parent=11 // pred_fallthru
        _
    $region12: #{transformer_net.1} parent=5 // pred_fallthru
      _
    %p474 = scmp.lt.s32.totalorder %s23, 2
    // Predicated region
    $region77: #{transformer_net.1} parent=5 // pred_check
      %p475 = pneg %p474
    $region78: #{transformer_net.1} parent=5 // pred_check_branch
      %477 = sbr.rel (%p475) target = $region80
    $region79: #{transformer_net.1} parent=5 // pred_region
      // Predicated region
      $region81: #{transformer_net.1} parent=79 // pred_check
        %p478 = pneg %p43
      $region82: #{transformer_net.1} parent=79 // pred_check_branch
        %480 = sbr.rel (%p478) target = $region84
      $region83: #{transformer_net.1} parent=79 // pred_region
        %s481 = smul.u32 2, %s23
        %p482 = scmp.lt.s32.totalorder %s481, 3
        %s483 = scalar_select %p482, %s481, 3
        %s484 = smul.addr %s483, 8
        %s485 = scalar_lea.vmem %s0, %s484
        %s486 = smul.u32 2, %s23
      $region84: #{transformer_net.1} parent=79 // pred_fallthru
        _
    $region80: #{transformer_net.1} parent=5 // pred_fallthru
      _
    %p487 = scmp.le.s32.totalorder 1, %s23
    %p488 = scmp.lt.s32.totalorder %s23, 3
    %p489 = pnand %p487, %p488
    %p490 = pneg %p489
    // Predicated region
    $region85: #{transformer_net.1} parent=5 // pred_check
      _
    $region86: #{transformer_net.1} parent=5 // pred_check_branch
      %492 = sbr.rel (%p489) target = $region88
    $region87: #{transformer_net.1} parent=5 // pred_region
      %s493 = ssub.s32 %s23, 1
      %s494 = smul.u32 2, %s28
      %p495 = scmp.lt.s32.totalorder %s494, 3
      %s496 = scalar_select %p495, %s494, 3
      %s497 = smul.addr %s496, 8
      %s498 = scalar_lea.vmem %s0, %s497
      %p499 = pneg %p49
      %p500 = pneg %p46
      %p501 = pneg %p70
      %p502 = pneg %p67
      %p503 = pneg %p91
      %p504 = pneg %p88
      %p505 = pneg %p112
      %p506 = pneg %p109
      %p507 = pneg %p133
      %p508 = pneg %p130
      %p509 = pneg %p154
      %p510 = pneg %p151
      %p511 = pneg %p175
      %p512 = pneg %p172
      %p513 = pneg %p196
      %p514 = pneg %p193
      %p515 = pneg %p217
      %p516 = pneg %p214
      %p517 = pneg %p238
      %p518 = pneg %p235
      %p519 = pneg %p259
      %p520 = pneg %p256
      %p521 = pneg %p280
      %p522 = pneg %p277
      %p523 = pneg %p301
      %p524 = pneg %p298
      %p525 = pneg %p322
      %p526 = pneg %p319
      %p527 = pneg %p343
      %p528 = pneg %p340
      %p529 = pneg %p364
      %p530 = pneg %p361
      %p531 = pneg %p385
      %p532 = pneg %p382
      %p533 = pneg %p411
      %p534 = pneg %p408
      %s535 = smul.u32 2, %s28
      %p536 = scmp.lt.s32.totalorder %s535, 3
      %s537 = scalar_select %p536, %s535, 3
      %s538 = smul.addr %s537, 8
      %s539 = scalar_lea.vmem %s17, %s538
      %s540 = smul.u32 2, %s28
      %p541 = scmp.lt.s32.totalorder %s540, 3
      %s542 = scalar_select %p541, %s540, 3
      %s543 = smul.addr %s542, 8
      %s544 = scalar_lea.vmem %s0, %s543
      %s545 = smul.u32 2, %s28
      %s546 = smul.u32 2, %s28
      %p547 = scmp.lt.s32.totalorder %s546, 3
      %s548 = scalar_select %p547, %s546, 3
      %s549 = smul.addr %s548, 8
      %s550 = scalar_lea.vmem %s17, %s549
      %s551 = smul.u32 2, %s28
      %v552 = vld [vmem:[%s544] sm:$0xff]
      %v553 = vld [vmem:[%s544 + $0x8] sm:$0xff]
      %v554 = vld [vmem:[%s1] sm:$0x7f]
      %v555 = vld [vmem:[%s2] sm:$0x1]
      %v556 = vld [vmem:[%s3] sm:$0x1]
      %v557 = vld [vmem:[%s4] sm:$0x1]
      %v558 = vld [vmem:[%s5] sm:$0xff]
      %v559 = vld [vmem:[%s5 + $0x8] sm:$0xff]
      %v560 = vld [vmem:[%s5 + $0x10] sm:$0xff]
      %v561 = vld [vmem:[%s5 + $0x18] sm:$0xff]
      %v562 = vld [vmem:[%s6] sm:$0x1]
      %v563 = vld [vmem:[%s7] sm:$0xff]
      %v564 = vld [vmem:[%s7 + $0x8] sm:$0xff]
      %v565 = vld [vmem:[%s7 + $0x10] sm:$0xff]
      %v566 = vld [vmem:[%s7 + $0x18] sm:$0xff]
      %v567 = vld [vmem:[%s8] sm:$0x1]
      %v568 = vld [vmem:[%s9] sm:$0x1]
      %v569 = vld [vmem:[%s10] sm:$0x1]
      %v570 = vld [vmem:[%s11] sm:$0xff]
      %v571 = vld [vmem:[%s11 + $0x8] sm:$0xff]
      %v572 = vld [vmem:[%s11 + $0x10] sm:$0xff]
      %v573 = vld [vmem:[%s11 + $0x18] sm:$0xff]
      %v574 = vld [vmem:[%s11 + $0x20] sm:$0xff]
      %v575 = vld [vmem:[%s11 + $0x28] sm:$0xff]
      %v576 = vld [vmem:[%s11 + $0x30] sm:$0xff]
      %v577 = vld [vmem:[%s11 + $0x38] sm:$0xff]
      %v578 = vld [vmem:[%s12] sm:$0x3]
      %v579 = vld [vmem:[%s13] sm:$0xff]
      %v580 = vld [vmem:[%s13 + $0x8] sm:$0xff]
      %v581 = vld [vmem:[%s13 + $0x10] sm:$0xff]
      %v582 = vld [vmem:[%s13 + $0x18] sm:$0xff]
      %v583 = vld [vmem:[%s13 + $0x20] sm:$0xff]
      %v584 = vld [vmem:[%s13 + $0x28] sm:$0xff]
      %v585 = vld [vmem:[%s13 + $0x30] sm:$0xff]
      %v586 = vld [vmem:[%s13 + $0x38] sm:$0xff]
      %v587 = vld [vmem:[%s13 + $0x40] sm:$0xff]
      %v588 = vld [vmem:[%s13 + $0x48] sm:$0xff]
      %v589 = vld [vmem:[%s13 + $0x50] sm:$0xff]
      %v590 = vld [vmem:[%s13 + $0x58] sm:$0xff]
      %v591 = vld [vmem:[%s13 + $0x60] sm:$0xff]
      %v592 = vld [vmem:[%s13 + $0x68] sm:$0xff]
      %v593 = vld [vmem:[%s13 + $0x70] sm:$0xff]
      %v594 = vld [vmem:[%s13 + $0x78] sm:$0xff]
      %v595 = vld [vmem:[%s14] sm:$0x1]
      %v596 = vld [vmem:[%s15] sm:$0xff]
      %v597 = vld [vmem:[%s15 + $0x8] sm:$0xff]
      %v598 = vld [vmem:[%s15 + $0x10] sm:$0xff]
      %v599 = vld [vmem:[%s15 + $0x18] sm:$0xff]
      %v600 = vld [vmem:[%s16] sm:$0x1]
      %vm603 = vcmask 1042432
      %v604 = vrot.slane %v552, 5
      %v605 = vrot.slane %v553, 5
      %v606 = vsel %vm603, %v604, %v605
      %v610 = vsel %vm603, 0.0, %v604
      %v611 = vsel %vm603, %v605, 0.0
      %v612 = vlaneseq
      %v613 = vshrl.u32 %v612, 7
      %v614 = vsub.s32 0, %v613
      %v615 = vrot.slane %v554, %v614
      %v616 = vmul.f32 %v610, %v615
      %v617 = vmul.f32 %v606, %v615
      %v618 = vlaneseq
      %v619 = vshrl.u32 %v618, 7
      %v620 = vsub.s32 1, %v619
      %v621 = vrot.slane %v554, %v620
      %v622 = vmul.f32 %v610, %v621
      %v623 = vmul.f32 %v606, %v621
      %v624 = vmul.f32 %v611, %v621
      %vm628 = vcmask 1046528
      %v629 = vrot.slane %v622, 1
      %v630 = vrot.slane %v623, 1
      %v631 = vsel %vm628, %v629, %v630
      %v632 = vrot.slane %v624, 1
      %v633 = vsel %vm628, %v630, %v632
      %v636 = vadd.f32 %v616, %v631
      %v637 = vadd.f32 %v617, %v633
      %v638 = vlaneseq
      %v639 = vshrl.u32 %v638, 7
      %v640 = vsub.s32 2, %v639
      %v641 = vrot.slane %v554, %v640
      %v642 = vmul.f32 %v610, %v641
      %v643 = vmul.f32 %v606, %v641
      %v644 = vmul.f32 %v611, %v641
      %vm648 = vcmask 1045504
      %v649 = vrot.slane %v642, 2
      %v650 = vrot.slane %v643, 2
      %v651 = vsel %vm648, %v649, %v650
      %v652 = vrot.slane %v644, 2
      %v653 = vsel %vm648, %v650, %v652
      %v656 = vadd.f32 %v636, %v651
      %v657 = vadd.f32 %v637, %v653
      %v658 = vlaneseq
      %v659 = vshrl.u32 %v658, 7
      %v660 = vsub.s32 3, %v659
      %v661 = vrot.slane %v554, %v660
      %v662 = vmul.f32 %v610, %v661
      %v663 = vmul.f32 %v606, %v661
      %v664 = vmul.f32 %v611, %v661
      %vm668 = vcmask 1044480
      %v669 = vrot.slane %v662, 3
      %v670 = vrot.slane %v663, 3
      %v671 = vsel %vm668, %v669, %v670
      %v672 = vrot.slane %v664, 3
      %v673 = vsel %vm668, %v670, %v672
      %v676 = vadd.f32 %v656, %v671
      %v677 = vadd.f32 %v657, %v673
      %v678 = vlaneseq
      %v679 = vshrl.u32 %v678, 7
      %v680 = vsub.s32 4, %v679
      %v681 = vrot.slane %v554, %v680
      %v682 = vmul.f32 %v610, %v681
      %v683 = vmul.f32 %v606, %v681
      %v684 = vmul.f32 %v611, %v681
      %vm688 = vcmask 1043456
      %v689 = vrot.slane %v682, 4
      %v690 = vrot.slane %v683, 4
      %v691 = vsel %vm688, %v689, %v690
      %v692 = vrot.slane %v684, 4
      %v693 = vsel %vm688, %v690, %v692
      %v696 = vadd.f32 %v676, %v691
      %v697 = vadd.f32 %v677, %v693
      %v698 = vlaneseq
      %v699 = vshrl.u32 %v698, 7
      %v700 = vsub.s32 5, %v699
      %v701 = vrot.slane %v554, %v700
      %v702 = vmul.f32 %v610, %v701
      %v703 = vmul.f32 %v606, %v701
      %v704 = vmul.f32 %v611, %v701
      %v708 = vrot.slane %v702, 5
      %v709 = vrot.slane %v703, 5
      %v710 = vsel %vm603, %v708, %v709
      %v711 = vrot.slane %v704, 5
      %v712 = vsel %vm603, %v709, %v711
      %v715 = vadd.f32 %v696, %v710
      %v716 = vadd.f32 %v697, %v712
      %v717 = vlaneseq
      %v718 = vshrl.u32 %v717, 7
      %v719 = vsub.s32 6, %v718
      %v720 = vrot.slane %v554, %v719
      %v721 = vmul.f32 %v610, %v720
      %v722 = vmul.f32 %v606, %v720
      %v723 = vmul.f32 %v611, %v720
      %vm727 = vcmask 1041408
      %v728 = vrot.slane %v721, 6
      %v729 = vrot.slane %v722, 6
      %v730 = vsel %vm727, %v728, %v729
      %v731 = vrot.slane %v723, 6
      %v732 = vsel %vm727, %v729, %v731
      %v735 = vadd.f32 %v715, %v730
      %v736 = vadd.f32 %v716, %v732
      %v737 = vadd.f32 %v552, %v735
      %v738 = vadd.f32 %v553, %v736
      %v740 = vlaneseq
      %v741 = vshrl.u32 %v740, 7
      %v742 = vsub.s32 0, %v741
      %v743 = vrot.slane %v555, %v742
      %v745 = vadd.f32 %v737, %v743
      %v746 = vadd.f32 %v738, %v743
      %v747 = vlaneseq
      %v748 = vshrl.u32 %v747, 7
      %v749 = vadd.s32 %v748, 8
      %v750 = vlaneseq
      %v751 = vand.u32 %v750, 127
      %v752 = vsub.s32 %v751, %v748
      %v753 = vsub.s32 %v751, %v749
      %vm754 = vcmp.lt.s32.totalorder %v752, 0
      %v755 = vsub.s32 0, %v752
      %v756 = vsel %vm754, %v755, %v752
      %vm757 = vcmp.lt.s32.totalorder %v753, 0
      %v758 = vsub.s32 0, %v753
      %v759 = vsel %vm757, %v758, %v753
      %vm760 = vcmp.lt.s32.totalorder %v756, 40
      %v761 = vsel %vm760, %v756, 40
      %vm762 = vcmp.lt.s32.totalorder %v759, 40
      %v763 = vsel %vm762, %v759, 40
      %v764 = vcvt.s32.f32 %v761
      %v765 = vcvt.s32.f32 %v763
      %v766 = vmul.f32 %v764, -0.25
      %v767 = vmul.f32 %v765, -0.25
      %v768 = vmul.f32 %v764, -0.0625
      %v769 = vmul.f32 %v765, -0.0625
      %v770 = vmul.f32 %v764, -0.015625
      %v771 = vmul.f32 %v765, -0.015625
      %v772 = vmul.f32 %v764, -0.00390625
      %v773 = vmul.f32 %v765, -0.00390625
      %vm774 = vcmask 261120
      %v775 = vsel %vm774, %v745, 0.0
      %776 = vadd.xlane.f32.xlu0 %v775
      %v777 = vpop.xlane.xlu0 %776
      %v778 = vsel %vm774, %v746, 0.0
      %779 = vadd.xlane.f32.xlu0 %v778
      %v780 = vpop.xlane.xlu0 %779
      %v781 = vrcp.pop 32.0
      %v782 = vmul.f32 %v777, %v781
      %v783 = vmul.f32 %v780, %v781
      %v784 = vsub.f32 %v745, %v782
      %v785 = vsub.f32 %v746, %v783
      %v786 = vmul.f32 %v784, %v784
      %v787 = vmul.f32 %v785, %v785
      %v788 = vsel %vm774, %v786, 0.0
      %789 = vadd.xlane.f32.xlu0 %v788
      %v790 = vpop.xlane.xlu0 %789
      %v791 = vsel %vm774, %v787, 0.0
      %792 = vadd.xlane.f32.xlu0 %v791
      %v793 = vpop.xlane.xlu0 %792
      %v794 = vmul.f32 %v790, %v781
      %v795 = vmul.f32 %v793, %v781
      %v796 = vadd.f32 %v794, 1e-05
      %v797 = vadd.f32 %v795, 1e-05
      %v798 = vrsqrt.pop %v796
      %v799 = vrsqrt.pop %v797
      %v800 = vmul.f32 %v784, %v798
      %v801 = vmul.f32 %v785, %v799
      %v803 = vlaneseq
      %v804 = vshrl.u32 %v803, 7
      %v805 = vsub.s32 0, %v804
      %v806 = vrot.slane %v556, %v805
      %v808 = vmul.f32 %v800, %v806
      %v809 = vmul.f32 %v801, %v806
      %v811 = vlaneseq
      %v812 = vshrl.u32 %v811, 7
      %v813 = vsub.s32 0, %v812
      %v814 = vrot.slane %v557, %v813
      %v816 = vadd.f32 %v808, %v814
      %v817 = vadd.f32 %v809, %v814
      %v819 = vlaneseq
      %v820 = vshrl.u32 %v819, 7
      %v821 = vsub.s32 0, %v820
      %v822 = vrot.slane %v562, %v821
      %v825 = vsel %vm774, %v816, 0
      %v828 = vsel %vm774, %v817, 0
      %830 = vmatprep.subr.mxu0 0.0
      %831 = vmatpush1.msra.mxu0 %v558
      %832 = vmatprep.subr.mxu0 0.0
      %833 = vmatpush1.msra.mxu0 %v559
      %834 = vmatprep.subr.mxu0 0.0
      %835 = vmatpush1.msra.mxu0 %v560
      %836 = vmatprep.subr.mxu0 0.0
      %837 = vmatpush1.msra.mxu0 %v561
      %838 = vmatprep.subr.mxu0 0.0
      %839 = vmatpush1.msra.mxu0 0.0
      %840 = vmatprep.subr.mxu0 0.0
      %841 = vmatpush1.msra.mxu0 0.0
      %842 = vmatprep.subr.mxu0 0.0
      %843 = vmatpush1.msra.mxu0 0.0
      %844 = vmatprep.subr.mxu0 0.0
      %845 = vmatpush1.msra.mxu0 0.0
      %846 = vmatprep.subr.mxu0 0.0
      %847 = vmatpush1.msra.mxu0 0.0
      %848 = vmatprep.subr.mxu0 0.0
      %849 = vmatpush1.msra.mxu0 0.0
      %850 = vmatprep.subr.mxu0 0.0
      %851 = vmatpush1.msra.mxu0 0.0
      %852 = vmatprep.subr.mxu0 0.0
      %853 = vmatpush1.msra.mxu0 0.0
      %854 = vmatprep.subr.mxu0 0.0
      %855 = vmatpush1.msra.mxu0 0.0
      %856 = vmatprep.subr.mxu0 0.0
      %857 = vmatpush1.msra.mxu0 0.0
      %858 = vmatprep.subr.mxu0 0.0
      %859 = vmatpush1.msra.mxu0 0.0
      %860 = vmatprep.subr.mxu0 0.0
      %861 = vmatpush1.msra.mxu0 0.0
      %862 = vmatprep.subr.mxu0 0.0
      %863 = vmatpush1.msra.mxu0 0.0
      %864 = vmatprep.subr.mxu0 0.0
      %865 = vmatpush1.msra.mxu0 0.0
      %866 = vmatprep.subr.mxu0 0.0
      %867 = vmatpush1.msra.mxu0 0.0
      %868 = vmatprep.subr.mxu0 0.0
      %869 = vmatpush1.msra.mxu0 0.0
      %870 = vmatprep.subr.mxu0 0.0
      %871 = vmatpush1.msra.mxu0 0.0
      %872 = vmatprep.subr.mxu0 0.0
      %873 = vmatpush1.msra.mxu0 0.0
      %874 = vmatprep.subr.mxu0 0.0
      %875 = vmatpush1.msra.mxu0 0.0
      %876 = vmatprep.subr.mxu0 0.0
      %877 = vmatpush1.msra.mxu0 0.0
      %878 = vmatprep.subr.mxu0 0.0
      %879 = vmatpush1.msra.mxu0 0.0
      %880 = vmatprep.subr.mxu0 0.0
      %881 = vmatpush1.msra.mxu0 0.0
      %882 = vmatprep.subr.mxu0 0.0
      %883 = vmatpush1.msra.mxu0 0.0
      %884 = vmatprep.subr.mxu0 0.0
      %885 = vmatpush1.msra.mxu0 0.0
      %886 = vmatprep.subr.mxu0 0.0
      %887 = vmatpush1.msra.mxu0 0.0
      %888 = vmatprep.subr.mxu0 0.0
      %889 = vmatpush1.msra.mxu0 0.0
      %890 = vmatprep.subr.mxu0 0.0
      %891 = vmatpush1.msra.mxu0 0.0
      %892 = vmatprep.subr.mxu0 0.0
      %893 = vmatpush1.msra.mxu0 0.0
      %894 = vmatprep.mubr.f32.mxu0 0.0
      %895 = vmatmul.mubr.f32.gmra.mrb[0].mxu0 %v825
      %v896 = vpop.f32.mrb[0].mxu0
      %v897 = vadd.f32 %v822, %v896
      %v898 = vpop.f32.mrb[0].mxu0
      %899 = vmatprep.mubr.f32.mxu0 0.0
      %900 = vmatmul.mubr.f32.gmra.mrb[0].mxu0 %v828
      %v901 = vpop.f32.mrb[0].mxu0
      %v902 = vadd.f32 %v822, %v901
      %v903 = vpop.f32.mrb[0].mxu0
      %904 = vdwg.mxu0
      %v905 = vxor.u32 %v897, 2147483648
      %v906 = vxor.u32 %v902, 2147483648
      %v907 = vmul.f32 %v905, 1.442695
      %v908 = vpow.pop %v907
      %v909 = vmul.f32 %v906, 1.442695
      %v910 = vpow.pop %v909
      %v911 = vadd.f32 %v908, 1.0
      %v912 = vadd.f32 %v910, 1.0
      %v913 = vrcp.pop %v911
      %v914 = vmul.f32 1.0, %v913
      %v915 = vrcp.pop %v912
      %v916 = vmul.f32 1.0, %v915
      %919 = vrot.lane.b32.xlu0 %v897, 120
      %v920 = vpop.permute.xlu0 %919
      %921 = vrot.lane.b32.xlu0 %v902, 120
      %v922 = vpop.permute.xlu0 %921
      %923 = vrot.lane.b32.xlu0 %v897, 112
      %v924 = vpop.permute.xlu0 %923
      %925 = vrot.lane.b32.xlu0 %v902, 112
      %v926 = vpop.permute.xlu0 %925
      %927 = vrot.lane.b32.xlu0 %v897, 104
      %v928 = vpop.permute.xlu0 %927
      %929 = vrot.lane.b32.xlu0 %v902, 104
      %v930 = vpop.permute.xlu0 %929
      %931 = vrot.lane.b32.xlu0 %v897, 96
      %v932 = vpop.permute.xlu0 %931
      %933 = vrot.lane.b32.xlu0 %v902, 96
      %v934 = vpop.permute.xlu0 %933
      %935 = vrot.lane.b32.xlu0 %v897, 64
      %v936 = vpop.permute.xlu0 %935
      %937 = vrot.lane.b32.xlu0 %v902, 64
      %v938 = vpop.permute.xlu0 %937
      %vm939 = vcmask 64512
      %v940 = vsel %vm939, %v932, 0
      %v942 = vsel %vm939, %v934, 0
      %v944 = vsel %vm939, %v936, 0
      %v946 = vsel %vm939, %v938, 0
      %948 = vmatprep.subr.mxu0 0.0
      %949 = vmatpush1.xpose.msra.mxu0 %v944
      %950 = vmatprep.subr.mxu0 0.0
      %951 = vmatpush1.xpose.msra.mxu0 %v946
      %952 = vmatprep.subr.mxu0 0.0
      %953 = vmatpush1.xpose.msra.mxu0 0.0
      %954 = vmatprep.subr.mxu0 0.0
      %955 = vmatpush1.xpose.msra.mxu0 0.0
      %956 = vmatprep.subr.mxu0 0.0
      %957 = vmatpush1.xpose.msra.mxu0 0.0
      %958 = vmatprep.subr.mxu0 0.0
      %959 = vmatpush1.xpose.msra.mxu0 0.0
      %960 = vmatprep.subr.mxu0 0.0
      %961 = vmatpush1.xpose.msra.mxu0 0.0
      %962 = vmatprep.subr.mxu0 0.0
      %963 = vmatpush1.xpose.msra.mxu0 0.0
      %964 = vmatprep.subr.mxu0 0.0
      %965 = vmatpush1.xpose.msra.mxu0 0.0
      %966 = vmatprep.subr.mxu0 0.0
      %967 = vmatpush1.xpose.msra.mxu0 0.0
      %968 = vmatprep.subr.mxu0 0.0
      %969 = vmatpush1.xpose.msra.mxu0 0.0
      %970 = vmatprep.subr.mxu0 0.0
      %971 = vmatpush1.xpose.msra.mxu0 0.0
      %972 = vmatprep.subr.mxu0 0.0
      %973 = vmatpush1.xpose.msra.mxu0 0.0
      %974 = vmatprep.subr.mxu0 0.0
      %975 = vmatpush1.xpose.msra.mxu0 0.0
      %976 = vmatprep.subr.mxu0 0.0
      %977 = vmatpush1.xpose.msra.mxu0 0.0
      %978 = vmatprep.subr.mxu0 0.0
      %979 = vmatpush1.xpose.msra.mxu0 0.0
      %980 = vmatprep.subr.mxu0 0.0
      %981 = vmatpush1.xpose.msra.mxu0 0.0
      %982 = vmatprep.subr.mxu0 0.0
      %983 = vmatpush1.xpose.msra.mxu0 0.0
      %984 = vmatprep.subr.mxu0 0.0
      %985 = vmatpush1.xpose.msra.mxu0 0.0
      %986 = vmatprep.subr.mxu0 0.0
      %987 = vmatpush1.xpose.msra.mxu0 0.0
      %988 = vmatprep.subr.mxu0 0.0
      %989 = vmatpush1.xpose.msra.mxu0 0.0
      %990 = vmatprep.subr.mxu0 0.0
      %991 = vmatpush1.xpose.msra.mxu0 0.0
      %992 = vmatprep.subr.mxu0 0.0
      %993 = vmatpush1.xpose.msra.mxu0 0.0
      %994 = vmatprep.subr.mxu0 0.0
      %995 = vmatpush1.xpose.msra.mxu0 0.0
      %996 = vmatprep.subr.mxu0 0.0
      %997 = vmatpush1.xpose.msra.mxu0 0.0
      %998 = vmatprep.subr.mxu0 0.0
      %999 = vmatpush1.xpose.msra.mxu0 0.0
      %1000 = vmatprep.subr.mxu0 0.0
      %1001 = vmatpush1.xpose.msra.mxu0 0.0
      %1002 = vmatprep.subr.mxu0 0.0
      %1003 = vmatpush1.xpose.msra.mxu0 0.0
      %1004 = vmatprep.subr.mxu0 0.0
      %1005 = vmatpush1.xpose.msra.mxu0 0.0
      %1006 = vmatprep.subr.mxu0 0.0
      %1007 = vmatpush1.xpose.msra.mxu0 0.0
      %1008 = vmatprep.subr.mxu0 0.0
      %1009 = vmatpush1.xpose.msra.mxu0 0.0
      %1010 = vmatprep.subr.mxu0 0.0
      %1011 = vmatpush1.xpose.msra.mxu0 0.0
      %1012 = vmatprep.mubr.f32.mxu0 0.0
      %1013 = vmatmul.mubr.f32.gmra.mrb[0].mxu0 %v940
      %v1014 = vpop.f32.mrb[0].mxu0
      %v1015 = vadd.f32 %v766, %v1014
      %v1016 = vpop.f32.mrb[0].mxu0
      %1017 = vmatprep.mubr.f32.mxu0 0.0
      %1018 = vmatmul.mubr.f32.gmra.mrb[0].mxu0 %v942
      %v1019 = vpop.f32.mrb[0].mxu0
      %v1020 = vadd.f32 %v767, %v1019
      %v1021 = vpop.f32.mrb[0].mxu0
      %1022 = vdwg.mxu0
      %1023 = vrot.lane.b32.xlu0 %v920, 96
      %v1024 = vpop.permute.xlu0 %1023
      %1025 = vrot.lane.b32.xlu0 %v922, 96
      %v1026 = vpop.permute.xlu0 %1025
      %1027 = vrot.lane.b32.xlu0 %v920, 64
      %v1028 = vpop.permute.xlu0 %1027
      %1029 = vrot.lane.b32.xlu0 %v922, 64
      %v1030 = vpop.permute.xlu0 %1029
      %v1031 = vsel %vm939, %v1024, 0
      %v1033 = vsel %vm939, %v1026, 0
      %v1035 = vsel %vm939, %v1028, 0
      %v1037 = vsel %vm939, %v1030, 0
      %1039 = vmatprep.subr.mxu0 0.0
      %1040 = vmatpush1.xpose.msra.mxu0 %v1035
      %1041 = vmatprep.subr.mxu0 0.0
      %1042 = vmatpush1.xpose.msra.mxu0 %v1037
      %1043 = vmatprep.subr.mxu0 0.0
      %1044 = vmatpush1.xpose.msra.mxu0 0.0
      %1045 = vmatprep.subr.mxu0 0.0
      %1046 = vmatpush1.xpose.msra.mxu0 0.0
      %1047 = vmatprep.subr.mxu0 0.0
      %1048 = vmatpush1.xpose.msra.mxu0 0.0
      %1049 = vmatprep.subr.mxu0 0.0
      %1050 = vmatpush1.xpose.msra.mxu0 0.0
      %1051 = vmatprep.subr.mxu0 0.0
      %1052 = vmatpush1.xpose.msra.mxu0 0.0
      %1053 = vmatprep.subr.mxu0 0.0
      %1054 = vmatpush1.xpose.msra.mxu0 0.0
      %1055 = vmatprep.subr.mxu0 0.0
      %1056 = vmatpush1.xpose.msra.mxu0 0.0
      %1057 = vmatprep.subr.mxu0 0.0
      %1058 = vmatpush1.xpose.msra.mxu0 0.0
      %1059 = vmatprep.subr.mxu0 0.0
      %1060 = vmatpush1.xpose.msra.mxu0 0.0
      %1061 = vmatprep.subr.mxu0 0.0
      %1062 = vmatpush1.xpose.msra.mxu0 0.0
      %1063 = vmatprep.subr.mxu0 0.0
      %1064 = vmatpush1.xpose.msra.mxu0 0.0
      %1065 = vmatprep.subr.mxu0 0.0
      %1066 = vmatpush1.xpose.msra.mxu0 0.0
      %1067 = vmatprep.subr.mxu0 0.0
      %1068 = vmatpush1.xpose.msra.mxu0 0.0
      %1069 = vmatprep.subr.mxu0 0.0
      %1070 = vmatpush1.xpose.msra.mxu0 0.0
      %1071 = vmatprep.subr.mxu0 0.0
      %1072 = vmatpush1.xpose.msra.mxu0 0.0
      %1073 = vmatprep.subr.mxu0 0.0
      %1074 = vmatpush1.xpose.msra.mxu0 0.0
      %1075 = vmatprep.subr.mxu0 0.0
      %1076 = vmatpush1.xpose.msra.mxu0 0.0
      %1077 = vmatprep.subr.mxu0 0.0
      %1078 = vmatpush1.xpose.msra.mxu0 0.0
      %1079 = vmatprep.subr.mxu0 0.0
      %1080 = vmatpush1.xpose.msra.mxu0 0.0
      %1081 = vmatprep.subr.mxu0 0.0
      %1082 = vmatpush1.xpose.msra.mxu0 0.0
      %1083 = vmatprep.subr.mxu0 0.0
      %1084 = vmatpush1.xpose.msra.mxu0 0.0
      %1085 = vmatprep.subr.mxu0 0.0
      %1086 = vmatpush1.xpose.msra.mxu0 0.0
      %1087 = vmatprep.subr.mxu0 0.0
      %1088 = vmatpush1.xpose.msra.mxu0 0.0
      %1089 = vmatprep.subr.mxu0 0.0
      %1090 = vmatpush1.xpose.msra.mxu0 0.0
      %1091 = vmatprep.subr.mxu0 0.0
      %1092 = vmatpush1.xpose.msra.mxu0 0.0
      %1093 = vmatprep.subr.mxu0 0.0
      %1094 = vmatpush1.xpose.msra.mxu0 0.0
      %1095 = vmatprep.subr.mxu0 0.0
      %1096 = vmatpush1.xpose.msra.mxu0 0.0
      %1097 = vmatprep.subr.mxu0 0.0
      %1098 = vmatpush1.xpose.msra.mxu0 0.0
      %1099 = vmatprep.subr.mxu0 0.0
      %1100 = vmatpush1.xpose.msra.mxu0 0.0
      %1101 = vmatprep.subr.mxu0 0.0
      %1102 = vmatpush1.xpose.msra.mxu0 0.0
      %1103 = vmatprep.mubr.f32.mxu0 0.0
      %1104 = vmatmul.mubr.f32.gmra.mrb[0].mxu0 %v1031
      %v1105 = vpop.f32.mrb[0].mxu0
      %v1106 = vadd.f32 %v768, %v1105
      %v1107 = vpop.f32.mrb[0].mxu0
      %1108 = vmatprep.mubr.f32.mxu0 0.0
      %1109 = vmatmul.mubr.f32.gmra.mrb[0].mxu0 %v1033
      %v1110 = vpop.f32.mrb[0].mxu0
      %v1111 = vadd.f32 %v769, %v1110
      %v1112 = vpop.f32.mrb[0].mxu0
      %1113 = vdwg.mxu0
      %1114 = vrot.lane.b32.xlu0 %v924, 96
      %v1115 = vpop.permute.xlu0 %1114
      %1116 = vrot.lane.b32.xlu0 %v926, 96
      %v1117 = vpop.permute.xlu0 %1116
      %1118 = vrot.lane.b32.xlu0 %v924, 64
      %v1119 = vpop.permute.xlu0 %1118
      %1120 = vrot.lane.b32.xlu0 %v926, 64
      %v1121 = vpop.permute.xlu0 %1120
      %v1122 = vsel %vm939, %v1115, 0
      %v1124 = vsel %vm939, %v1117, 0
      %v1126 = vsel %vm939, %v1119, 0
      %v1128 = vsel %vm939, %v1121, 0
      %1130 = vmatprep.subr.mxu0 0.0
      %1131 = vmatpush1.xpose.msra.mxu0 %v1126
      %1132 = vmatprep.subr.mxu0 0.0
      %1133 = vmatpush1.xpose.msra.mxu0 %v1128
      %1134 = vmatprep.subr.mxu0 0.0
      %1135 = vmatpush1.xpose.msra.mxu0 0.0
      %1136 = vmatprep.subr.mxu0 0.0
      %1137 = vmatpush1.xpose.msra.mxu0 0.0
      %1138 = vmatprep.subr.mxu0 0.0
      %1139 = vmatpush1.xpose.msra.mxu0 0.0
      %1140 = vmatprep.subr.mxu0 0.0
      %1141 = vmatpush1.xpose.msra.mxu0 0.0
      %1142 = vmatprep.subr.mxu0 0.0
      %1143 = vmatpush1.xpose.msra.mxu0 0.0
      %1144 = vmatprep.subr.mxu0 0.0
      %1145 = vmatpush1.xpose.msra.mxu0 0.0
      %1146 = vmatprep.subr.mxu0 0.0
      %1147 = vmatpush1.xpose.msra.mxu0 0.0
      %1148 = vmatprep.subr.mxu0 0.0
      %1149 = vmatpush1.xpose.msra.mxu0 0.0
      %1150 = vmatprep.subr.mxu0 0.0
      %1151 = vmatpush1.xpose.msra.mxu0 0.0
      %1152 = vmatprep.subr.mxu0 0.0
      %1153 = vmatpush1.xpose.msra.mxu0 0.0
      %1154 = vmatprep.subr.mxu0 0.0
      %1155 = vmatpush1.xpose.msra.mxu0 0.0
      %1156 = vmatprep.subr.mxu0 0.0
      %1157 = vmatpush1.xpose.msra.mxu0 0.0
      %1158 = vmatprep.subr.mxu0 0.0
      %1159 = vmatpush1.xpose.msra.mxu0 0.0
      %1160 = vmatprep.subr.mxu0 0.0
      %1161 = vmatpush1.xpose.msra.mxu0 0.0
      %1162 = vmatprep.subr.mxu0 0.0
      %1163 = vmatpush1.xpose.msra.mxu0 0.0
      %1164 = vmatprep.subr.mxu0 0.0
      %1165 = vmatpush1.xpose.msra.mxu0 0.0
      %1166 = vmatprep.subr.mxu0 0.0
      %1167 = vmatpush1.xpose.msra.mxu0 0.0
      %1168 = vmatprep.subr.mxu0 0.0
      %1169 = vmatpush1.xpose.msra.mxu0 0.0
      %1170 = vmatprep.subr.mxu0 0.0
      %1171 = vmatpush1.xpose.msra.mxu0 0.0
      %1172 = vmatprep.subr.mxu0 0.0
      %1173 = vmatpush1.xpose.msra.mxu0 0.0
      %1174 = vmatprep.subr.mxu0 0.0
      %1175 = vmatpush1.xpose.msra.mxu0 0.0
      %1176 = vmatprep.subr.mxu0 0.0
      %1177 = vmatpush1.xpose.msra.mxu0 0.0
      %1178 = vmatprep.subr.mxu0 0.0
      %1179 = vmatpush1.xpose.msra.mxu0 0.0
      %1180 = vmatprep.subr.mxu0 0.0
      %1181 = vmatpush1.xpose.msra.mxu0 0.0
      %1182 = vmatprep.subr.mxu0 0.0
      %1183 = vmatpush1.xpose.msra.mxu0 0.0
      %1184 = vmatprep.subr.mxu0 0.0
      %1185 = vmatpush1.xpose.msra.mxu0 0.0
      %1186 = vmatprep.subr.mxu0 0.0
      %1187 = vmatpush1.xpose.msra.mxu0 0.0
      %1188 = vmatprep.subr.mxu0 0.0
      %1189 = vmatpush1.xpose.msra.mxu0 0.0
      %1190 = vmatprep.subr.mxu0 0.0
      %1191 = vmatpush1.xpose.msra.mxu0 0.0
      %1192 = vmatprep.subr.mxu0 0.0
      %1193 = vmatpush1.xpose.msra.mxu0 0.0
      %1194 = vmatprep.mubr.f32.mxu0 0.0
      %1195 = vmatmul.mubr.f32.gmra.mrb[0].mxu0 %v1122
      %v1196 = vpop.f32.mrb[0].mxu0
      %v1197 = vadd.f32 %v770, %v1196
      %v1198 = vpop.f32.mrb[0].mxu0
      %1199 = vmatprep.mubr.f32.mxu0 0.0
      %1200 = vmatmul.mubr.f32.gmra.mrb[0].mxu0 %v1124
      %v1201 = vpop.f32.mrb[0].mxu0
      %v1202 = vadd.f32 %v771, %v1201
      %v1203 = vpop.f32.mrb[0].mxu0
      %1204 = vdwg.mxu0
      %1205 = vrot.lane.b32.xlu0 %v928, 96
      %v1206 = vpop.permute.xlu0 %1205
      %1207 = vrot.lane.b32.xlu0 %v930, 96
      %v1208 = vpop.permute.xlu0 %1207
      %1209 = vrot.lane.b32.xlu0 %v928, 64
      %v1210 = vpop.permute.xlu0 %1209
      %1211 = vrot.lane.b32.xlu0 %v930, 64
      %v1212 = vpop.permute.xlu0 %1211
      %v1213 = vsel %vm939, %v1206, 0
      %v1215 = vsel %vm939, %v1208, 0
      %v1217 = vsel %vm939, %v1210, 0
      %v1219 = vsel %vm939, %v1212, 0
      %1221 = vmatprep.subr.mxu0 0.0
      %1222 = vmatpush1.xpose.msra.mxu0 %v1217
      %1223 = vmatprep.subr.mxu0 0.0
      %1224 = vmatpush1.xpose.msra.mxu0 %v1219
      %1225 = vmatprep.subr.mxu0 0.0
      %1226 = vmatpush1.xpose.msra.mxu0 0.0
      %1227 = vmatprep.subr.mxu0 0.0
      %1228 = vmatpush1.xpose.msra.mxu0 0.0
      %1229 = vmatprep.subr.mxu0 0.0
      %1230 = vmatpush1.xpose.msra.mxu0 0.0
      %1231 = vmatprep.subr.mxu0 0.0
      %1232 = vmatpush1.xpose.msra.mxu0 0.0
      %1233 = vmatprep.subr.mxu0 0.0
      %1234 = vmatpush1.xpose.msra.mxu0 0.0
      %1235 = vmatprep.subr.mxu0 0.0
      %1236 = vmatpush1.xpose.msra.mxu0 0.0
      %1237 = vmatprep.subr.mxu0 0.0
      %1238 = vmatpush1.xpose.msra.mxu0 0.0
      %1239 = vmatprep.subr.mxu0 0.0
      %1240 = vmatpush1.xpose.msra.mxu0 0.0
      %1241 = vmatprep.subr.mxu0 0.0
      %1242 = vmatpush1.xpose.msra.mxu0 0.0
      %1243 = vmatprep.subr.mxu0 0.0
      %1244 = vmatpush1.xpose.msra.mxu0 0.0
      %1245 = vmatprep.subr.mxu0 0.0
      %1246 = vmatpush1.xpose.msra.mxu0 0.0
      %1247 = vmatprep.subr.mxu0 0.0
      %1248 = vmatpush1.xpose.msra.mxu0 0.0
      %1249 = vmatprep.subr.mxu0 0.0
      %1250 = vmatpush1.xpose.msra.mxu0 0.0
      %1251 = vmatprep.subr.mxu0 0.0
      %1252 = vmatpush1.xpose.msra.mxu0 0.0
      %1253 = vmatprep.subr.mxu0 0.0
      %1254 = vmatpush1.xpose.msra.mxu0 0.0
      %1255 = vmatprep.subr.mxu0 0.0
      %1256 = vmatpush1.xpose.msra.mxu0 0.0
      %1257 = vmatprep.subr.mxu0 0.0
      %1258 = vmatpush1.xpose.msra.mxu0 0.0
      %1259 = vmatprep.subr.mxu0 0.0
      %1260 = vmatpush1.xpose.msra.mxu0 0.0
      %1261 = vmatprep.subr.mxu0 0.0
      %1262 = vmatpush1.xpose.msra.mxu0 0.0
      %1263 = vmatprep.subr.mxu0 0.0
      %1264 = vmatpush1.xpose.msra.mxu0 0.0
      %1265 = vmatprep.subr.mxu0 0.0
      %1266 = vmatpush1.xpose.msra.mxu0 0.0
      %1267 = vmatprep.subr.mxu0 0.0
      %1268 = vmatpush1.xpose.msra.mxu0 0.0
      %1269 = vmatprep.subr.mxu0 0.0
      %1270 = vmatpush1.xpose.msra.mxu0 0.0
      %1271 = vmatprep.subr.mxu0 0.0
      %1272 = vmatpush1.xpose.msra.mxu0 0.0
      %1273 = vmatprep.subr.mxu0 0.0
      %1274 = vmatpush1.xpose.msra.mxu0 0.0
      %1275 = vmatprep.subr.mxu0 0.0
      %1276 = vmatpush1.xpose.msra.mxu0 0.0
      %1277 = vmatprep.subr.mxu0 0.0
      %1278 = vmatpush1.xpose.msra.mxu0 0.0
      %1279 = vmatprep.subr.mxu0 0.0
      %1280 = vmatpush1.xpose.msra.mxu0 0.0
      %1281 = vmatprep.subr.mxu0 0.0
      %1282 = vmatpush1.xpose.msra.mxu0 0.0
      %1283 = vmatprep.subr.mxu0 0.0
      %1284 = vmatpush1.xpose.msra.mxu0 0.0
      %1285 = vmatprep.mubr.f32.mxu0 0.0
      %1286 = vmatmul.mubr.f32.gmra.mrb[0].mxu0 %v1213
      %v1287 = vpop.f32.mrb[0].mxu0
      %v1288 = vadd.f32 %v772, %v1287
      %v1289 = vpop.f32.mrb[0].mxu0
      %1290 = vmatprep.mubr.f32.mxu0 0.0
      %1291 = vmatmul.mubr.f32.gmra.mrb[0].mxu0 %v1215
      %v1292 = vpop.f32.mrb[0].mxu0
      %v1293 = vadd.f32 %v773, %v1292
      %v1294 = vpop.f32.mrb[0].mxu0
      %1295 = vdwg.mxu0
      %vm1296 = vcmask 130048
      %v1297 = vsel %vm1296, %v1015, -inf
      %1298 = vmax.xlane.f32.xlu0 %v1297
      %v1299 = vpop.xlane.xlu0 %1298
      %v1300 = vsel %vm1296, %v1020, -inf
      %1301 = vmax.xlane.f32.xlu0 %v1300
      %v1302 = vpop.xlane.xlu0 %1301
      %v1303 = vsel %vm1296, %v1106, -inf
      %1304 = vmax.xlane.f32.xlu0 %v1303
      %v1305 = vpop.xlane.xlu0 %1304
      %v1306 = vsel %vm1296, %v1111, -inf
      %1307 = vmax.xlane.f32.xlu0 %v1306
      %v1308 = vpop.xlane.xlu0 %1307
      %v1309 = vsel %vm1296, %v1197, -inf
      %1310 = vmax.xlane.f32.xlu0 %v1309
      %v1311 = vpop.xlane.xlu0 %1310
      %v1312 = vsel %vm1296, %v1202, -inf
      %1313 = vmax.xlane.f32.xlu0 %v1312
      %v1314 = vpop.xlane.xlu0 %1313
      %v1315 = vsel %vm1296, %v1288, -inf
      %1316 = vmax.xlane.f32.xlu0 %v1315
      %v1317 = vpop.xlane.xlu0 %1316
      %v1318 = vsel %vm1296, %v1293, -inf
      %1319 = vmax.xlane.f32.xlu0 %v1318
      %v1320 = vpop.xlane.xlu0 %1319
      %v1321 = vsub.f32 %v1015, %v1299
      %v1322 = vsub.f32 %v1020, %v1302
      %v1323 = vsub.f32 %v1106, %v1305
      %v1324 = vsub.f32 %v1111, %v1308
      %v1325 = vsub.f32 %v1197, %v1311
      %v1326 = vsub.f32 %v1202, %v1314
      %v1327 = vsub.f32 %v1288, %v1317
      %v1328 = vsub.f32 %v1293, %v1320
      %v1329 = vmul.f32 %v1321, 1.442695
      %v1330 = vpow.pop %v1329
      %v1331 = vmul.f32 %v1322, 1.442695
      %v1332 = vpow.pop %v1331
      %v1333 = vmul.f32 %v1323, 1.442695
      %v1334 = vpow.pop %v1333
      %v1335 = vmul.f32 %v1324, 1.442695
      %v1336 = vpow.pop %v1335
      %v1337 = vmul.f32 %v1325, 1.442695
      %v1338 = vpow.pop %v1337
      %v1339 = vmul.f32 %v1326, 1.442695
      %v1340 = vpow.pop %v1339
      %v1341 = vmul.f32 %v1327, 1.442695
      %v1342 = vpow.pop %v1341
      %v1343 = vmul.f32 %v1328, 1.442695
      %v1344 = vpow.pop %v1343
      %v1345 = vsel %vm1296, %v1330, 0.0
      %1346 = vadd.xlane.f32.xlu0 %v1345
      %v1347 = vpop.xlane.xlu0 %1346
      %v1348 = vsel %vm1296, %v1332, 0.0
      %1349 = vadd.xlane.f32.xlu0 %v1348
      %v1350 = vpop.xlane.xlu0 %1349
      %v1351 = vsel %vm1296, %v1334, 0.0
      %1352 = vadd.xlane.f32.xlu0 %v1351
      %v1353 = vpop.xlane.xlu0 %1352
      %v1354 = vsel %vm1296, %v1336, 0.0
      %1355 = vadd.xlane.f32.xlu0 %v1354
      %v1356 = vpop.xlane.xlu0 %1355
      %v1357 = vsel %vm1296, %v1338, 0.0
      %1358 = vadd.xlane.f32.xlu0 %v1357
      %v1359 = vpop.xlane.xlu0 %1358
      %v1360 = vsel %vm1296, %v1340, 0.0
      %1361 = vadd.xlane.f32.xlu0 %v1360
      %v1362 = vpop.xlane.xlu0 %1361
      %v1363 = vsel %vm1296, %v1342, 0.0
      %1364 = vadd.xlane.f32.xlu0 %v1363
      %v1365 = vpop.xlane.xlu0 %1364
      %v1366 = vsel %vm1296, %v1344, 0.0
      %1367 = vadd.xlane.f32.xlu0 %v1366
      %v1368 = vpop.xlane.xlu0 %1367
      %v1369 = vrcp.pop %v1347
      %v1370 = vmul.f32 %v1330, %v1369
      %v1371 = vrcp.pop %v1350
      %v1372 = vmul.f32 %v1332, %v1371
      %v1373 = vrcp.pop %v1353
      %v1374 = vmul.f32 %v1334, %v1373
      %v1375 = vrcp.pop %v1356
      %v1376 = vmul.f32 %v1336, %v1375
      %v1377 = vrcp.pop %v1359
      %v1378 = vmul.f32 %v1338, %v1377
      %v1379 = vrcp.pop %v1362
      %v1380 = vmul.f32 %v1340, %v1379
      %v1381 = vrcp.pop %v1365
      %v1382 = vmul.f32 %v1342, %v1381
      %v1383 = vrcp.pop %v1368
      %v1384 = vmul.f32 %v1344, %v1383
      %1385 = vrot.lane.b32.xlu0 %v897, 32
      %v1386 = vpop.permute.xlu0 %1385
      %1387 = vrot.lane.b32.xlu0 %v902, 32
      %v1388 = vpop.permute.xlu0 %1387
      %v1392 = vsel %vm1296, %v1370, 0
      %v1395 = vsel %vm1296, %v1372, 0
      %1397 = vmatprep.subr.mxu0 0.0
      %1398 = vmatpush1.msra.mxu0 %v1386
      %1399 = vmatprep.subr.mxu0 0.0
      %1400 = vmatpush1.msra.mxu0 %v1388
      %1401 = vmatprep.subr.mxu0 0.0
      %1402 = vmatpush1.msra.mxu0 0.0
      %1403 = vmatprep.subr.mxu0 0.0
      %1404 = vmatpush1.msra.mxu0 0.0
      %1405 = vmatprep.subr.mxu0 0.0
      %1406 = vmatpush1.msra.mxu0 0.0
      %1407 = vmatprep.subr.mxu0 0.0
      %1408 = vmatpush1.msra.mxu0 0.0
      %1409 = vmatprep.subr.mxu0 0.0
      %1410 = vmatpush1.msra.mxu0 0.0
      %1411 = vmatprep.subr.mxu0 0.0
      %1412 = vmatpush1.msra.mxu0 0.0
      %1413 = vmatprep.subr.mxu0 0.0
      %1414 = vmatpush1.msra.mxu0 0.0
      %1415 = vmatprep.subr.mxu0 0.0
      %1416 = vmatpush1.msra.mxu0 0.0
      %1417 = vmatprep.subr.mxu0 0.0
      %1418 = vmatpush1.msra.mxu0 0.0
      %1419 = vmatprep.subr.mxu0 0.0
      %1420 = vmatpush1.msra.mxu0 0.0
      %1421 = vmatprep.subr.mxu0 0.0
      %1422 = vmatpush1.msra.mxu0 0.0
      %1423 = vmatprep.subr.mxu0 0.0
      %1424 = vmatpush1.msra.mxu0 0.0
      %1425 = vmatprep.subr.mxu0 0.0
      %1426 = vmatpush1.msra.mxu0 0.0
      %1427 = vmatprep.subr.mxu0 0.0
      %1428 = vmatpush1.msra.mxu0 0.0
      %1429 = vmatprep.subr.mxu0 0.0
      %1430 = vmatpush1.msra.mxu0 0.0
      %1431 = vmatprep.subr.mxu0 0.0
      %1432 = vmatpush1.msra.mxu0 0.0
      %1433 = vmatprep.subr.mxu0 0.0
      %1434 = vmatpush1.msra.mxu0 0.0
      %1435 = vmatprep.subr.mxu0 0.0
      %1436 = vmatpush1.msra.mxu0 0.0
      %1437 = vmatprep.subr.mxu0 0.0
      %1438 = vmatpush1.msra.mxu0 0.0
      %1439 = vmatprep.subr.mxu0 0.0
      %1440 = vmatpush1.msra.mxu0 0.0
      %1441 = vmatprep.subr.mxu0 0.0
      %1442 = vmatpush1.msra.mxu0 0.0
      %1443 = vmatprep.subr.mxu0 0.0
      %1444 = vmatpush1.msra.mxu0 0.0
      %1445 = vmatprep.subr.mxu0 0.0
      %1446 = vmatpush1.msra.mxu0 0.0
      %1447 = vmatprep.subr.mxu0 0.0
      %1448 = vmatpush1.msra.mxu0 0.0
      %1449 = vmatprep.subr.mxu0 0.0
      %1450 = vmatpush1.msra.mxu0 0.0
      %1451 = vmatprep.subr.mxu0 0.0
      %1452 = vmatpush1.msra.mxu0 0.0
      %1453 = vmatprep.subr.mxu0 0.0
      %1454 = vmatpush1.msra.mxu0 0.0
      %1455 = vmatprep.subr.mxu0 0.0
      %1456 = vmatpush1.msra.mxu0 0.0
      %1457 = vmatprep.subr.mxu0 0.0
      %1458 = vmatpush1.msra.mxu0 0.0
      %1459 = vmatprep.subr.mxu0 0.0
      %1460 = vmatpush1.msra.mxu0 0.0
      %1461 = vmatprep.mubr.f32.mxu0 0.0
      %1462 = vmatmul.mubr.f32.gmra.mrb[0].mxu0 %v1392
      %v1463 = vpop.f32.mrb[0].mxu0
      %v1464 = vadd.f32 0.0, %v1463
      %v1465 = vpop.f32.mrb[0].mxu0
      %1466 = vmatprep.mubr.f32.mxu0 0.0
      %1467 = vmatmul.mubr.f32.gmra.mrb[0].mxu0 %v1395
      %v1468 = vpop.f32.mrb[0].mxu0
      %v1469 = vadd.f32 0.0, %v1468
      %v1470 = vpop.f32.mrb[0].mxu0
      %1471 = vdwg.mxu0
      %1472 = vrot.lane.b32.xlu0 %v920, 32
      %v1473 = vpop.permute.xlu0 %1472
      %1474 = vrot.lane.b32.xlu0 %v922, 32
      %v1475 = vpop.permute.xlu0 %1474
      %v1479 = vsel %vm1296, %v1374, 0
      %v1482 = vsel %vm1296, %v1376, 0
      %1484 = vmatprep.subr.mxu0 0.0
      %1485 = vmatpush1.msra.mxu0 %v1473
      %1486 = vmatprep.subr.mxu0 0.0
      %1487 = vmatpush1.msra.mxu0 %v1475
      %1488 = vmatprep.subr.mxu0 0.0
      %1489 = vmatpush1.msra.mxu0 0.0
      %1490 = vmatprep.subr.mxu0 0.0
      %1491 = vmatpush1.msra.mxu0 0.0
      %1492 = vmatprep.subr.mxu0 0.0
      %1493 = vmatpush1.msra.mxu0 0.0
      %1494 = vmatprep.subr.mxu0 0.0
      %1495 = vmatpush1.msra.mxu0 0.0
      %1496 = vmatprep.subr.mxu0 0.0
      %1497 = vmatpush1.msra.mxu0 0.0
      %1498 = vmatprep.subr.mxu0 0.0
      %1499 = vmatpush1.msra.mxu0 0.0
      %1500 = vmatprep.subr.mxu0 0.0
      %1501 = vmatpush1.msra.mxu0 0.0
      %1502 = vmatprep.subr.mxu0 0.0
      %1503 = vmatpush1.msra.mxu0 0.0
      %1504 = vmatprep.subr.mxu0 0.0
      %1505 = vmatpush1.msra.mxu0 0.0
      %1506 = vmatprep.subr.mxu0 0.0
      %1507 = vmatpush1.msra.mxu0 0.0
      %1508 = vmatprep.subr.mxu0 0.0
      %1509 = vmatpush1.msra.mxu0 0.0
      %1510 = vmatprep.subr.mxu0 0.0
      %1511 = vmatpush1.msra.mxu0 0.0
      %1512 = vmatprep.subr.mxu0 0.0
      %1513 = vmatpush1.msra.mxu0 0.0
      %1514 = vmatprep.subr.mxu0 0.0
      %1515 = vmatpush1.msra.mxu0 0.0
      %1516 = vmatprep.subr.mxu0 0.0
      %1517 = vmatpush1.msra.mxu0 0.0
      %1518 = vmatprep.subr.mxu0 0.0
      %1519 = vmatpush1.msra.mxu0 0.0
      %1520 = vmatprep.subr.mxu0 0.0
      %1521 = vmatpush1.msra.mxu0 0.0
      %1522 = vmatprep.subr.mxu0 0.0
      %1523 = vmatpush1.msra.mxu0 0.0
      %1524 = vmatprep.subr.mxu0 0.0
      %1525 = vmatpush1.msra.mxu0 0.0
      %1526 = vmatprep.subr.mxu0 0.0
      %1527 = vmatpush1.msra.mxu0 0.0
      %1528 = vmatprep.subr.mxu0 0.0
      %1529 = vmatpush1.msra.mxu0 0.0
      %1530 = vmatprep.subr.mxu0 0.0
      %1531 = vmatpush1.msra.mxu0 0.0
      %1532 = vmatprep.subr.mxu0 0.0
      %1533 = vmatpush1.msra.mxu0 0.0
      %1534 = vmatprep.subr.mxu0 0.0
      %1535 = vmatpush1.msra.mxu0 0.0
      %1536 = vmatprep.subr.mxu0 0.0
      %1537 = vmatpush1.msra.mxu0 0.0
      %1538 = vmatprep.subr.mxu0 0.0
      %1539 = vmatpush1.msra.mxu0 0.0
      %1540 = vmatprep.subr.mxu0 0.0
      %1541 = vmatpush1.msra.mxu0 0.0
      %1542 = vmatprep.subr.mxu0 0.0
      %1543 = vmatpush1.msra.mxu0 0.0
      %1544 = vmatprep.subr.mxu0 0.0
      %1545 = vmatpush1.msra.mxu0 0.0
      %1546 = vmatprep.subr.mxu0 0.0
      %1547 = vmatpush1.msra.mxu0 0.0
      %1548 = vmatprep.mubr.f32.mxu0 0.0
      %1549 = vmatmul.mubr.f32.gmra.mrb[0].mxu0 %v1479
      %v1550 = vpop.f32.mrb[0].mxu0
      %v1551 = vadd.f32 0.0, %v1550
      %v1552 = vpop.f32.mrb[0].mxu0
      %1553 = vmatprep.mubr.f32.mxu0 0.0
      %1554 = vmatmul.mubr.f32.gmra.mrb[0].mxu0 %v1482
      %v1555 = vpop.f32.mrb[0].mxu0
      %v1556 = vadd.f32 0.0, %v1555
      %v1557 = vpop.f32.mrb[0].mxu0
      %1558 = vdwg.mxu0
      %1559 = vrot.lane.b32.xlu0 %v924, 32
      %v1560 = vpop.permute.xlu0 %1559
      %1561 = vrot.lane.b32.xlu0 %v926, 32
      %v1562 = vpop.permute.xlu0 %1561
      %v1566 = vsel %vm1296, %v1378, 0
      %v1569 = vsel %vm1296, %v1380, 0
      %1571 = vmatprep.subr.mxu0 0.0
      %1572 = vmatpush1.msra.mxu0 %v1560
      %1573 = vmatprep.subr.mxu0 0.0
      %1574 = vmatpush1.msra.mxu0 %v1562
      %1575 = vmatprep.subr.mxu0 0.0
      %1576 = vmatpush1.msra.mxu0 0.0
      %1577 = vmatprep.subr.mxu0 0.0
      %1578 = vmatpush1.msra.mxu0 0.0
      %1579 = vmatprep.subr.mxu0 0.0
      %1580 = vmatpush1.msra.mxu0 0.0
      %1581 = vmatprep.subr.mxu0 0.0
      %1582 = vmatpush1.msra.mxu0 0.0
      %1583 = vmatprep.subr.mxu0 0.0
      %1584 = vmatpush1.msra.mxu0 0.0
      %1585 = vmatprep.subr.mxu0 0.0
      %1586 = vmatpush1.msra.mxu0 0.0
      %1587 = vmatprep.subr.mxu0 0.0
      %1588 = vmatpush1.msra.mxu0 0.0
      %1589 = vmatprep.subr.mxu0 0.0
      %1590 = vmatpush1.msra.mxu0 0.0
      %1591 = vmatprep.subr.mxu0 0.0
      %1592 = vmatpush1.msra.mxu0 0.0
      %1593 = vmatprep.subr.mxu0 0.0
      %1594 = vmatpush1.msra.mxu0 0.0
      %1595 = vmatprep.subr.mxu0 0.0
      %1596 = vmatpush1.msra.mxu0 0.0
      %1597 = vmatprep.subr.mxu0 0.0
      %1598 = vmatpush1.msra.mxu0 0.0
      %1599 = vmatprep.subr.mxu0 0.0
      %1600 = vmatpush1.msra.mxu0 0.0
      %1601 = vmatprep.subr.mxu0 0.0
      %1602 = vmatpush1.msra.mxu0 0.0
      %1603 = vmatprep.subr.mxu0 0.0
      %1604 = vmatpush1.msra.mxu0 0.0
      %1605 = vmatprep.subr.mxu0 0.0
      %1606 = vmatpush1.msra.mxu0 0.0
      %1607 = vmatprep.subr.mxu0 0.0
      %1608 = vmatpush1.msra.mxu0 0.0
      %1609 = vmatprep.subr.mxu0 0.0
      %1610 = vmatpush1.msra.mxu0 0.0
      %1611 = vmatprep.subr.mxu0 0.0
      %1612 = vmatpush1.msra.mxu0 0.0
      %1613 = vmatprep.subr.mxu0 0.0
      %1614 = vmatpush1.msra.mxu0 0.0
      %1615 = vmatprep.subr.mxu0 0.0
      %1616 = vmatpush1.msra.mxu0 0.0
      %1617 = vmatprep.subr.mxu0 0.0
      %1618 = vmatpush1.msra.mxu0 0.0
      %1619 = vmatprep.subr.mxu0 0.0
      %1620 = vmatpush1.msra.mxu0 0.0
      %1621 = vmatprep.subr.mxu0 0.0
      %1622 = vmatpush1.msra.mxu0 0.0
      %1623 = vmatprep.subr.mxu0 0.0
      %1624 = vmatpush1.msra.mxu0 0.0
      %1625 = vmatprep.subr.mxu0 0.0
      %1626 = vmatpush1.msra.mxu0 0.0
      %1627 = vmatprep.subr.mxu0 0.0
      %1628 = vmatpush1.msra.mxu0 0.0
      %1629 = vmatprep.subr.mxu0 0.0
      %1630 = vmatpush1.msra.mxu0 0.0
      %1631 = vmatprep.subr.mxu0 0.0
      %1632 = vmatpush1.msra.mxu0 0.0
      %1633 = vmatprep.subr.mxu0 0.0
      %1634 = vmatpush1.msra.mxu0 0.0
      %1635 = vmatprep.mubr.f32.mxu0 0.0
      %1636 = vmatmul.mubr.f32.gmra.mrb[0].mxu0 %v1566
      %v1637 = vpop.f32.mrb[0].mxu0
      %v1638 = vadd.f32 0.0, %v1637
      %v1639 = vpop.f32.mrb[0].mxu0
      %1640 = vmatprep.mubr.f32.mxu0 0.0
      %1641 = vmatmul.mubr.f32.gmra.mrb[0].mxu0 %v1569
      %v1642 = vpop.f32.mrb[0].mxu0
      %v1643 = vadd.f32 0.0, %v1642
      %v1644 = vpop.f32.mrb[0].mxu0
      %1645 = vdwg.mxu0
      %1646 = vrot.lane.b32.xlu0 %v928, 32
      %v1647 = vpop.permute.xlu0 %1646
      %1648 = vrot.lane.b32.xlu0 %v930, 32
      %v1649 = vpop.permute.xlu0 %1648
      %v1653 = vsel %vm1296, %v1382, 0
      %v1656 = vsel %vm1296, %v1384, 0
      %1658 = vmatprep.subr.mxu0 0.0
      %1659 = vmatpush1.msra.mxu0 %v1647
      %1660 = vmatprep.subr.mxu0 0.0
      %1661 = vmatpush1.msra.mxu0 %v1649
      %1662 = vmatprep.subr.mxu0 0.0
      %1663 = vmatpush1.msra.mxu0 0.0
      %1664 = vmatprep.subr.mxu0 0.0
      %1665 = vmatpush1.msra.mxu0 0.0
      %1666 = vmatprep.subr.mxu0 0.0
      %1667 = vmatpush1.msra.mxu0 0.0
      %1668 = vmatprep.subr.mxu0 0.0
      %1669 = vmatpush1.msra.mxu0 0.0
      %1670 = vmatprep.subr.mxu0 0.0
      %1671 = vmatpush1.msra.mxu0 0.0
      %1672 = vmatprep.subr.mxu0 0.0
      %1673 = vmatpush1.msra.mxu0 0.0
      %1674 = vmatprep.subr.mxu0 0.0
      %1675 = vmatpush1.msra.mxu0 0.0
      %1676 = vmatprep.subr.mxu0 0.0
      %1677 = vmatpush1.msra.mxu0 0.0
      %1678 = vmatprep.subr.mxu0 0.0
      %1679 = vmatpush1.msra.mxu0 0.0
      %1680 = vmatprep.subr.mxu0 0.0
      %1681 = vmatpush1.msra.mxu0 0.0
      %1682 = vmatprep.subr.mxu0 0.0
      %1683 = vmatpush1.msra.mxu0 0.0
      %1684 = vmatprep.subr.mxu0 0.0
      %1685 = vmatpush1.msra.mxu0 0.0
      %1686 = vmatprep.subr.mxu0 0.0
      %1687 = vmatpush1.msra.mxu0 0.0
      %1688 = vmatprep.subr.mxu0 0.0
      %1689 = vmatpush1.msra.mxu0 0.0
      %1690 = vmatprep.subr.mxu0 0.0
      %1691 = vmatpush1.msra.mxu0 0.0
      %1692 = vmatprep.subr.mxu0 0.0
      %1693 = vmatpush1.msra.mxu0 0.0
      %1694 = vmatprep.subr.mxu0 0.0
      %1695 = vmatpush1.msra.mxu0 0.0
      %1696 = vmatprep.subr.mxu0 0.0
      %1697 = vmatpush1.msra.mxu0 0.0
      %1698 = vmatprep.subr.mxu0 0.0
      %1699 = vmatpush1.msra.mxu0 0.0
      %1700 = vmatprep.subr.mxu0 0.0
      %1701 = vmatpush1.msra.mxu0 0.0
      %1702 = vmatprep.subr.mxu0 0.0
      %1703 = vmatpush1.msra.mxu0 0.0
      %1704 = vmatprep.subr.mxu0 0.0
      %1705 = vmatpush1.msra.mxu0 0.0
      %1706 = vmatprep.subr.mxu0 0.0
      %1707 = vmatpush1.msra.mxu0 0.0
      %1708 = vmatprep.subr.mxu0 0.0
      %1709 = vmatpush1.msra.mxu0 0.0
      %1710 = vmatprep.subr.mxu0 0.0
      %1711 = vmatpush1.msra.mxu0 0.0
      %1712 = vmatprep.subr.mxu0 0.0
      %1713 = vmatpush1.msra.mxu0 0.0
      %1714 = vmatprep.subr.mxu0 0.0
      %1715 = vmatpush1.msra.mxu0 0.0
      %1716 = vmatprep.subr.mxu0 0.0
      %1717 = vmatpush1.msra.mxu0 0.0
      %1718 = vmatprep.subr.mxu0 0.0
      %1719 = vmatpush1.msra.mxu0 0.0
      %1720 = vmatprep.subr.mxu0 0.0
      %1721 = vmatpush1.msra.mxu0 0.0
      %1722 = vmatprep.mubr.f32.mxu0 0.0
      %1723 = vmatmul.mubr.f32.gmra.mrb[0].mxu0 %v1653
      %v1724 = vpop.f32.mrb[0].mxu0
      %v1725 = vadd.f32 0.0, %v1724
      %v1726 = vpop.f32.mrb[0].mxu0
      %1727 = vmatprep.mubr.f32.mxu0 0.0
      %1728 = vmatmul.mubr.f32.gmra.mrb[0].mxu0 %v1656
      %v1729 = vpop.f32.mrb[0].mxu0
      %v1730 = vadd.f32 0.0, %v1729
      %v1731 = vpop.f32.mrb[0].mxu0
      %1732 = vdwg.mxu0
      %1735 = vrot.lane.b32.xlu0 %v1551, 8
      %v1736 = vpop.permute.xlu0 %1735
      %1737 = vrot.lane.b32.xlu0 %v1556, 8
      %v1738 = vpop.permute.xlu0 %1737
      %1743 = vrot.lane.b32.xlu0 %v1638, 16
      %v1744 = vpop.permute.xlu0 %1743
      %1745 = vrot.lane.b32.xlu0 %v1643, 16
      %v1746 = vpop.permute.xlu0 %1745
      %1751 = vrot.lane.b32.xlu0 %v1725, 24
      %v1752 = vpop.permute.xlu0 %1751
      %1753 = vrot.lane.b32.xlu0 %v1730, 24
      %v1754 = vpop.permute.xlu0 %1753
      %v1757 = vsel %vm939, %v1464, %v1736
      %v1758 = vsel %vm939, %v1469, %v1738
      %v1759 = vsel %vm1296, %v1757, %v1744
      %v1760 = vsel %vm1296, %v1758, %v1746
      %vm1761 = vcmask 195584
      %v1762 = vsel %vm1761, %v1759, %v1752
      %v1763 = vsel %vm1761, %v1760, %v1754
      %v1765 = vlaneseq
      %v1766 = vshrl.u32 %v1765, 7
      %v1767 = vsub.s32 0, %v1766
      %v1768 = vrot.slane %v567, %v1767
      %v1771 = vsel %vm774, %v1762, 0
      %v1774 = vsel %vm774, %v1763, 0
      %1776 = vmatprep.subr.mxu0 0.0
      %1777 = vmatpush1.msra.mxu0 %v563
      %1778 = vmatprep.subr.mxu0 0.0
      %1779 = vmatpush1.msra.mxu0 %v564
      %1780 = vmatprep.subr.mxu0 0.0
      %1781 = vmatpush1.msra.mxu0 %v565
      %1782 = vmatprep.subr.mxu0 0.0
      %1783 = vmatpush1.msra.mxu0 %v566
      %1784 = vmatprep.subr.mxu0 0.0
      %1785 = vmatpush1.msra.mxu0 0.0
      %1786 = vmatprep.subr.mxu0 0.0
      %1787 = vmatpush1.msra.mxu0 0.0
      %1788 = vmatprep.subr.mxu0 0.0
      %1789 = vmatpush1.msra.mxu0 0.0
      %1790 = vmatprep.subr.mxu0 0.0
      %1791 = vmatpush1.msra.mxu0 0.0
      %1792 = vmatprep.subr.mxu0 0.0
      %1793 = vmatpush1.msra.mxu0 0.0
      %1794 = vmatprep.subr.mxu0 0.0
      %1795 = vmatpush1.msra.mxu0 0.0
      %1796 = vmatprep.subr.mxu0 0.0
      %1797 = vmatpush1.msra.mxu0 0.0
      %1798 = vmatprep.subr.mxu0 0.0
      %1799 = vmatpush1.msra.mxu0 0.0
      %1800 = vmatprep.subr.mxu0 0.0
      %1801 = vmatpush1.msra.mxu0 0.0
      %1802 = vmatprep.subr.mxu0 0.0
      %1803 = vmatpush1.msra.mxu0 0.0
      %1804 = vmatprep.subr.mxu0 0.0
      %1805 = vmatpush1.msra.mxu0 0.0
      %1806 = vmatprep.subr.mxu0 0.0
      %1807 = vmatpush1.msra.mxu0 0.0
      %1808 = vmatprep.subr.mxu0 0.0
      %1809 = vmatpush1.msra.mxu0 0.0
      %1810 = vmatprep.subr.mxu0 0.0
      %1811 = vmatpush1.msra.mxu0 0.0
      %1812 = vmatprep.subr.mxu0 0.0
      %1813 = vmatpush1.msra.mxu0 0.0
      %1814 = vmatprep.subr.mxu0 0.0
      %1815 = vmatpush1.msra.mxu0 0.0
      %1816 = vmatprep.subr.mxu0 0.0
      %1817 = vmatpush1.msra.mxu0 0.0
      %1818 = vmatprep.subr.mxu0 0.0
      %1819 = vmatpush1.msra.mxu0 0.0
      %1820 = vmatprep.subr.mxu0 0.0
      %1821 = vmatpush1.msra.mxu0 0.0
      %1822 = vmatprep.subr.mxu0 0.0
      %1823 = vmatpush1.msra.mxu0 0.0
      %1824 = vmatprep.subr.mxu0 0.0
      %1825 = vmatpush1.msra.mxu0 0.0
      %1826 = vmatprep.subr.mxu0 0.0
      %1827 = vmatpush1.msra.mxu0 0.0
      %1828 = vmatprep.subr.mxu0 0.0
      %1829 = vmatpush1.msra.mxu0 0.0
      %1830 = vmatprep.subr.mxu0 0.0
      %1831 = vmatpush1.msra.mxu0 0.0
      %1832 = vmatprep.subr.mxu0 0.0
      %1833 = vmatpush1.msra.mxu0 0.0
      %1834 = vmatprep.subr.mxu0 0.0
      %1835 = vmatpush1.msra.mxu0 0.0
      %1836 = vmatprep.subr.mxu0 0.0
      %1837 = vmatpush1.msra.mxu0 0.0
      %1838 = vmatprep.subr.mxu0 0.0
      %1839 = vmatpush1.msra.mxu0 0.0
      %1840 = vmatprep.mubr.f32.mxu0 0.0
      %1841 = vmatmul.mubr.f32.gmra.mrb[0].mxu0 %v1771
      %v1842 = vpop.f32.mrb[0].mxu0
      %v1843 = vadd.f32 %v1768, %v1842
      %v1844 = vpop.f32.mrb[0].mxu0
      %1845 = vmatprep.mubr.f32.mxu0 0.0
      %1846 = vmatmul.mubr.f32.gmra.mrb[0].mxu0 %v1774
      %v1847 = vpop.f32.mrb[0].mxu0
      %v1848 = vadd.f32 %v1768, %v1847
      %v1849 = vpop.f32.mrb[0].mxu0
      %1850 = vdwg.mxu0
      %v1851 = vmul.f32 %v914, %v1843
      %v1852 = vmul.f32 %v916, %v1848
      %v1853 = vadd.f32 %v745, %v1851
      %v1854 = vadd.f32 %v746, %v1852
      %v1855 = vsel %vm774, %v1853, 0.0
      %1856 = vadd.xlane.f32.xlu0 %v1855
      %v1857 = vpop.xlane.xlu0 %1856
      %v1858 = vsel %vm774, %v1854, 0.0
      %1859 = vadd.xlane.f32.xlu0 %v1858
      %v1860 = vpop.xlane.xlu0 %1859
      %v1861 = vmul.f32 %v1857, %v781
      %v1862 = vmul.f32 %v1860, %v781
      %v1863 = vsub.f32 %v1853, %v1861
      %v1864 = vsub.f32 %v1854, %v1862
      %v1865 = vmul.f32 %v1863, %v1863
      %v1866 = vmul.f32 %v1864, %v1864
      %v1867 = vsel %vm774, %v1865, 0.0
      %1868 = vadd.xlane.f32.xlu0 %v1867
      %v1869 = vpop.xlane.xlu0 %1868
      %v1870 = vsel %vm774, %v1866, 0.0
      %1871 = vadd.xlane.f32.xlu0 %v1870
      %v1872 = vpop.xlane.xlu0 %1871
      %v1873 = vmul.f32 %v1869, %v781
      %v1874 = vmul.f32 %v1872, %v781
      %v1875 = vadd.f32 %v1873, 1e-05
      %v1876 = vadd.f32 %v1874, 1e-05
      %v1877 = vrsqrt.pop %v1875
      %v1878 = vrsqrt.pop %v1876
      %v1879 = vmul.f32 %v1863, %v1877
      %v1880 = vmul.f32 %v1864, %v1878
      %v1882 = vlaneseq
      %v1883 = vshrl.u32 %v1882, 7
      %v1884 = vsub.s32 0, %v1883
      %v1885 = vrot.slane %v568, %v1884
      %v1887 = vmul.f32 %v1879, %v1885
      %v1888 = vmul.f32 %v1880, %v1885
      %v1890 = vlaneseq
      %v1891 = vshrl.u32 %v1890, 7
      %v1892 = vsub.s32 0, %v1891
      %v1893 = vrot.slane %v569, %v1892
      %v1895 = vadd.f32 %v1887, %v1893
      %v1896 = vadd.f32 %v1888, %v1893
      %v1898 = vlaneseq
      %v1899 = vshrl.u32 %v1898, 7
      %v1900 = vsub.s32 0, %v1899
      %v1901 = vrot.slane %v578, %v1900
      %v1902 = vlaneseq
      %v1903 = vshrl.u32 %v1902, 7
      %v1904 = vsub.s32 1, %v1903
      %v1905 = vrot.slane %v578, %v1904
      %v1909 = vsel %vm774, %v1895, 0
      %v1912 = vsel %vm774, %v1896, 0
      %1914 = vmatprep.subr.mxu0 %v571
      %1915 = vmatpush1.msra.mxu0 %v570
      %1916 = vmatprep.subr.mxu0 %v573
      %1917 = vmatpush1.msra.mxu0 %v572
      %1918 = vmatprep.subr.mxu0 %v575
      %1919 = vmatpush1.msra.mxu0 %v574
      %1920 = vmatprep.subr.mxu0 %v577
      %1921 = vmatpush1.msra.mxu0 %v576
      %1922 = vmatprep.subr.mxu0 0.0
      %1923 = vmatpush1.msra.mxu0 0.0
      %1924 = vmatprep.subr.mxu0 0.0
      %1925 = vmatpush1.msra.mxu0 0.0
      %1926 = vmatprep.subr.mxu0 0.0
      %1927 = vmatpush1.msra.mxu0 0.0
      %1928 = vmatprep.subr.mxu0 0.0
      %1929 = vmatpush1.msra.mxu0 0.0
      %1930 = vmatprep.subr.mxu0 0.0
      %1931 = vmatpush1.msra.mxu0 0.0
      %1932 = vmatprep.subr.mxu0 0.0
      %1933 = vmatpush1.msra.mxu0 0.0
      %1934 = vmatprep.subr.mxu0 0.0
      %1935 = vmatpush1.msra.mxu0 0.0
      %1936 = vmatprep.subr.mxu0 0.0
      %1937 = vmatpush1.msra.mxu0 0.0
      %1938 = vmatprep.subr.mxu0 0.0
      %1939 = vmatpush1.msra.mxu0 0.0
      %1940 = vmatprep.subr.mxu0 0.0
      %1941 = vmatpush1.msra.mxu0 0.0
      %1942 = vmatprep.subr.mxu0 0.0
      %1943 = vmatpush1.msra.mxu0 0.0
      %1944 = vmatprep.subr.mxu0 0.0
      %1945 = vmatpush1.msra.mxu0 0.0
      %1946 = vmatprep.subr.mxu0 0.0
      %1947 = vmatpush1.msra.mxu0 0.0
      %1948 = vmatprep.subr.mxu0 0.0
      %1949 = vmatpush1.msra.mxu0 0.0
      %1950 = vmatprep.subr.mxu0 0.0
      %1951 = vmatpush1.msra.mxu0 0.0
      %1952 = vmatprep.subr.mxu0 0.0
      %1953 = vmatpush1.msra.mxu0 0.0
      %1954 = vmatprep.subr.mxu0 0.0
      %1955 = vmatpush1.msra.mxu0 0.0
      %1956 = vmatprep.subr.mxu0 0.0
      %1957 = vmatpush1.msra.mxu0 0.0
      %1958 = vmatprep.subr.mxu0 0.0
      %1959 = vmatpush1.msra.mxu0 0.0
      %1960 = vmatprep.subr.mxu0 0.0
      %1961 = vmatpush1.msra.mxu0 0.0
      %1962 = vmatprep.subr.mxu0 0.0
      %1963 = vmatpush1.msra.mxu0 0.0
      %1964 = vmatprep.subr.mxu0 0.0
      %1965 = vmatpush1.msra.mxu0 0.0
      %1966 = vmatprep.subr.mxu0 0.0
      %1967 = vmatpush1.msra.mxu0 0.0
      %1968 = vmatprep.subr.mxu0 0.0
      %1969 = vmatpush1.msra.mxu0 0.0
      %1970 = vmatprep.subr.mxu0 0.0
      %1971 = vmatpush1.msra.mxu0 0.0
      %1972 = vmatprep.subr.mxu0 0.0
      %1973 = vmatpush1.msra.mxu0 0.0
      %1974 = vmatprep.subr.mxu0 0.0
      %1975 = vmatpush1.msra.mxu0 0.0
      %1976 = vmatprep.subr.mxu0 0.0
      %1977 = vmatpush1.msra.mxu0 0.0
      %1978 = vmatprep.mubr.f32.mxu0 0.0
      %1979 = vmatmul.mubr.f32.gmra.mrb[0].mxu0 %v1909
      %v1980 = vpop.f32.mrb[0].mxu0
      %v1981 = vadd.f32 %v1901, %v1980
      %v1982 = vpop.f32.mrb[0].mxu0
      %v1983 = vadd.f32 %v1905, %v1982
      %1984 = vmatprep.mubr.f32.mxu0 0.0
      %1985 = vmatmul.mubr.f32.gmra.mrb[0].mxu0 %v1912
      %v1986 = vpop.f32.mrb[0].mxu0
      %v1987 = vadd.f32 %v1901, %v1986
      %v1988 = vpop.f32.mrb[0].mxu0
      %v1989 = vadd.f32 %v1905, %v1988
      %1990 = vdwg.mxu0
      %v1991 = vxor.u32 %v1983, 2147483648
      %v1992 = vxor.u32 %v1989, 2147483648
      %v1993 = vmul.f32 %v1991, 1.442695
      %v1994 = vpow.pop %v1993
      %v1995 = vmul.f32 %v1992, 1.442695
      %v1996 = vpow.pop %v1995
      %v1997 = vadd.f32 %v1994, 1.0
      %v1998 = vadd.f32 %v1996, 1.0
      %v1999 = vrcp.pop %v1997
      %v2000 = vmul.f32 1.0, %v1999
      %v2001 = vrcp.pop %v1998
      %v2002 = vmul.f32 1.0, %v2001
      %v2003 = vmul.f32 %v1983, %v2000
      %v2004 = vmul.f32 %v1989, %v2002
      %v2005 = vmul.f32 %v1981, %v2003
      %v2006 = vmul.f32 %v1987, %v2004
      %2007 = vmatprep.subr.mxu0 0.0
      %2008 = vmatpush1.msra.mxu0 %v579
      %2009 = vmatprep.subr.mxu0 0.0
      %2010 = vmatpush1.msra.mxu0 %v580
      %2011 = vmatprep.subr.mxu0 0.0
      %2012 = vmatpush1.msra.mxu0 %v581
      %2013 = vmatprep.subr.mxu0 0.0
      %2014 = vmatpush1.msra.mxu0 %v582
      %2015 = vmatprep.subr.mxu0 0.0
      %2016 = vmatpush1.msra.mxu0 %v583
      %2017 = vmatprep.subr.mxu0 0.0
      %2018 = vmatpush1.msra.mxu0 %v584
      %2019 = vmatprep.subr.mxu0 0.0
      %2020 = vmatpush1.msra.mxu0 %v585
      %2021 = vmatprep.subr.mxu0 0.0
      %2022 = vmatpush1.msra.mxu0 %v586
      %2023 = vmatprep.subr.mxu0 0.0
      %2024 = vmatpush1.msra.mxu0 %v587
      %2025 = vmatprep.subr.mxu0 0.0
      %2026 = vmatpush1.msra.mxu0 %v588
      %2027 = vmatprep.subr.mxu0 0.0
      %2028 = vmatpush1.msra.mxu0 %v589
      %2029 = vmatprep.subr.mxu0 0.0
      %2030 = vmatpush1.msra.mxu0 %v590
      %2031 = vmatprep.subr.mxu0 0.0
      %2032 = vmatpush1.msra.mxu0 %v591
      %2033 = vmatprep.subr.mxu0 0.0
      %2034 = vmatpush1.msra.mxu0 %v592
      %2035 = vmatprep.subr.mxu0 0.0
      %2036 = vmatpush1.msra.mxu0 %v593
      %2037 = vmatprep.subr.mxu0 0.0
      %2038 = vmatpush1.msra.mxu0 %v594
      %2039 = vmatprep.subr.mxu0 0.0
      %2040 = vmatpush1.msra.mxu0 0.0
      %2041 = vmatprep.subr.mxu0 0.0
      %2042 = vmatpush1.msra.mxu0 0.0
      %2043 = vmatprep.subr.mxu0 0.0
      %2044 = vmatpush1.msra.mxu0 0.0
      %2045 = vmatprep.subr.mxu0 0.0
      %2046 = vmatpush1.msra.mxu0 0.0
      %2047 = vmatprep.subr.mxu0 0.0
      %2048 = vmatpush1.msra.mxu0 0.0
      %2049 = vmatprep.subr.mxu0 0.0
      %2050 = vmatpush1.msra.mxu0 0.0
      %2051 = vmatprep.subr.mxu0 0.0
      %2052 = vmatpush1.msra.mxu0 0.0
      %2053 = vmatprep.subr.mxu0 0.0
      %2054 = vmatpush1.msra.mxu0 0.0
      %2055 = vmatprep.subr.mxu0 0.0
      %2056 = vmatpush1.msra.mxu0 0.0
      %2057 = vmatprep.subr.mxu0 0.0
      %2058 = vmatpush1.msra.mxu0 0.0
      %2059 = vmatprep.subr.mxu0 0.0
      %2060 = vmatpush1.msra.mxu0 0.0
      %2061 = vmatprep.subr.mxu0 0.0
      %2062 = vmatpush1.msra.mxu0 0.0
      %2063 = vmatprep.subr.mxu0 0.0
      %2064 = vmatpush1.msra.mxu0 0.0
      %2065 = vmatprep.subr.mxu0 0.0
      %2066 = vmatpush1.msra.mxu0 0.0
      %2067 = vmatprep.subr.mxu0 0.0
      %2068 = vmatpush1.msra.mxu0 0.0
      %2069 = vmatprep.subr.mxu0 0.0
      %2070 = vmatpush1.msra.mxu0 0.0
      %2071 = vmatprep.mubr.f32.mxu0 0.0
      %2072 = vmatmul.mubr.f32.gmra.mrb[0].mxu0 %v2005
      %v2073 = vpop.f32.mrb[0].mxu0
      %v2074 = vadd.f32 0.0, %v2073
      %v2075 = vpop.f32.mrb[0].mxu0
      %2076 = vmatprep.mubr.f32.mxu0 0.0
      %2077 = vmatmul.mubr.f32.gmra.mrb[0].mxu0 %v2006
      %v2078 = vpop.f32.mrb[0].mxu0
      %v2079 = vadd.f32 0.0, %v2078
      %v2080 = vpop.f32.mrb[0].mxu0
      %2081 = vdwg.mxu0
      %v2082 = vadd.f32 %v1853, %v2074
      %v2083 = vadd.f32 %v1854, %v2079
      %v2085 = vlaneseq
      %v2086 = vshrl.u32 %v2085, 7
      %v2087 = vsub.s32 0, %v2086
      %v2088 = vrot.slane %v595, %v2087
      %v2090 = vadd.f32 %v2082, %v2088
      %v2091 = vadd.f32 %v2083, %v2088
      %v2092 = vsel %vm774, %v2090, 0.0
      %2093 = vadd.xlane.f32.xlu0 %v2092
      %v2094 = vpop.xlane.xlu0 %2093
      %v2095 = vsel %vm774, %v2091, 0.0
      %2096 = vadd.xlane.f32.xlu0 %v2095
      %v2097 = vpop.xlane.xlu0 %2096
      %v2098 = vmul.f32 %v2094, %v781
      %v2099 = vmul.f32 %v2097, %v781
      %v2100 = vsub.f32 %v2090, %v2098
      %v2101 = vsub.f32 %v2091, %v2099
      %v2102 = vmul.f32 %v2100, %v2100
      %v2103 = vmul.f32 %v2101, %v2101
      %v2104 = vsel %vm774, %v2102, 0.0
      %2105 = vadd.xlane.f32.xlu0 %v2104
      %v2106 = vpop.xlane.xlu0 %2105
      %v2107 = vsel %vm774, %v2103, 0.0
      %2108 = vadd.xlane.f32.xlu0 %v2107
      %v2109 = vpop.xlane.xlu0 %2108
      %v2110 = vmul.f32 %v2106, %v781
      %v2111 = vmul.f32 %v2109, %v781
      %v2112 = vadd.f32 %v2110, 1e-05
      %v2113 = vadd.f32 %v2111, 1e-05
      %v2114 = vrsqrt.pop %v2112
      %v2115 = vrsqrt.pop %v2113
      %v2116 = vmul.f32 %v2100, %v2114
      %v2117 = vmul.f32 %v2101, %v2115
      %v2118 = vmul.f32 %v2116, %v806
      %v2119 = vmul.f32 %v2117, %v806
      %v2120 = vadd.f32 %v2118, %v814
      %v2121 = vadd.f32 %v2119, %v814
      %v2123 = vsel %vm774, %v2120, 0
      %v2126 = vsel %vm774, %v2121, 0
      %2128 = vmatprep.subr.mxu0 0.0
      %2129 = vmatpush1.msra.mxu0 %v558
      %2130 = vmatprep.subr.mxu0 0.0
      %2131 = vmatpush1.msra.mxu0 %v559
      %2132 = vmatprep.subr.mxu0 0.0
      %2133 = vmatpush1.msra.mxu0 %v560
      %2134 = vmatprep.subr.mxu0 0.0
      %2135 = vmatpush1.msra.mxu0 %v561
      %2136 = vmatprep.subr.mxu0 0.0
      %2137 = vmatpush1.msra.mxu0 0.0
      %2138 = vmatprep.subr.mxu0 0.0
      %2139 = vmatpush1.msra.mxu0 0.0
      %2140 = vmatprep.subr.mxu0 0.0
      %2141 = vmatpush1.msra.mxu0 0.0
      %2142 = vmatprep.subr.mxu0 0.0
      %2143 = vmatpush1.msra.mxu0 0.0
      %2144 = vmatprep.subr.mxu0 0.0
      %2145 = vmatpush1.msra.mxu0 0.0
      %2146 = vmatprep.subr.mxu0 0.0
      %2147 = vmatpush1.msra.mxu0 0.0
      %2148 = vmatprep.subr.mxu0 0.0
      %2149 = vmatpush1.msra.mxu0 0.0
      %2150 = vmatprep.subr.mxu0 0.0
      %2151 = vmatpush1.msra.mxu0 0.0
      %2152 = vmatprep.subr.mxu0 0.0
      %2153 = vmatpush1.msra.mxu0 0.0
      %2154 = vmatprep.subr.mxu0 0.0
      %2155 = vmatpush1.msra.mxu0 0.0
      %2156 = vmatprep.subr.mxu0 0.0
      %2157 = vmatpush1.msra.mxu0 0.0
      %2158 = vmatprep.subr.mxu0 0.0
      %2159 = vmatpush1.msra.mxu0 0.0
      %2160 = vmatprep.subr.mxu0 0.0
      %2161 = vmatpush1.msra.mxu0 0.0
      %2162 = vmatprep.subr.mxu0 0.0
      %2163 = vmatpush1.msra.mxu0 0.0
      %2164 = vmatprep.subr.mxu0 0.0
      %2165 = vmatpush1.msra.mxu0 0.0
      %2166 = vmatprep.subr.mxu0 0.0
      %2167 = vmatpush1.msra.mxu0 0.0
      %2168 = vmatprep.subr.mxu0 0.0
      %2169 = vmatpush1.msra.mxu0 0.0
      %2170 = vmatprep.subr.mxu0 0.0
      %2171 = vmatpush1.msra.mxu0 0.0
      %2172 = vmatprep.subr.mxu0 0.0
      %2173 = vmatpush1.msra.mxu0 0.0
      %2174 = vmatprep.subr.mxu0 0.0
      %2175 = vmatpush1.msra.mxu0 0.0
      %2176 = vmatprep.subr.mxu0 0.0
      %2177 = vmatpush1.msra.mxu0 0.0
      %2178 = vmatprep.subr.mxu0 0.0
      %2179 = vmatpush1.msra.mxu0 0.0
      %2180 = vmatprep.subr.mxu0 0.0
      %2181 = vmatpush1.msra.mxu0 0.0
      %2182 = vmatprep.subr.mxu0 0.0
      %2183 = vmatpush1.msra.mxu0 0.0
      %2184 = vmatprep.subr.mxu0 0.0
      %2185 = vmatpush1.msra.mxu0 0.0
      %2186 = vmatprep.subr.mxu0 0.0
      %2187 = vmatpush1.msra.mxu0 0.0
      %2188 = vmatprep.subr.mxu0 0.0
      %2189 = vmatpush1.msra.mxu0 0.0
      %2190 = vmatprep.subr.mxu0 0.0
      %2191 = vmatpush1.msra.mxu0 0.0
      %2192 = vmatprep.mubr.f32.mxu0 0.0
      %2193 = vmatmul.mubr.f32.gmra.mrb[0].mxu0 %v2123
      %v2194 = vpop.f32.mrb[0].mxu0
      %v2195 = vadd.f32 %v822, %v2194
      %v2196 = vpop.f32.mrb[0].mxu0
      %2197 = vmatprep.mubr.f32.mxu0 0.0
      %2198 = vmatmul.mubr.f32.gmra.mrb[0].mxu0 %v2126
      %v2199 = vpop.f32.mrb[0].mxu0
      %v2200 = vadd.f32 %v822, %v2199
      %v2201 = vpop.f32.mrb[0].mxu0
      %2202 = vdwg.mxu0
      %v2203 = vxor.u32 %v2195, 2147483648
      %v2204 = vxor.u32 %v2200, 2147483648
      %v2205 = vmul.f32 %v2203, 1.442695
      %v2206 = vpow.pop %v2205
      %v2207 = vmul.f32 %v2204, 1.442695
      %v2208 = vpow.pop %v2207
      %v2209 = vadd.f32 %v2206, 1.0
      %v2210 = vadd.f32 %v2208, 1.0
      %v2211 = vrcp.pop %v2209
      %v2212 = vmul.f32 1.0, %v2211
      %v2213 = vrcp.pop %v2210
      %v2214 = vmul.f32 1.0, %v2213
      %2217 = vrot.lane.b32.xlu0 %v2195, 120
      %v2218 = vpop.permute.xlu0 %2217
      %2219 = vrot.lane.b32.xlu0 %v2200, 120
      %v2220 = vpop.permute.xlu0 %2219
      %2221 = vrot.lane.b32.xlu0 %v2195, 112
      %v2222 = vpop.permute.xlu0 %2221
      %2223 = vrot.lane.b32.xlu0 %v2200, 112
      %v2224 = vpop.permute.xlu0 %2223
      %2225 = vrot.lane.b32.xlu0 %v2195, 104
      %v2226 = vpop.permute.xlu0 %2225
      %2227 = vrot.lane.b32.xlu0 %v2200, 104
      %v2228 = vpop.permute.xlu0 %2227
      %2229 = vrot.lane.b32.xlu0 %v2195, 96
      %v2230 = vpop.permute.xlu0 %2229
      %2231 = vrot.lane.b32.xlu0 %v2200, 96
      %v2232 = vpop.permute.xlu0 %2231
      %2233 = vrot.lane.b32.xlu0 %v2195, 64
      %v2234 = vpop.permute.xlu0 %2233
      %2235 = vrot.lane.b32.xlu0 %v2200, 64
      %v2236 = vpop.permute.xlu0 %2235
      %v2237 = vsel %vm939, %v2230, 0
      %v2239 = vsel %vm939, %v2232, 0
      %v2241 = vsel %vm939, %v2234, 0
      %v2243 = vsel %vm939, %v2236, 0
      %2245 = vmatprep.subr.mxu0 0.0
      %2246 = vmatpush1.xpose.msra.mxu0 %v2241
      %2247 = vmatprep.subr.mxu0 0.0
      %2248 = vmatpush1.xpose.msra.mxu0 %v2243
      %2249 = vmatprep.subr.mxu0 0.0
      %2250 = vmatpush1.xpose.msra.mxu0 0.0
      %2251 = vmatprep.subr.mxu0 0.0
      %2252 = vmatpush1.xpose.msra.mxu0 0.0
      %2253 = vmatprep.subr.mxu0 0.0
      %2254 = vmatpush1.xpose.msra.mxu0 0.0
      %2255 = vmatprep.subr.mxu0 0.0
      %2256 = vmatpush1.xpose.msra.mxu0 0.0
      %2257 = vmatprep.subr.mxu0 0.0
      %2258 = vmatpush1.xpose.msra.mxu0 0.0
      %2259 = vmatprep.subr.mxu0 0.0
      %2260 = vmatpush1.xpose.msra.mxu0 0.0
      %2261 = vmatprep.subr.mxu0 0.0
      %2262 = vmatpush1.xpose.msra.mxu0 0.0
      %2263 = vmatprep.subr.mxu0 0.0
      %2264 = vmatpush1.xpose.msra.mxu0 0.0
      %2265 = vmatprep.subr.mxu0 0.0
      %2266 = vmatpush1.xpose.msra.mxu0 0.0
      %2267 = vmatprep.subr.mxu0 0.0
      %2268 = vmatpush1.xpose.msra.mxu0 0.0
      %2269 = vmatprep.subr.mxu0 0.0
      %2270 = vmatpush1.xpose.msra.mxu0 0.0
      %2271 = vmatprep.subr.mxu0 0.0
      %2272 = vmatpush1.xpose.msra.mxu0 0.0
      %2273 = vmatprep.subr.mxu0 0.0
      %2274 = vmatpush1.xpose.msra.mxu0 0.0
      %2275 = vmatprep.subr.mxu0 0.0
      %2276 = vmatpush1.xpose.msra.mxu0 0.0
      %2277 = vmatprep.subr.mxu0 0.0
      %2278 = vmatpush1.xpose.msra.mxu0 0.0
      %2279 = vmatprep.subr.mxu0 0.0
      %2280 = vmatpush1.xpose.msra.mxu0 0.0
      %2281 = vmatprep.subr.mxu0 0.0
      %2282 = vmatpush1.xpose.msra.mxu0 0.0
      %2283 = vmatprep.subr.mxu0 0.0
      %2284 = vmatpush1.xpose.msra.mxu0 0.0
      %2285 = vmatprep.subr.mxu0 0.0
      %2286 = vmatpush1.xpose.msra.mxu0 0.0
      %2287 = vmatprep.subr.mxu0 0.0
      %2288 = vmatpush1.xpose.msra.mxu0 0.0
      %2289 = vmatprep.subr.mxu0 0.0
      %2290 = vmatpush1.xpose.msra.mxu0 0.0
      %2291 = vmatprep.subr.mxu0 0.0
      %2292 = vmatpush1.xpose.msra.mxu0 0.0
      %2293 = vmatprep.subr.mxu0 0.0
      %2294 = vmatpush1.xpose.msra.mxu0 0.0
      %2295 = vmatprep.subr.mxu0 0.0
      %2296 = vmatpush1.xpose.msra.mxu0 0.0
      %2297 = vmatprep.subr.mxu0 0.0
      %2298 = vmatpush1.xpose.msra.mxu0 0.0
      %2299 = vmatprep.subr.mxu0 0.0
      %2300 = vmatpush1.xpose.msra.mxu0 0.0
      %2301 = vmatprep.subr.mxu0 0.0
      %2302 = vmatpush1.xpose.msra.mxu0 0.0
      %2303 = vmatprep.subr.mxu0 0.0
      %2304 = vmatpush1.xpose.msra.mxu0 0.0
      %2305 = vmatprep.subr.mxu0 0.0
      %2306 = vmatpush1.xpose.msra.mxu0 0.0
      %2307 = vmatprep.subr.mxu0 0.0
      %2308 = vmatpush1.xpose.msra.mxu0 0.0
      %2309 = vmatprep.mubr.f32.mxu0 0.0
      %2310 = vmatmul.mubr.f32.gmra.mrb[0].mxu0 %v2237
      %v2311 = vpop.f32.mrb[0].mxu0
      %v2312 = vadd.f32 %v766, %v2311
      %v2313 = vpop.f32.mrb[0].mxu0
      %2314 = vmatprep.mubr.f32.mxu0 0.0
      %2315 = vmatmul.mubr.f32.gmra.mrb[0].mxu0 %v2239
      %v2316 = vpop.f32.mrb[0].mxu0
      %v2317 = vadd.f32 %v767, %v2316
      %v2318 = vpop.f32.mrb[0].mxu0
      %2319 = vdwg.mxu0
      %2320 = vrot.lane.b32.xlu0 %v2218, 96
      %v2321 = vpop.permute.xlu0 %2320
      %2322 = vrot.lane.b32.xlu0 %v2220, 96
      %v2323 = vpop.permute.xlu0 %2322
      %2324 = vrot.lane.b32.xlu0 %v2218, 64
      %v2325 = vpop.permute.xlu0 %2324
      %2326 = vrot.lane.b32.xlu0 %v2220, 64
      %v2327 = vpop.permute.xlu0 %2326
      %v2328 = vsel %vm939, %v2321, 0
      %v2330 = vsel %vm939, %v2323, 0
      %v2332 = vsel %vm939, %v2325, 0
      %v2334 = vsel %vm939, %v2327, 0
      %2336 = vmatprep.subr.mxu0 0.0
      %2337 = vmatpush1.xpose.msra.mxu0 %v2332
      %2338 = vmatprep.subr.mxu0 0.0
      %2339 = vmatpush1.xpose.msra.mxu0 %v2334
      %2340 = vmatprep.subr.mxu0 0.0
      %2341 = vmatpush1.xpose.msra.mxu0 0.0
      %2342 = vmatprep.subr.mxu0 0.0
      %2343 = vmatpush1.xpose.msra.mxu0 0.0
      %2344 = vmatprep.subr.mxu0 0.0
      %2345 = vmatpush1.xpose.msra.mxu0 0.0
      %2346 = vmatprep.subr.mxu0 0.0
      %2347 = vmatpush1.xpose.msra.mxu0 0.0
      %2348 = vmatprep.subr.mxu0 0.0
      %2349 = vmatpush1.xpose.msra.mxu0 0.0
      %2350 = vmatprep.subr.mxu0 0.0
      %2351 = vmatpush1.xpose.msra.mxu0 0.0
      %2352 = vmatprep.subr.mxu0 0.0
      %2353 = vmatpush1.xpose.msra.mxu0 0.0
      %2354 = vmatprep.subr.mxu0 0.0
      %2355 = vmatpush1.xpose.msra.mxu0 0.0
      %2356 = vmatprep.subr.mxu0 0.0
      %2357 = vmatpush1.xpose.msra.mxu0 0.0
      %2358 = vmatprep.subr.mxu0 0.0
      %2359 = vmatpush1.xpose.msra.mxu0 0.0
      %2360 = vmatprep.subr.mxu0 0.0
      %2361 = vmatpush1.xpose.msra.mxu0 0.0
      %2362 = vmatprep.subr.mxu0 0.0
      %2363 = vmatpush1.xpose.msra.mxu0 0.0
      %2364 = vmatprep.subr.mxu0 0.0
      %2365 = vmatpush1.xpose.msra.mxu0 0.0
      %2366 = vmatprep.subr.mxu0 0.0
      %2367 = vmatpush1.xpose.msra.mxu0 0.0
      %2368 = vmatprep.subr.mxu0 0.0
      %2369 = vmatpush1.xpose.msra.mxu0 0.0
      %2370 = vmatprep.subr.mxu0 0.0
      %2371 = vmatpush1.xpose.msra.mxu0 0.0
      %2372 = vmatprep.subr.mxu0 0.0
      %2373 = vmatpush1.xpose.msra.mxu0 0.0
      %2374 = vmatprep.subr.mxu0 0.0
      %2375 = vmatpush1.xpose.msra.mxu0 0.0
      %2376 = vmatprep.subr.mxu0 0.0
      %2377 = vmatpush1.xpose.msra.mxu0 0.0
      %2378 = vmatprep.subr.mxu0 0.0
      %2379 = vmatpush1.xpose.msra.mxu0 0.0
      %2380 = vmatprep.subr.mxu0 0.0
      %2381 = vmatpush1.xpose.msra.mxu0 0.0
      %2382 = vmatprep.subr.mxu0 0.0
      %2383 = vmatpush1.xpose.msra.mxu0 0.0
      %2384 = vmatprep.subr.mxu0 0.0
      %2385 = vmatpush1.xpose.msra.mxu0 0.0
      %2386 = vmatprep.subr.mxu0 0.0
      %2387 = vmatpush1.xpose.msra.mxu0 0.0
      %2388 = vmatprep.subr.mxu0 0.0
      %2389 = vmatpush1.xpose.msra.mxu0 0.0
      %2390 = vmatprep.subr.mxu0 0.0
      %2391 = vmatpush1.xpose.msra.mxu0 0.0
      %2392 = vmatprep.subr.mxu0 0.0
      %2393 = vmatpush1.xpose.msra.mxu0 0.0
      %2394 = vmatprep.subr.mxu0 0.0
      %2395 = vmatpush1.xpose.msra.mxu0 0.0
      %2396 = vmatprep.subr.mxu0 0.0
      %2397 = vmatpush1.xpose.msra.mxu0 0.0
      %2398 = vmatprep.subr.mxu0 0.0
      %2399 = vmatpush1.xpose.msra.mxu0 0.0
      %2400 = vmatprep.mubr.f32.mxu0 0.0
      %2401 = vmatmul.mubr.f32.gmra.mrb[0].mxu0 %v2328
      %v2402 = vpop.f32.mrb[0].mxu0
      %v2403 = vadd.f32 %v768, %v2402
      %v2404 = vpop.f32.mrb[0].mxu0
      %2405 = vmatprep.mubr.f32.mxu0 0.0
      %2406 = vmatmul.mubr.f32.gmra.mrb[0].mxu0 %v2330
      %v2407 = vpop.f32.mrb[0].mxu0
      %v2408 = vadd.f32 %v769, %v2407
      %v2409 = vpop.f32.mrb[0].mxu0
      %2410 = vdwg.mxu0
      %2411 = vrot.lane.b32.xlu0 %v2222, 96
      %v2412 = vpop.permute.xlu0 %2411
      %2413 = vrot.lane.b32.xlu0 %v2224, 96
      %v2414 = vpop.permute.xlu0 %2413
      %2415 = vrot.lane.b32.xlu0 %v2222, 64
      %v2416 = vpop.permute.xlu0 %2415
      %2417 = vrot.lane.b32.xlu0 %v2224, 64
      %v2418 = vpop.permute.xlu0 %2417
      %v2419 = vsel %vm939, %v2412, 0
      %v2421 = vsel %vm939, %v2414, 0
      %v2423 = vsel %vm939, %v2416, 0
      %v2425 = vsel %vm939, %v2418, 0
      %2427 = vmatprep.subr.mxu0 0.0
      %2428 = vmatpush1.xpose.msra.mxu0 %v2423
      %2429 = vmatprep.subr.mxu0 0.0
      %2430 = vmatpush1.xpose.msra.mxu0 %v2425
      %2431 = vmatprep.subr.mxu0 0.0
      %2432 = vmatpush1.xpose.msra.mxu0 0.0
      %2433 = vmatprep.subr.mxu0 0.0
      %2434 = vmatpush1.xpose.msra.mxu0 0.0
      %2435 = vmatprep.subr.mxu0 0.0
      %2436 = vmatpush1.xpose.msra.mxu0 0.0
      %2437 = vmatprep.subr.mxu0 0.0
      %2438 = vmatpush1.xpose.msra.mxu0 0.0
      %2439 = vmatprep.subr.mxu0 0.0
      %2440 = vmatpush1.xpose.msra.mxu0 0.0
      %2441 = vmatprep.subr.mxu0 0.0
      %2442 = vmatpush1.xpose.msra.mxu0 0.0
      %2443 = vmatprep.subr.mxu0 0.0
      %2444 = vmatpush1.xpose.msra.mxu0 0.0
      %2445 = vmatprep.subr.mxu0 0.0
      %2446 = vmatpush1.xpose.msra.mxu0 0.0
      %2447 = vmatprep.subr.mxu0 0.0
      %2448 = vmatpush1.xpose.msra.mxu0 0.0
      %2449 = vmatprep.subr.mxu0 0.0
      %2450 = vmatpush1.xpose.msra.mxu0 0.0
      %2451 = vmatprep.subr.mxu0 0.0
      %2452 = vmatpush1.xpose.msra.mxu0 0.0
      %2453 = vmatprep.subr.mxu0 0.0
      %2454 = vmatpush1.xpose.msra.mxu0 0.0
      %2455 = vmatprep.subr.mxu0 0.0
      %2456 = vmatpush1.xpose.msra.mxu0 0.0
      %2457 = vmatprep.subr.mxu0 0.0
      %2458 = vmatpush1.xpose.msra.mxu0 0.0
      %2459 = vmatprep.subr.mxu0 0.0
      %2460 = vmatpush1.xpose.msra.mxu0 0.0
      %2461 = vmatprep.subr.mxu0 0.0
      %2462 = vmatpush1.xpose.msra.mxu0 0.0
      %2463 = vmatprep.subr.mxu0 0.0
      %2464 = vmatpush1.xpose.msra.mxu0 0.0
      %2465 = vmatprep.subr.mxu0 0.0
      %2466 = vmatpush1.xpose.msra.mxu0 0.0
      %2467 = vmatprep.subr.mxu0 0.0
      %2468 = vmatpush1.xpose.msra.mxu0 0.0
      %2469 = vmatprep.subr.mxu0 0.0
      %2470 = vmatpush1.xpose.msra.mxu0 0.0
      %2471 = vmatprep.subr.mxu0 0.0
      %2472 = vmatpush1.xpose.msra.mxu0 0.0
      %2473 = vmatprep.subr.mxu0 0.0
      %2474 = vmatpush1.xpose.msra.mxu0 0.0
      %2475 = vmatprep.subr.mxu0 0.0
      %2476 = vmatpush1.xpose.msra.mxu0 0.0
      %2477 = vmatprep.subr.mxu0 0.0
      %2478 = vmatpush1.xpose.msra.mxu0 0.0
      %2479 = vmatprep.subr.mxu0 0.0
      %2480 = vmatpush1.xpose.msra.mxu0 0.0
      %2481 = vmatprep.subr.mxu0 0.0
      %2482 = vmatpush1.xpose.msra.mxu0 0.0
      %2483 = vmatprep.subr.mxu0 0.0
      %2484 = vmatpush1.xpose.msra.mxu0 0.0
      %2485 = vmatprep.subr.mxu0 0.0
      %2486 = vmatpush1.xpose.msra.mxu0 0.0
      %2487 = vmatprep.subr.mxu0 0.0
      %2488 = vmatpush1.xpose.msra.mxu0 0.0
      %2489 = vmatprep.subr.mxu0 0.0
      %2490 = vmatpush1.xpose.msra.mxu0 0.0
      %2491 = vmatprep.mubr.f32.mxu0 0.0
      %2492 = vmatmul.mubr.f32.gmra.mrb[0].mxu0 %v2419
      %v2493 = vpop.f32.mrb[0].mxu0
      %v2494 = vadd.f32 %v770, %v2493
      %v2495 = vpop.f32.mrb[0].mxu0
      %2496 = vmatprep.mubr.f32.mxu0 0.0
      %2497 = vmatmul.mubr.f32.gmra.mrb[0].mxu0 %v2421
      %v2498 = vpop.f32.mrb[0].mxu0
      %v2499 = vadd.f32 %v771, %v2498
      %v2500 = vpop.f32.mrb[0].mxu0
      %2501 = vdwg.mxu0
      %2502 = vrot.lane.b32.xlu0 %v2226, 96
      %v2503 = vpop.permute.xlu0 %2502
      %2504 = vrot.lane.b32.xlu0 %v2228, 96
      %v2505 = vpop.permute.xlu0 %2504
      %2506 = vrot.lane.b32.xlu0 %v2226, 64
      %v2507 = vpop.permute.xlu0 %2506
      %2508 = vrot.lane.b32.xlu0 %v2228, 64
      %v2509 = vpop.permute.xlu0 %2508
      %v2510 = vsel %vm939, %v2503, 0
      %v2512 = vsel %vm939, %v2505, 0
      %v2514 = vsel %vm939, %v2507, 0
      %v2516 = vsel %vm939, %v2509, 0
      %2518 = vmatprep.subr.mxu0 0.0
      %2519 = vmatpush1.xpose.msra.mxu0 %v2514
      %2520 = vmatprep.subr.mxu0 0.0
      %2521 = vmatpush1.xpose.msra.mxu0 %v2516
      %2522 = vmatprep.subr.mxu0 0.0
      %2523 = vmatpush1.xpose.msra.mxu0 0.0
      %2524 = vmatprep.subr.mxu0 0.0
      %2525 = vmatpush1.xpose.msra.mxu0 0.0
      %2526 = vmatprep.subr.mxu0 0.0
      %2527 = vmatpush1.xpose.msra.mxu0 0.0
      %2528 = vmatprep.subr.mxu0 0.0
      %2529 = vmatpush1.xpose.msra.mxu0 0.0
      %2530 = vmatprep.subr.mxu0 0.0
      %2531 = vmatpush1.xpose.msra.mxu0 0.0
      %2532 = vmatprep.subr.mxu0 0.0
      %2533 = vmatpush1.xpose.msra.mxu0 0.0
      %2534 = vmatprep.subr.mxu0 0.0
      %2535 = vmatpush1.xpose.msra.mxu0 0.0
      %2536 = vmatprep.subr.mxu0 0.0
      %2537 = vmatpush1.xpose.msra.mxu0 0.0
      %2538 = vmatprep.subr.mxu0 0.0
      %2539 = vmatpush1.xpose.msra.mxu0 0.0
      %2540 = vmatprep.subr.mxu0 0.0
      %2541 = vmatpush1.xpose.msra.mxu0 0.0
      %2542 = vmatprep.subr.mxu0 0.0
      %2543 = vmatpush1.xpose.msra.mxu0 0.0
      %2544 = vmatprep.subr.mxu0 0.0
      %2545 = vmatpush1.xpose.msra.mxu0 0.0
      %2546 = vmatprep.subr.mxu0 0.0
      %2547 = vmatpush1.xpose.msra.mxu0 0.0
      %2548 = vmatprep.subr.mxu0 0.0
      %2549 = vmatpush1.xpose.msra.mxu0 0.0
      %2550 = vmatprep.subr.mxu0 0.0
      %2551 = vmatpush1.xpose.msra.mxu0 0.0
      %2552 = vmatprep.subr.mxu0 0.0
      %2553 = vmatpush1.xpose.msra.mxu0 0.0
      %2554 = vmatprep.subr.mxu0 0.0
      %2555 = vmatpush1.xpose.msra.mxu0 0.0
      %2556 = vmatprep.subr.mxu0 0.0
      %2557 = vmatpush1.xpose.msra.mxu0 0.0
      %2558 = vmatprep.subr.mxu0 0.0
      %2559 = vmatpush1.xpose.msra.mxu0 0.0
      %2560 = vmatprep.subr.mxu0 0.0
      %2561 = vmatpush1.xpose.msra.mxu0 0.0
      %2562 = vmatprep.subr.mxu0 0.0
      %2563 = vmatpush1.xpose.msra.mxu0 0.0
      %2564 = vmatprep.subr.mxu0 0.0
      %2565 = vmatpush1.xpose.msra.mxu0 0.0
      %2566 = vmatprep.subr.mxu0 0.0
      %2567 = vmatpush1.xpose.msra.mxu0 0.0
      %2568 = vmatprep.subr.mxu0 0.0
      %2569 = vmatpush1.xpose.msra.mxu0 0.0
      %2570 = vmatprep.subr.mxu0 0.0
      %2571 = vmatpush1.xpose.msra.mxu0 0.0
      %2572 = vmatprep.subr.mxu0 0.0
      %2573 = vmatpush1.xpose.msra.mxu0 0.0
      %2574 = vmatprep.subr.mxu0 0.0
      %2575 = vmatpush1.xpose.msra.mxu0 0.0
      %2576 = vmatprep.subr.mxu0 0.0
      %2577 = vmatpush1.xpose.msra.mxu0 0.0
      %2578 = vmatprep.subr.mxu0 0.0
      %2579 = vmatpush1.xpose.msra.mxu0 0.0
      %2580 = vmatprep.subr.mxu0 0.0
      %2581 = vmatpush1.xpose.msra.mxu0 0.0
      %2582 = vmatprep.mubr.f32.mxu0 0.0
      %2583 = vmatmul.mubr.f32.gmra.mrb[0].mxu0 %v2510
      %v2584 = vpop.f32.mrb[0].mxu0
      %v2585 = vadd.f32 %v772, %v2584
      %v2586 = vpop.f32.mrb[0].mxu0
      %2587 = vmatprep.mubr.f32.mxu0 0.0
      %2588 = vmatmul.mubr.f32.gmra.mrb[0].mxu0 %v2512
      %v2589 = vpop.f32.mrb[0].mxu0
      %v2590 = vadd.f32 %v773, %v2589
      %v2591 = vpop.f32.mrb[0].mxu0
      %2592 = vdwg.mxu0
      %v2593 = vsel %vm1296, %v2312, -inf
      %2594 = vmax.xlane.f32.xlu0 %v2593
      %v2595 = vpop.xlane.xlu0 %2594
      %v2596 = vsel %vm1296, %v2317, -inf
      %2597 = vmax.xlane.f32.xlu0 %v2596
      %v2598 = vpop.xlane.xlu0 %2597
      %v2599 = vsel %vm1296, %v2403, -inf
      %2600 = vmax.xlane.f32.xlu0 %v2599
      %v2601 = vpop.xlane.xlu0 %2600
      %v2602 = vsel %vm1296, %v2408, -inf
      %2603 = vmax.xlane.f32.xlu0 %v2602
      %v2604 = vpop.xlane.xlu0 %2603
      %v2605 = vsel %vm1296, %v2494, -inf
      %2606 = vmax.xlane.f32.xlu0 %v2605
      %v2607 = vpop.xlane.xlu0 %2606
      %v2608 = vsel %vm1296, %v2499, -inf
      %2609 = vmax.xlane.f32.xlu0 %v2608
      %v2610 = vpop.xlane.xlu0 %2609
      %v2611 = vsel %vm1296, %v2585, -inf
      %2612 = vmax.xlane.f32.xlu0 %v2611
      %v2613 = vpop.xlane.xlu0 %2612
      %v2614 = vsel %vm1296, %v2590, -inf
      %2615 = vmax.xlane.f32.xlu0 %v2614
      %v2616 = vpop.xlane.xlu0 %2615
      %v2617 = vsub.f32 %v2312, %v2595
      %v2618 = vsub.f32 %v2317, %v2598
      %v2619 = vsub.f32 %v2403, %v2601
      %v2620 = vsub.f32 %v2408, %v2604
      %v2621 = vsub.f32 %v2494, %v2607
      %v2622 = vsub.f32 %v2499, %v2610
      %v2623 = vsub.f32 %v2585, %v2613
      %v2624 = vsub.f32 %v2590, %v2616
      %v2625 = vmul.f32 %v2617, 1.442695
      %v2626 = vpow.pop %v2625
      %v2627 = vmul.f32 %v2618, 1.442695
      %v2628 = vpow.pop %v2627
      %v2629 = vmul.f32 %v2619, 1.442695
      %v2630 = vpow.pop %v2629
      %v2631 = vmul.f32 %v2620, 1.442695
      %v2632 = vpow.pop %v2631
      %v2633 = vmul.f32 %v2621, 1.442695
      %v2634 = vpow.pop %v2633
      %v2635 = vmul.f32 %v2622, 1.442695
      %v2636 = vpow.pop %v2635
      %v2637 = vmul.f32 %v2623, 1.442695
      %v2638 = vpow.pop %v2637
      %v2639 = vmul.f32 %v2624, 1.442695
      %v2640 = vpow.pop %v2639
      %v2641 = vsel %vm1296, %v2626, 0.0
      %2642 = vadd.xlane.f32.xlu0 %v2641
      %v2643 = vpop.xlane.xlu0 %2642
      %v2644 = vsel %vm1296, %v2628, 0.0
      %2645 = vadd.xlane.f32.xlu0 %v2644
      %v2646 = vpop.xlane.xlu0 %2645
      %v2647 = vsel %vm1296, %v2630, 0.0
      %2648 = vadd.xlane.f32.xlu0 %v2647
      %v2649 = vpop.xlane.xlu0 %2648
      %v2650 = vsel %vm1296, %v2632, 0.0
      %2651 = vadd.xlane.f32.xlu0 %v2650
      %v2652 = vpop.xlane.xlu0 %2651
      %v2653 = vsel %vm1296, %v2634, 0.0
      %2654 = vadd.xlane.f32.xlu0 %v2653
      %v2655 = vpop.xlane.xlu0 %2654
      %v2656 = vsel %vm1296, %v2636, 0.0
      %2657 = vadd.xlane.f32.xlu0 %v2656
      %v2658 = vpop.xlane.xlu0 %2657
      %v2659 = vsel %vm1296, %v2638, 0.0
      %2660 = vadd.xlane.f32.xlu0 %v2659
      %v2661 = vpop.xlane.xlu0 %2660
      %v2662 = vsel %vm1296, %v2640, 0.0
      %2663 = vadd.xlane.f32.xlu0 %v2662
      %v2664 = vpop.xlane.xlu0 %2663
      %v2665 = vrcp.pop %v2643
      %v2666 = vmul.f32 %v2626, %v2665
      %v2667 = vrcp.pop %v2646
      %v2668 = vmul.f32 %v2628, %v2667
      %v2669 = vrcp.pop %v2649
      %v2670 = vmul.f32 %v2630, %v2669
      %v2671 = vrcp.pop %v2652
      %v2672 = vmul.f32 %v2632, %v2671
      %v2673 = vrcp.pop %v2655
      %v2674 = vmul.f32 %v2634, %v2673
      %v2675 = vrcp.pop %v2658
      %v2676 = vmul.f32 %v2636, %v2675
      %v2677 = vrcp.pop %v2661
      %v2678 = vmul.f32 %v2638, %v2677
      %v2679 = vrcp.pop %v2664
      %v2680 = vmul.f32 %v2640, %v2679
      %2681 = vrot.lane.b32.xlu0 %v2195, 32
      %v2682 = vpop.permute.xlu0 %2681
      %2683 = vrot.lane.b32.xlu0 %v2200, 32
      %v2684 = vpop.permute.xlu0 %2683
      %v2688 = vsel %vm1296, %v2666, 0
      %v2691 = vsel %vm1296, %v2668, 0
      %2693 = vmatprep.subr.mxu0 0.0
      %2694 = vmatpush1.msra.mxu0 %v2682
      %2695 = vmatprep.subr.mxu0 0.0
      %2696 = vmatpush1.msra.mxu0 %v2684
      %2697 = vmatprep.subr.mxu0 0.0
      %2698 = vmatpush1.msra.mxu0 0.0
      %2699 = vmatprep.subr.mxu0 0.0
      %2700 = vmatpush1.msra.mxu0 0.0
      %2701 = vmatprep.subr.mxu0 0.0
      %2702 = vmatpush1.msra.mxu0 0.0
      %2703 = vmatprep.subr.mxu0 0.0
      %2704 = vmatpush1.msra.mxu0 0.0
      %2705 = vmatprep.subr.mxu0 0.0
      %2706 = vmatpush1.msra.mxu0 0.0
      %2707 = vmatprep.subr.mxu0 0.0
      %2708 = vmatpush1.msra.mxu0 0.0
      %2709 = vmatprep.subr.mxu0 0.0
      %2710 = vmatpush1.msra.mxu0 0.0
      %2711 = vmatprep.subr.mxu0 0.0
      %2712 = vmatpush1.msra.mxu0 0.0
      %2713 = vmatprep.subr.mxu0 0.0
      %2714 = vmatpush1.msra.mxu0 0.0
      %2715 = vmatprep.subr.mxu0 0.0
      %2716 = vmatpush1.msra.mxu0 0.0
      %2717 = vmatprep.subr.mxu0 0.0
      %2718 = vmatpush1.msra.mxu0 0.0
      %2719 = vmatprep.subr.mxu0 0.0
      %2720 = vmatpush1.msra.mxu0 0.0
      %2721 = vmatprep.subr.mxu0 0.0
      %2722 = vmatpush1.msra.mxu0 0.0
      %2723 = vmatprep.subr.mxu0 0.0
      %2724 = vmatpush1.msra.mxu0 0.0
      %2725 = vmatprep.subr.mxu0 0.0
      %2726 = vmatpush1.msra.mxu0 0.0
      %2727 = vmatprep.subr.mxu0 0.0
      %2728 = vmatpush1.msra.mxu0 0.0
      %2729 = vmatprep.subr.mxu0 0.0
      %2730 = vmatpush1.msra.mxu0 0.0
      %2731 = vmatprep.subr.mxu0 0.0
      %2732 = vmatpush1.msra.mxu0 0.0
      %2733 = vmatprep.subr.mxu0 0.0
      %2734 = vmatpush1.msra.mxu0 0.0
      %2735 = vmatprep.subr.mxu0 0.0
      %2736 = vmatpush1.msra.mxu0 0.0
      %2737 = vmatprep.subr.mxu0 0.0
      %2738 = vmatpush1.msra.mxu0 0.0
      %2739 = vmatprep.subr.mxu0 0.0
      %2740 = vmatpush1.msra.mxu0 0.0
      %2741 = vmatprep.subr.mxu0 0.0
      %2742 = vmatpush1.msra.mxu0 0.0
      %2743 = vmatprep.subr.mxu0 0.0
      %2744 = vmatpush1.msra.mxu0 0.0
      %2745 = vmatprep.subr.mxu0 0.0
      %2746 = vmatpush1.msra.mxu0 0.0
      %2747 = vmatprep.subr.mxu0 0.0
      %2748 = vmatpush1.msra.mxu0 0.0
      %2749 = vmatprep.subr.mxu0 0.0
      %2750 = vmatpush1.msra.mxu0 0.0
      %2751 = vmatprep.subr.mxu0 0.0
      %2752 = vmatpush1.msra.mxu0 0.0
      %2753 = vmatprep.subr.mxu0 0.0
      %2754 = vmatpush1.msra.mxu0 0.0
      %2755 = vmatprep.subr.mxu0 0.0
      %2756 = vmatpush1.msra.mxu0 0.0
      %2757 = vmatprep.mubr.f32.mxu0 0.0
      %2758 = vmatmul.mubr.f32.gmra.mrb[0].mxu0 %v2688
      %v2759 = vpop.f32.mrb[0].mxu0
      %v2760 = vadd.f32 0.0, %v2759
      %v2761 = vpop.f32.mrb[0].mxu0
      %2762 = vmatprep.mubr.f32.mxu0 0.0
      %2763 = vmatmul.mubr.f32.gmra.mrb[0].mxu0 %v2691
      %v2764 = vpop.f32.mrb[0].mxu0
      %v2765 = vadd.f32 0.0, %v2764
      %v2766 = vpop.f32.mrb[0].mxu0
      %2767 = vdwg.mxu0
      %2768 = vrot.lane.b32.xlu0 %v2218, 32
      %v2769 = vpop.permute.xlu0 %2768
      %2770 = vrot.lane.b32.xlu0 %v2220, 32
      %v2771 = vpop.permute.xlu0 %2770
      %v2775 = vsel %vm1296, %v2670, 0
      %v2778 = vsel %vm1296, %v2672, 0
      %2780 = vmatprep.subr.mxu0 0.0
      %2781 = vmatpush1.msra.mxu0 %v2769
      %2782 = vmatprep.subr.mxu0 0.0
      %2783 = vmatpush1.msra.mxu0 %v2771
      %2784 = vmatprep.subr.mxu0 0.0
      %2785 = vmatpush1.msra.mxu0 0.0
      %2786 = vmatprep.subr.mxu0 0.0
      %2787 = vmatpush1.msra.mxu0 0.0
      %2788 = vmatprep.subr.mxu0 0.0
      %2789 = vmatpush1.msra.mxu0 0.0
      %2790 = vmatprep.subr.mxu0 0.0
      %2791 = vmatpush1.msra.mxu0 0.0
      %2792 = vmatprep.subr.mxu0 0.0
      %2793 = vmatpush1.msra.mxu0 0.0
      %2794 = vmatprep.subr.mxu0 0.0
      %2795 = vmatpush1.msra.mxu0 0.0
      %2796 = vmatprep.subr.mxu0 0.0
      %2797 = vmatpush1.msra.mxu0 0.0
      %2798 = vmatprep.subr.mxu0 0.0
      %2799 = vmatpush1.msra.mxu0 0.0
      %2800 = vmatprep.subr.mxu0 0.0
      %2801 = vmatpush1.msra.mxu0 0.0
      %2802 = vmatprep.subr.mxu0 0.0
      %2803 = vmatpush1.msra.mxu0 0.0
      %2804 = vmatprep.subr.mxu0 0.0
      %2805 = vmatpush1.msra.mxu0 0.0
      %2806 = vmatprep.subr.mxu0 0.0
      %2807 = vmatpush1.msra.mxu0 0.0
      %2808 = vmatprep.subr.mxu0 0.0
      %2809 = vmatpush1.msra.mxu0 0.0
      %2810 = vmatprep.subr.mxu0 0.0
      %2811 = vmatpush1.msra.mxu0 0.0
      %2812 = vmatprep.subr.mxu0 0.0
      %2813 = vmatpush1.msra.mxu0 0.0
      %2814 = vmatprep.subr.mxu0 0.0
      %2815 = vmatpush1.msra.mxu0 0.0
      %2816 = vmatprep.subr.mxu0 0.0
      %2817 = vmatpush1.msra.mxu0 0.0
      %2818 = vmatprep.subr.mxu0 0.0
      %2819 = vmatpush1.msra.mxu0 0.0
      %2820 = vmatprep.subr.mxu0 0.0
      %2821 = vmatpush1.msra.mxu0 0.0
      %2822 = vmatprep.subr.mxu0 0.0
      %2823 = vmatpush1.msra.mxu0 0.0
      %2824 = vmatprep.subr.mxu0 0.0
      %2825 = vmatpush1.msra.mxu0 0.0
      %2826 = vmatprep.subr.mxu0 0.0
      %2827 = vmatpush1.msra.mxu0 0.0
      %2828 = vmatprep.subr.mxu0 0.0
      %2829 = vmatpush1.msra.mxu0 0.0
      %2830 = vmatprep.subr.mxu0 0.0
      %2831 = vmatpush1.msra.mxu0 0.0
      %2832 = vmatprep.subr.mxu0 0.0
      %2833 = vmatpush1.msra.mxu0 0.0
      %2834 = vmatprep.subr.mxu0 0.0
      %2835 = vmatpush1.msra.mxu0 0.0
      %2836 = vmatprep.subr.mxu0 0.0
      %2837 = vmatpush1.msra.mxu0 0.0
      %2838 = vmatprep.subr.mxu0 0.0
      %2839 = vmatpush1.msra.mxu0 0.0
      %2840 = vmatprep.subr.mxu0 0.0
      %2841 = vmatpush1.msra.mxu0 0.0
      %2842 = vmatprep.subr.mxu0 0.0
      %2843 = vmatpush1.msra.mxu0 0.0
      %2844 = vmatprep.mubr.f32.mxu0 0.0
      %2845 = vmatmul.mubr.f32.gmra.mrb[0].mxu0 %v2775
      %v2846 = vpop.f32.mrb[0].mxu0
      %v2847 = vadd.f32 0.0, %v2846
      %v2848 = vpop.f32.mrb[0].mxu0
      %2849 = vmatprep.mubr.f32.mxu0 0.0
      %2850 = vmatmul.mubr.f32.gmra.mrb[0].mxu0 %v2778
      %v2851 = vpop.f32.mrb[0].mxu0
      %v2852 = vadd.f32 0.0, %v2851
      %v2853 = vpop.f32.mrb[0].mxu0
      %2854 = vdwg.mxu0
      %2855 = vrot.lane.b32.xlu0 %v2222, 32
      %v2856 = vpop.permute.xlu0 %2855
      %2857 = vrot.lane.b32.xlu0 %v2224, 32
      %v2858 = vpop.permute.xlu0 %2857
      %v2862 = vsel %vm1296, %v2674, 0
      %v2865 = vsel %vm1296, %v2676, 0
      %2867 = vmatprep.subr.mxu0 0.0
      %2868 = vmatpush1.msra.mxu0 %v2856
      %2869 = vmatprep.subr.mxu0 0.0
      %2870 = vmatpush1.msra.mxu0 %v2858
      %2871 = vmatprep.subr.mxu0 0.0
      %2872 = vmatpush1.msra.mxu0 0.0
      %2873 = vmatprep.subr.mxu0 0.0
      %2874 = vmatpush1.msra.mxu0 0.0
      %2875 = vmatprep.subr.mxu0 0.0
      %2876 = vmatpush1.msra.mxu0 0.0
      %2877 = vmatprep.subr.mxu0 0.0
      %2878 = vmatpush1.msra.mxu0 0.0
      %2879 = vmatprep.subr.mxu0 0.0
      %2880 = vmatpush1.msra.mxu0 0.0
      %2881 = vmatprep.subr.mxu0 0.0
      %2882 = vmatpush1.msra.mxu0 0.0
      %2883 = vmatprep.subr.mxu0 0.0
      %2884 = vmatpush1.msra.mxu0 0.0
      %2885 = vmatprep.subr.mxu0 0.0
      %2886 = vmatpush1.msra.mxu0 0.0
      %2887 = vmatprep.subr.mxu0 0.0
      %2888 = vmatpush1.msra.mxu0 0.0
      %2889 = vmatprep.subr.mxu0 0.0
      %2890 = vmatpush1.msra.mxu0 0.0
      %2891 = vmatprep.subr.mxu0 0.0
      %2892 = vmatpush1.msra.mxu0 0.0
      %2893 = vmatprep.subr.mxu0 0.0
      %2894 = vmatpush1.msra.mxu0 0.0
      %2895 = vmatprep.subr.mxu0 0.0
      %2896 = vmatpush1.msra.mxu0 0.0
      %2897 = vmatprep.subr.mxu0 0.0
      %2898 = vmatpush1.msra.mxu0 0.0
      %2899 = vmatprep.subr.mxu0 0.0
      %2900 = vmatpush1.msra.mxu0 0.0
      %2901 = vmatprep.subr.mxu0 0.0
      %2902 = vmatpush1.msra.mxu0 0.0
      %2903 = vmatprep.subr.mxu0 0.0
      %2904 = vmatpush1.msra.mxu0 0.0
      %2905 = vmatprep.subr.mxu0 0.0
      %2906 = vmatpush1.msra.mxu0 0.0
      %2907 = vmatprep.subr.mxu0 0.0
      %2908 = vmatpush1.msra.mxu0 0.0
      %2909 = vmatprep.subr.mxu0 0.0
      %2910 = vmatpush1.msra.mxu0 0.0
      %2911 = vmatprep.subr.mxu0 0.0
      %2912 = vmatpush1.msra.mxu0 0.0
      %2913 = vmatprep.subr.mxu0 0.0
      %2914 = vmatpush1.msra.mxu0 0.0
      %2915 = vmatprep.subr.mxu0 0.0
      %2916 = vmatpush1.msra.mxu0 0.0
      %2917 = vmatprep.subr.mxu0 0.0
      %2918 = vmatpush1.msra.mxu0 0.0
      %2919 = vmatprep.subr.mxu0 0.0
      %2920 = vmatpush1.msra.mxu0 0.0
      %2921 = vmatprep.subr.mxu0 0.0
      %2922 = vmatpush1.msra.mxu0 0.0
      %2923 = vmatprep.subr.mxu0 0.0
      %2924 = vmatpush1.msra.mxu0 0.0
      %2925 = vmatprep.subr.mxu0 0.0
      %2926 = vmatpush1.msra.mxu0 0.0
      %2927 = vmatprep.subr.mxu0 0.0
      %2928 = vmatpush1.msra.mxu0 0.0
      %2929 = vmatprep.subr.mxu0 0.0
      %2930 = vmatpush1.msra.mxu0 0.0
      %2931 = vmatprep.mubr.f32.mxu0 0.0
      %2932 = vmatmul.mubr.f32.gmra.mrb[0].mxu0 %v2862
      %v2933 = vpop.f32.mrb[0].mxu0
      %v2934 = vadd.f32 0.0, %v2933
      %v2935 = vpop.f32.mrb[0].mxu0
      %2936 = vmatprep.mubr.f32.mxu0 0.0
      %2937 = vmatmul.mubr.f32.gmra.mrb[0].mxu0 %v2865
      %v2938 = vpop.f32.mrb[0].mxu0
      %v2939 = vadd.f32 0.0, %v2938
      %v2940 = vpop.f32.mrb[0].mxu0
      %2941 = vdwg.mxu0
      %2942 = vrot.lane.b32.xlu0 %v2226, 32
      %v2943 = vpop.permute.xlu0 %2942
      %2944 = vrot.lane.b32.xlu0 %v2228, 32
      %v2945 = vpop.permute.xlu0 %2944
      %v2949 = vsel %vm1296, %v2678, 0
      %v2952 = vsel %vm1296, %v2680, 0
      %2954 = vmatprep.subr.mxu0 0.0
      %2955 = vmatpush1.msra.mxu0 %v2943
      %2956 = vmatprep.subr.mxu0 0.0
      %2957 = vmatpush1.msra.mxu0 %v2945
      %2958 = vmatprep.subr.mxu0 0.0
      %2959 = vmatpush1.msra.mxu0 0.0
      %2960 = vmatprep.subr.mxu0 0.0
      %2961 = vmatpush1.msra.mxu0 0.0
      %2962 = vmatprep.subr.mxu0 0.0
      %2963 = vmatpush1.msra.mxu0 0.0
      %2964 = vmatprep.subr.mxu0 0.0
      %2965 = vmatpush1.msra.mxu0 0.0
      %2966 = vmatprep.subr.mxu0 0.0
      %2967 = vmatpush1.msra.mxu0 0.0
      %2968 = vmatprep.subr.mxu0 0.0
      %2969 = vmatpush1.msra.mxu0 0.0
      %2970 = vmatprep.subr.mxu0 0.0
      %2971 = vmatpush1.msra.mxu0 0.0
      %2972 = vmatprep.subr.mxu0 0.0
      %2973 = vmatpush1.msra.mxu0 0.0
      %2974 = vmatprep.subr.mxu0 0.0
      %2975 = vmatpush1.msra.mxu0 0.0
      %2976 = vmatprep.subr.mxu0 0.0
      %2977 = vmatpush1.msra.mxu0 0.0
      %2978 = vmatprep.subr.mxu0 0.0
      %2979 = vmatpush1.msra.mxu0 0.0
      %2980 = vmatprep.subr.mxu0 0.0
      %2981 = vmatpush1.msra.mxu0 0.0
      %2982 = vmatprep.subr.mxu0 0.0
      %2983 = vmatpush1.msra.mxu0 0.0
      %2984 = vmatprep.subr.mxu0 0.0
      %2985 = vmatpush1.msra.mxu0 0.0
      %2986 = vmatprep.subr.mxu0 0.0
      %2987 = vmatpush1.msra.mxu0 0.0
      %2988 = vmatprep.subr.mxu0 0.0
      %2989 = vmatpush1.msra.mxu0 0.0
      %2990 = vmatprep.subr.mxu0 0.0
      %2991 = vmatpush1.msra.mxu0 0.0
      %2992 = vmatprep.subr.mxu0 0.0
      %2993 = vmatpush1.msra.mxu0 0.0
      %2994 = vmatprep.subr.mxu0 0.0
      %2995 = vmatpush1.msra.mxu0 0.0
      %2996 = vmatprep.subr.mxu0 0.0
      %2997 = vmatpush1.msra.mxu0 0.0
      %2998 = vmatprep.subr.mxu0 0.0
      %2999 = vmatpush1.msra.mxu0 0.0
      %3000 = vmatprep.subr.mxu0 0.0
      %3001 = vmatpush1.msra.mxu0 0.0
      %3002 = vmatprep.subr.mxu0 0.0
      %3003 = vmatpush1.msra.mxu0 0.0
      %3004 = vmatprep.subr.mxu0 0.0
      %3005 = vmatpush1.msra.mxu0 0.0
      %3006 = vmatprep.subr.mxu0 0.0
      %3007 = vmatpush1.msra.mxu0 0.0
      %3008 = vmatprep.subr.mxu0 0.0
      %3009 = vmatpush1.msra.mxu0 0.0
      %3010 = vmatprep.subr.mxu0 0.0
      %3011 = vmatpush1.msra.mxu0 0.0
      %3012 = vmatprep.subr.mxu0 0.0
      %3013 = vmatpush1.msra.mxu0 0.0
      %3014 = vmatprep.subr.mxu0 0.0
      %3015 = vmatpush1.msra.mxu0 0.0
      %3016 = vmatprep.subr.mxu0 0.0
      %3017 = vmatpush1.msra.mxu0 0.0
      %3018 = vmatprep.mubr.f32.mxu0 0.0
      %3019 = vmatmul.mubr.f32.gmra.mrb[0].mxu0 %v2949
      %v3020 = vpop.f32.mrb[0].mxu0
      %v3021 = vadd.f32 0.0, %v3020
      %v3022 = vpop.f32.mrb[0].mxu0
      %3023 = vmatprep.mubr.f32.mxu0 0.0
      %3024 = vmatmul.mubr.f32.gmra.mrb[0].mxu0 %v2952
      %v3025 = vpop.f32.mrb[0].mxu0
      %v3026 = vadd.f32 0.0, %v3025
      %v3027 = vpop.f32.mrb[0].mxu0
      %3028 = vdwg.mxu0
      %3031 = vrot.lane.b32.xlu0 %v2847, 8
      %v3032 = vpop.permute.xlu0 %3031
      %3033 = vrot.lane.b32.xlu0 %v2852, 8
      %v3034 = vpop.permute.xlu0 %3033
      %3039 = vrot.lane.b32.xlu0 %v2934, 16
      %v3040 = vpop.permute.xlu0 %3039
      %3041 = vrot.lane.b32.xlu0 %v2939, 16
      %v3042 = vpop.permute.xlu0 %3041
      %3047 = vrot.lane.b32.xlu0 %v3021, 24
      %v3048 = vpop.permute.xlu0 %3047
      %3049 = vrot.lane.b32.xlu0 %v3026, 24
      %v3050 = vpop.permute.xlu0 %3049
      %v3053 = vsel %vm939, %v2760, %v3032
      %v3054 = vsel %vm939, %v2765, %v3034
      %v3055 = vsel %vm1296, %v3053, %v3040
      %v3056 = vsel %vm1296, %v3054, %v3042
      %v3057 = vsel %vm1761, %v3055, %v3048
      %v3058 = vsel %vm1761, %v3056, %v3050
      %v3060 = vsel %vm774, %v3057, 0
      %v3063 = vsel %vm774, %v3058, 0
      %3065 = vmatprep.subr.mxu0 0.0
      %3066 = vmatpush1.msra.mxu0 %v563
      %3067 = vmatprep.subr.mxu0 0.0
      %3068 = vmatpush1.msra.mxu0 %v564
      %3069 = vmatprep.subr.mxu0 0.0
      %3070 = vmatpush1.msra.mxu0 %v565
      %3071 = vmatprep.subr.mxu0 0.0
      %3072 = vmatpush1.msra.mxu0 %v566
      %3073 = vmatprep.subr.mxu0 0.0
      %3074 = vmatpush1.msra.mxu0 0.0
      %3075 = vmatprep.subr.mxu0 0.0
      %3076 = vmatpush1.msra.mxu0 0.0
      %3077 = vmatprep.subr.mxu0 0.0
      %3078 = vmatpush1.msra.mxu0 0.0
      %3079 = vmatprep.subr.mxu0 0.0
      %3080 = vmatpush1.msra.mxu0 0.0
      %3081 = vmatprep.subr.mxu0 0.0
      %3082 = vmatpush1.msra.mxu0 0.0
      %3083 = vmatprep.subr.mxu0 0.0
      %3084 = vmatpush1.msra.mxu0 0.0
      %3085 = vmatprep.subr.mxu0 0.0
      %3086 = vmatpush1.msra.mxu0 0.0
      %3087 = vmatprep.subr.mxu0 0.0
      %3088 = vmatpush1.msra.mxu0 0.0
      %3089 = vmatprep.subr.mxu0 0.0
      %3090 = vmatpush1.msra.mxu0 0.0
      %3091 = vmatprep.subr.mxu0 0.0
      %3092 = vmatpush1.msra.mxu0 0.0
      %3093 = vmatprep.subr.mxu0 0.0
      %3094 = vmatpush1.msra.mxu0 0.0
      %3095 = vmatprep.subr.mxu0 0.0
      %3096 = vmatpush1.msra.mxu0 0.0
      %3097 = vmatprep.subr.mxu0 0.0
      %3098 = vmatpush1.msra.mxu0 0.0
      %3099 = vmatprep.subr.mxu0 0.0
      %3100 = vmatpush1.msra.mxu0 0.0
      %3101 = vmatprep.subr.mxu0 0.0
      %3102 = vmatpush1.msra.mxu0 0.0
      %3103 = vmatprep.subr.mxu0 0.0
      %3104 = vmatpush1.msra.mxu0 0.0
      %3105 = vmatprep.subr.mxu0 0.0
      %3106 = vmatpush1.msra.mxu0 0.0
      %3107 = vmatprep.subr.mxu0 0.0
      %3108 = vmatpush1.msra.mxu0 0.0
      %3109 = vmatprep.subr.mxu0 0.0
      %3110 = vmatpush1.msra.mxu0 0.0
      %3111 = vmatprep.subr.mxu0 0.0
      %3112 = vmatpush1.msra.mxu0 0.0
      %3113 = vmatprep.subr.mxu0 0.0
      %3114 = vmatpush1.msra.mxu0 0.0
      %3115 = vmatprep.subr.mxu0 0.0
      %3116 = vmatpush1.msra.mxu0 0.0
      %3117 = vmatprep.subr.mxu0 0.0
      %3118 = vmatpush1.msra.mxu0 0.0
      %3119 = vmatprep.subr.mxu0 0.0
      %3120 = vmatpush1.msra.mxu0 0.0
      %3121 = vmatprep.subr.mxu0 0.0
      %3122 = vmatpush1.msra.mxu0 0.0
      %3123 = vmatprep.subr.mxu0 0.0
      %3124 = vmatpush1.msra.mxu0 0.0
      %3125 = vmatprep.subr.mxu0 0.0
      %3126 = vmatpush1.msra.mxu0 0.0
      %3127 = vmatprep.subr.mxu0 0.0
      %3128 = vmatpush1.msra.mxu0 0.0
      %3129 = vmatprep.mubr.f32.mxu0 0.0
      %3130 = vmatmul.mubr.f32.gmra.mrb[0].mxu0 %v3060
      %v3131 = vpop.f32.mrb[0].mxu0
      %v3132 = vadd.f32 %v1768, %v3131
      %v3133 = vpop.f32.mrb[0].mxu0
      %3134 = vmatprep.mubr.f32.mxu0 0.0
      %3135 = vmatmul.mubr.f32.gmra.mrb[0].mxu0 %v3063
      %v3136 = vpop.f32.mrb[0].mxu0
      %v3137 = vadd.f32 %v1768, %v3136
      %v3138 = vpop.f32.mrb[0].mxu0
      %3139 = vdwg.mxu0
      %v3140 = vmul.f32 %v2212, %v3132
      %v3141 = vmul.f32 %v2214, %v3137
      %v3142 = vadd.f32 %v2090, %v3140
      %v3143 = vadd.f32 %v2091, %v3141
      %v3144 = vsel %vm774, %v3142, 0.0
      %3145 = vadd.xlane.f32.xlu0 %v3144
      %v3146 = vpop.xlane.xlu0 %3145
      %v3147 = vsel %vm774, %v3143, 0.0
      %3148 = vadd.xlane.f32.xlu0 %v3147
      %v3149 = vpop.xlane.xlu0 %3148
      %v3150 = vmul.f32 %v3146, %v781
      %v3151 = vmul.f32 %v3149, %v781
      %v3152 = vsub.f32 %v3142, %v3150
      %v3153 = vsub.f32 %v3143, %v3151
      %v3154 = vmul.f32 %v3152, %v3152
      %v3155 = vmul.f32 %v3153, %v3153
      %v3156 = vsel %vm774, %v3154, 0.0
      %3157 = vadd.xlane.f32.xlu0 %v3156
      %v3158 = vpop.xlane.xlu0 %3157
      %v3159 = vsel %vm774, %v3155, 0.0
      %3160 = vadd.xlane.f32.xlu0 %v3159
      %v3161 = vpop.xlane.xlu0 %3160
      %v3162 = vmul.f32 %v3158, %v781
      %v3163 = vmul.f32 %v3161, %v781
      %v3164 = vadd.f32 %v3162, 1e-05
      %v3165 = vadd.f32 %v3163, 1e-05
      %v3166 = vrsqrt.pop %v3164
      %v3167 = vrsqrt.pop %v3165
      %v3168 = vmul.f32 %v3152, %v3166
      %v3169 = vmul.f32 %v3153, %v3167
      %v3170 = vmul.f32 %v3168, %v1885
      %v3171 = vmul.f32 %v3169, %v1885
      %v3172 = vadd.f32 %v3170, %v1893
      %v3173 = vadd.f32 %v3171, %v1893
      %v3175 = vsel %vm774, %v3172, 0
      %v3178 = vsel %vm774, %v3173, 0
      %3180 = vmatprep.subr.mxu0 %v571
      %3181 = vmatpush1.msra.mxu0 %v570
      %3182 = vmatprep.subr.mxu0 %v573
      %3183 = vmatpush1.msra.mxu0 %v572
      %3184 = vmatprep.subr.mxu0 %v575
      %3185 = vmatpush1.msra.mxu0 %v574
      %3186 = vmatprep.subr.mxu0 %v577
      %3187 = vmatpush1.msra.mxu0 %v576
      %3188 = vmatprep.subr.mxu0 0.0
      %3189 = vmatpush1.msra.mxu0 0.0
      %3190 = vmatprep.subr.mxu0 0.0
      %3191 = vmatpush1.msra.mxu0 0.0
      %3192 = vmatprep.subr.mxu0 0.0
      %3193 = vmatpush1.msra.mxu0 0.0
      %3194 = vmatprep.subr.mxu0 0.0
      %3195 = vmatpush1.msra.mxu0 0.0
      %3196 = vmatprep.subr.mxu0 0.0
      %3197 = vmatpush1.msra.mxu0 0.0
      %3198 = vmatprep.subr.mxu0 0.0
      %3199 = vmatpush1.msra.mxu0 0.0
      %3200 = vmatprep.subr.mxu0 0.0
      %3201 = vmatpush1.msra.mxu0 0.0
      %3202 = vmatprep.subr.mxu0 0.0
      %3203 = vmatpush1.msra.mxu0 0.0
      %3204 = vmatprep.subr.mxu0 0.0
      %3205 = vmatpush1.msra.mxu0 0.0
      %3206 = vmatprep.subr.mxu0 0.0
      %3207 = vmatpush1.msra.mxu0 0.0
      %3208 = vmatprep.subr.mxu0 0.0
      %3209 = vmatpush1.msra.mxu0 0.0
      %3210 = vmatprep.subr.mxu0 0.0
      %3211 = vmatpush1.msra.mxu0 0.0
      %3212 = vmatprep.subr.mxu0 0.0
      %3213 = vmatpush1.msra.mxu0 0.0
      %3214 = vmatprep.subr.mxu0 0.0
      %3215 = vmatpush1.msra.mxu0 0.0
      %3216 = vmatprep.subr.mxu0 0.0
      %3217 = vmatpush1.msra.mxu0 0.0
      %3218 = vmatprep.subr.mxu0 0.0
      %3219 = vmatpush1.msra.mxu0 0.0
      %3220 = vmatprep.subr.mxu0 0.0
      %3221 = vmatpush1.msra.mxu0 0.0
      %3222 = vmatprep.subr.mxu0 0.0
      %3223 = vmatpush1.msra.mxu0 0.0
      %3224 = vmatprep.subr.mxu0 0.0
      %3225 = vmatpush1.msra.mxu0 0.0
      %3226 = vmatprep.subr.mxu0 0.0
      %3227 = vmatpush1.msra.mxu0 0.0
      %3228 = vmatprep.subr.mxu0 0.0
      %3229 = vmatpush1.msra.mxu0 0.0
      %3230 = vmatprep.subr.mxu0 0.0
      %3231 = vmatpush1.msra.mxu0 0.0
      %3232 = vmatprep.subr.mxu0 0.0
      %3233 = vmatpush1.msra.mxu0 0.0
      %3234 = vmatprep.subr.mxu0 0.0
      %3235 = vmatpush1.msra.mxu0 0.0
      %3236 = vmatprep.subr.mxu0 0.0
      %3237 = vmatpush1.msra.mxu0 0.0
      %3238 = vmatprep.subr.mxu0 0.0
      %3239 = vmatpush1.msra.mxu0 0.0
      %3240 = vmatprep.subr.mxu0 0.0
      %3241 = vmatpush1.msra.mxu0 0.0
      %3242 = vmatprep.subr.mxu0 0.0
      %3243 = vmatpush1.msra.mxu0 0.0
      %3244 = vmatprep.mubr.f32.mxu0 0.0
      %3245 = vmatmul.mubr.f32.gmra.mrb[0].mxu0 %v3175
      %v3246 = vpop.f32.mrb[0].mxu0
      %v3247 = vadd.f32 %v1901, %v3246
      %v3248 = vpop.f32.mrb[0].mxu0
      %v3249 = vadd.f32 %v1905, %v3248
      %3250 = vmatprep.mubr.f32.mxu0 0.0
      %3251 = vmatmul.mubr.f32.gmra.mrb[0].mxu0 %v3178
      %v3252 = vpop.f32.mrb[0].mxu0
      %v3253 = vadd.f32 %v1901, %v3252
      %v3254 = vpop.f32.mrb[0].mxu0
      %v3255 = vadd.f32 %v1905, %v3254
      %3256 = vdwg.mxu0
      %v3257 = vxor.u32 %v3249, 2147483648
      %v3258 = vxor.u32 %v3255, 2147483648
      %v3259 = vmul.f32 %v3257, 1.442695
      %v3260 = vpow.pop %v3259
      %v3261 = vmul.f32 %v3258, 1.442695
      %v3262 = vpow.pop %v3261
      %v3263 = vadd.f32 %v3260, 1.0
      %v3264 = vadd.f32 %v3262, 1.0
      %v3265 = vrcp.pop %v3263
      %v3266 = vmul.f32 1.0, %v3265
      %v3267 = vrcp.pop %v3264
      %v3268 = vmul.f32 1.0, %v3267
      %v3269 = vmul.f32 %v3249, %v3266
      %v3270 = vmul.f32 %v3255, %v3268
      %v3271 = vmul.f32 %v3247, %v3269
      %v3272 = vmul.f32 %v3253, %v3270
      %3273 = vmatprep.subr.mxu0 0.0
      %3274 = vmatpush1.msra.mxu0 %v579
      %3275 = vmatprep.subr.mxu0 0.0
      %3276 = vmatpush1.msra.mxu0 %v580
      %3277 = vmatprep.subr.mxu0 0.0
      %3278 = vmatpush1.msra.mxu0 %v581
      %3279 = vmatprep.subr.mxu0 0.0
      %3280 = vmatpush1.msra.mxu0 %v582
      %3281 = vmatprep.subr.mxu0 0.0
      %3282 = vmatpush1.msra.mxu0 %v583
      %3283 = vmatprep.subr.mxu0 0.0
      %3284 = vmatpush1.msra.mxu0 %v584
      %3285 = vmatprep.subr.mxu0 0.0
      %3286 = vmatpush1.msra.mxu0 %v585
      %3287 = vmatprep.subr.mxu0 0.0
      %3288 = vmatpush1.msra.mxu0 %v586
      %3289 = vmatprep.subr.mxu0 0.0
      %3290 = vmatpush1.msra.mxu0 %v587
      %3291 = vmatprep.subr.mxu0 0.0
      %3292 = vmatpush1.msra.mxu0 %v588
      %3293 = vmatprep.subr.mxu0 0.0
      %3294 = vmatpush1.msra.mxu0 %v589
      %3295 = vmatprep.subr.mxu0 0.0
      %3296 = vmatpush1.msra.mxu0 %v590
      %3297 = vmatprep.subr.mxu0 0.0
      %3298 = vmatpush1.msra.mxu0 %v591
      %3299 = vmatprep.subr.mxu0 0.0
      %3300 = vmatpush1.msra.mxu0 %v592
      %3301 = vmatprep.subr.mxu0 0.0
      %3302 = vmatpush1.msra.mxu0 %v593
      %3303 = vmatprep.subr.mxu0 0.0
      %3304 = vmatpush1.msra.mxu0 %v594
      %3305 = vmatprep.subr.mxu0 0.0
      %3306 = vmatpush1.msra.mxu0 0.0
      %3307 = vmatprep.subr.mxu0 0.0
      %3308 = vmatpush1.msra.mxu0 0.0
      %3309 = vmatprep.subr.mxu0 0.0
      %3310 = vmatpush1.msra.mxu0 0.0
      %3311 = vmatprep.subr.mxu0 0.0
      %3312 = vmatpush1.msra.mxu0 0.0
      %3313 = vmatprep.subr.mxu0 0.0
      %3314 = vmatpush1.msra.mxu0 0.0
      %3315 = vmatprep.subr.mxu0 0.0
      %3316 = vmatpush1.msra.mxu0 0.0
      %3317 = vmatprep.subr.mxu0 0.0
      %3318 = vmatpush1.msra.mxu0 0.0
      %3319 = vmatprep.subr.mxu0 0.0
      %3320 = vmatpush1.msra.mxu0 0.0
      %3321 = vmatprep.subr.mxu0 0.0
      %3322 = vmatpush1.msra.mxu0 0.0
      %3323 = vmatprep.subr.mxu0 0.0
      %3324 = vmatpush1.msra.mxu0 0.0
      %3325 = vmatprep.subr.mxu0 0.0
      %3326 = vmatpush1.msra.mxu0 0.0
      %3327 = vmatprep.subr.mxu0 0.0
      %3328 = vmatpush1.msra.mxu0 0.0
      %3329 = vmatprep.subr.mxu0 0.0
      %3330 = vmatpush1.msra.mxu0 0.0
      %3331 = vmatprep.subr.mxu0 0.0
      %3332 = vmatpush1.msra.mxu0 0.0
      %3333 = vmatprep.subr.mxu0 0.0
      %3334 = vmatpush1.msra.mxu0 0.0
      %3335 = vmatprep.subr.mxu0 0.0
      %3336 = vmatpush1.msra.mxu0 0.0
      %3337 = vmatprep.mubr.f32.mxu0 0.0
      %3338 = vmatmul.mubr.f32.gmra.mrb[0].mxu0 %v3271
      %v3339 = vpop.f32.mrb[0].mxu0
      %v3340 = vadd.f32 0.0, %v3339
      %v3341 = vpop.f32.mrb[0].mxu0
      %3342 = vmatprep.mubr.f32.mxu0 0.0
      %3343 = vmatmul.mubr.f32.gmra.mrb[0].mxu0 %v3272
      %v3344 = vpop.f32.mrb[0].mxu0
      %v3345 = vadd.f32 0.0, %v3344
      %v3346 = vpop.f32.mrb[0].mxu0
      %3347 = vdwg.mxu0
      %v3348 = vadd.f32 %v3142, %v3340
      %v3349 = vadd.f32 %v3143, %v3345
      %v3350 = vadd.f32 %v3348, %v2088
      %v3351 = vadd.f32 %v3349, %v2088
      %v3353 = vlaneseq
      %v3354 = vshrl.u32 %v3353, 7
      %v3355 = vsub.s32 0, %v3354
      %v3356 = vrot.slane %v600, %v3355
      %v3359 = vsel %vm774, %v3350, 0
      %v3362 = vsel %vm774, %v3351, 0
      %3364 = vmatprep.subr.mxu0 0.0
      %3365 = vmatpush1.msra.mxu0 %v596
      %3366 = vmatprep.subr.mxu0 0.0
      %3367 = vmatpush1.msra.mxu0 %v597
      %3368 = vmatprep.subr.mxu0 0.0
      %3369 = vmatpush1.msra.mxu0 %v598
      %3370 = vmatprep.subr.mxu0 0.0
      %3371 = vmatpush1.msra.mxu0 %v599
      %3372 = vmatprep.subr.mxu0 0.0
      %3373 = vmatpush1.msra.mxu0 0.0
      %3374 = vmatprep.subr.mxu0 0.0
      %3375 = vmatpush1.msra.mxu0 0.0
      %3376 = vmatprep.subr.mxu0 0.0
      %3377 = vmatpush1.msra.mxu0 0.0
      %3378 = vmatprep.subr.mxu0 0.0
      %3379 = vmatpush1.msra.mxu0 0.0
      %3380 = vmatprep.subr.mxu0 0.0
      %3381 = vmatpush1.msra.mxu0 0.0
      %3382 = vmatprep.subr.mxu0 0.0
      %3383 = vmatpush1.msra.mxu0 0.0
      %3384 = vmatprep.subr.mxu0 0.0
      %3385 = vmatpush1.msra.mxu0 0.0
      %3386 = vmatprep.subr.mxu0 0.0
      %3387 = vmatpush1.msra.mxu0 0.0
      %3388 = vmatprep.subr.mxu0 0.0
      %3389 = vmatpush1.msra.mxu0 0.0
      %3390 = vmatprep.subr.mxu0 0.0
      %3391 = vmatpush1.msra.mxu0 0.0
      %3392 = vmatprep.subr.mxu0 0.0
      %3393 = vmatpush1.msra.mxu0 0.0
      %3394 = vmatprep.subr.mxu0 0.0
      %3395 = vmatpush1.msra.mxu0 0.0
      %3396 = vmatprep.subr.mxu0 0.0
      %3397 = vmatpush1.msra.mxu0 0.0
      %3398 = vmatprep.subr.mxu0 0.0
      %3399 = vmatpush1.msra.mxu0 0.0
      %3400 = vmatprep.subr.mxu0 0.0
      %3401 = vmatpush1.msra.mxu0 0.0
      %3402 = vmatprep.subr.mxu0 0.0
      %3403 = vmatpush1.msra.mxu0 0.0
      %3404 = vmatprep.subr.mxu0 0.0
      %3405 = vmatpush1.msra.mxu0 0.0
      %3406 = vmatprep.subr.mxu0 0.0
      %3407 = vmatpush1.msra.mxu0 0.0
      %3408 = vmatprep.subr.mxu0 0.0
      %3409 = vmatpush1.msra.mxu0 0.0
      %3410 = vmatprep.subr.mxu0 0.0
      %3411 = vmatpush1.msra.mxu0 0.0
      %3412 = vmatprep.subr.mxu0 0.0
      %3413 = vmatpush1.msra.mxu0 0.0
      %3414 = vmatprep.subr.mxu0 0.0
      %3415 = vmatpush1.msra.mxu0 0.0
      %3416 = vmatprep.subr.mxu0 0.0
      %3417 = vmatpush1.msra.mxu0 0.0
      %3418 = vmatprep.subr.mxu0 0.0
      %3419 = vmatpush1.msra.mxu0 0.0
      %3420 = vmatprep.subr.mxu0 0.0
      %3421 = vmatpush1.msra.mxu0 0.0
      %3422 = vmatprep.subr.mxu0 0.0
      %3423 = vmatpush1.msra.mxu0 0.0
      %3424 = vmatprep.subr.mxu0 0.0
      %3425 = vmatpush1.msra.mxu0 0.0
      %3426 = vmatprep.subr.mxu0 0.0
      %3427 = vmatpush1.msra.mxu0 0.0
      %3428 = vmatprep.mubr.f32.mxu0 0.0
      %3429 = vmatmul.mubr.f32.gmra.mrb[0].mxu0 %v3359
      %v3430 = vpop.f32.mrb[0].mxu0
      %v3431 = vadd.f32 %v3356, %v3430
      %v3432 = vpop.f32.mrb[0].mxu0
      %3433 = vmatprep.mubr.f32.mxu0 0.0
      %3434 = vmatmul.mubr.f32.gmra.mrb[0].mxu0 %v3362
      %v3435 = vpop.f32.mrb[0].mxu0
      %v3436 = vadd.f32 %v3356, %v3435
      %v3437 = vpop.f32.mrb[0].mxu0
      %3438 = vdwg.mxu0
      %3439 = vst [vmem:[%s550] sm:$0xff] %v3431
      %3440 = vst [vmem:[%s550 + $0x8] sm:$0xff] %v3436
      %s3441 = smul.u32 2, %s28
      %p3442 = scmp.lt.s32.totalorder %s3441, 3
      %s3443 = scalar_select %p3442, %s3441, 3
      %s3444 = smul.addr %s3443, 8
      %s3445 = scalar_lea.vmem %s17, %s3444
      // Predicated region
      $region89: #{transformer_net.1} parent=87 // pred_check
        %p3446 = pneg %p408
      $region90: #{transformer_net.1} parent=87 // pred_check_branch
        %3448 = sbr.rel (%p3446) target = $region92
      $region91: #{transformer_net.1} parent=87 // pred_region
        %s3449 = smul.u32 2, %s28
      $region92: #{transformer_net.1} parent=87 // pred_fallthru
        _
    $region88: #{transformer_net.1} parent=5 // pred_fallthru
      _
    %p3450 = scmp.le.s32.totalorder 2, %s23
    // Predicated region
    $region93: #{transformer_net.1} parent=5 // pred_check
      %p3451 = pneg %p3450
    $region94: #{transformer_net.1} parent=5 // pred_check_branch
      %3453 = sbr.rel (%p3451) target = $region96
    $region95: #{transformer_net.1} parent=5 // pred_region
      %s3454 = ssub.s32 %s23, 2
      // Predicated region
      $region97: #{transformer_net.1} parent=95 // pred_check
        %p3455 = pneg %p414
      $region98: #{transformer_net.1} parent=95 // pred_check_branch
        %3457 = sbr.rel (%p3455) target = $region100
      $region99: #{transformer_net.1} parent=95 // pred_region
        %s3458 = smul.u32 2, %s29
        %p3459 = scmp.lt.s32.totalorder %s3458, 3
        %s3460 = scalar_select %p3459, %s3458, 3
        %s3461 = smul.addr %s3460, 8
        %s3462 = scalar_lea.vmem %s17, %s3461
      $region100: #{transformer_net.1} parent=95 // pred_fallthru
        _
    $region96: #{transformer_net.1} parent=5 // pred_fallthru
      _
  $region6: #{transformer_net.1} parent=0 // loop_footer
    %s27 = sadd.s32 1, %s23
  $region7: #{transformer_net.1} parent=0 // loop_footer_branch
    %22 = sbr.rel target = $region3
  $region8: #{transformer_net.1} parent=0 // loop_exit
    _

</llo_original>
